<compile_context>
chip_gen: v6e
topology: v6e:2x2x1
jax: 0.10.0
libtpu: 0.0.40
codegen_flags: <defaults>
</compile_context>

<pallas_src>
import math

import jax
import jax.numpy as jnp
from jax import lax
from jax.experimental import pallas as pl
from jax.experimental.pallas import tpu as pltpu

SCALE = math.sqrt(0.5)


# --------------------------------------------------------------------------
# In-kernel helper: channel-last Conv1d(H -> 2H, kernel K) + GLU for one layer
# --------------------------------------------------------------------------
def _conv_glu(x, w_ref, b_ref, layer, pad_left):
    """x: (T, H) f32 activations for one batch row.

    w_ref : (L, K, H, 2H) bf16 with w[l, k, i, o] = torch_conv_l.weight[o, i, k]
    b_ref : (L, 1, 2H) f32
    Tap k reads x[t + k - pad_left] (zero outside [0, T)).  The shift rides the
    XLU via pltpu.roll on the sublane axis + a boundary mask; each tap is one
    (T,H)x(H,2H) MXU matmul accumulated in f32.  GLU: value = cols [0,H),
    gate = cols [H,2H)  (matches F.glu(dim=1) channel ordering).
    """
    t = x.shape[0]
    ksize = w_ref.shape[1]
    hid = w_ref.shape[2]
    t_idx = lax.broadcasted_iota(jnp.int32, (t, 1), 0)
    acc = jnp.zeros((t, 2 * hid), jnp.float32) + b_ref[layer]
    for k in range(ksize):
        shift = k - pad_left                       # source offset: xs[t] = x[t+shift]
        if shift == 0:
            xs = x
        else:
            xs = pltpu.roll(x, (-shift) % t, 0)    # circular; wrapped rows masked
            valid = (t_idx >= -shift) & (t_idx < t - shift)
            xs = jnp.where(valid, xs, 0.0)
        acc = acc + jnp.dot(xs.astype(jnp.bfloat16), w_ref[layer, k],
                            preferred_element_type=jnp.float32)
    return acc[:, :hid] * jax.nn.sigmoid(acc[:, hid:])


# --------------------------------------------------------------------------
# The fused whole-model kernel (one grid step == one batch row)
# --------------------------------------------------------------------------
def _g2p_kernel(src_ids_ref, trg_ids_ref,
                enc_tok_ref, enc_pos_ref, enc_e2h_w, enc_e2h_b,
                enc_conv_w, enc_conv_b, enc_h2e_w, enc_h2e_b,
                dec_tok_ref, dec_pos_ref, dec_e2h_w, dec_e2h_b,
                dec_conv_w, dec_conv_b,
                attn_h2e_w, attn_h2e_b, attn_e2h_w, attn_e2h_b,
                dec_h2e_w, dec_h2e_b, fc_w, fc_b,
                out_ref, attn_ref):
    f32, bf16 = jnp.float32, jnp.bfloat16
    ts = src_ids_ref.shape[0]
    tt = trg_ids_ref.shape[0]
    v_in = enc_tok_ref.shape[0]
    v_out = dec_tok_ref.shape[0]
    n_enc, ksize = enc_conv_w.shape[0], enc_conv_w.shape[1]
    n_dec = dec_conv_w.shape[0]

    # ------------------------------ encoder ------------------------------
    # Token embedding as an exact one-hot matmul (in-kernel "gather").
    src_oh = (lax.broadcasted_iota(jnp.int32, (ts, v_in), 1)
              == src_ids_ref[...]).astype(f32)
    embed_src = jnp.dot(src_oh, enc_tok_ref[...],
                        preferred_element_type=f32) + enc_pos_ref[...]      # (Ts,E)
    x = jnp.dot(embed_src.astype(bf16), enc_e2h_w[...],
                preferred_element_type=f32) + enc_e2h_b[...]                # (Ts,H)
    pad_enc = (ksize - 1) // 2                     # "same" padding (odd kernel)
    for l in range(n_enc):
        glu = _conv_glu(x, enc_conv_w, enc_conv_b, l, pad_enc)
        x = (glu + x) * SCALE
    enc_conved = jnp.dot(x.astype(bf16), enc_h2e_w[...],
                         preferred_element_type=f32) + enc_h2e_b[...]       # (Ts,E)
    enc_combined = (enc_conved + embed_src) * SCALE
    enc_conved_b = enc_conved.astype(bf16)         # hoisted attention operands
    enc_combined_b = enc_combined.astype(bf16)

    # ------------------------------ decoder ------------------------------
    trg_oh = (lax.broadcasted_iota(jnp.int32, (tt, v_out), 1)
              == trg_ids_ref[...]).astype(f32)
    embed_trg = jnp.dot(trg_oh, dec_tok_ref[...],
                        preferred_element_type=f32) + dec_pos_ref[...]      # (Tt,E)
    y = jnp.dot(embed_trg.astype(bf16), dec_e2h_w[...],
                preferred_element_type=f32) + dec_e2h_b[...]                # (Tt,H)
    w_ah2e, b_ah2e = attn_h2e_w[...], attn_h2e_b[...]
    w_ae2h, b_ae2h = attn_e2h_w[...], attn_e2h_b[...]
    attn = None
    for l in range(n_dec):
        conved = _conv_glu(y, dec_conv_w, dec_conv_b, l, ksize - 1)  # causal conv
        conved_emb = jnp.dot(conved.astype(bf16), w_ah2e,
                             preferred_element_type=f32) + b_ah2e           # (Tt,E)
        combined = (conved_emb + embed_trg) * SCALE
        # energy = combined @ enc_conved^T : contract E of both (no transpose op)
        energy = lax.dot_general(combined.astype(bf16), enc_conved_b,
                                 (((1,), (1,)), ((), ())),
                                 preferred_element_type=f32)                # (Tt,Ts)
        m = jnp.max(energy, axis=-1, keepdims=True)
        p = jnp.exp(energy - m)
        attn = p / jnp.sum(p, axis=-1, keepdims=True)      # exact softmax rows
        attended = jnp.dot(attn.astype(bf16), enc_combined_b,
                           preferred_element_type=f32)                      # (Tt,E)
        attended_h = jnp.dot(attended.astype(bf16), w_ae2h,
                             preferred_element_type=f32) + b_ae2h           # (Tt,H)
        conved = (conved + attended_h) * SCALE
        y = (conved + y) * SCALE
    dec_emb = jnp.dot(y.astype(bf16), dec_h2e_w[...],
                      preferred_element_type=f32) + dec_h2e_b[...]          # (Tt,E)
    out_ref[...] = jnp.dot(dec_emb.astype(bf16), fc_w[...],
                           preferred_element_type=f32) + fc_b[...]          # (Tt,V)
    attn_ref[...] = attn                           # last decoder layer only


# --------------------------------------------------------------------------
# Wrapper: one pallas_call for the whole forward pass
# --------------------------------------------------------------------------
def g2pcnn_forward(params, src, trg):
    enc, dec = params["enc"], params["dec"]
    b, ts = src.shape
    tt = trg.shape[1]
    v_in, e = enc["tok_emb"].shape
    v_out = dec["tok_emb"].shape[0]
    h = enc["e2h"]["w"].shape[1]
    l_enc, k = enc["conv_w"].shape[:2]
    l_dec = dec["conv_w"].shape[0]

    # ids shaped (B, T, 1) so the per-batch block is (T, 1) with T on sublanes.
    src_ids = src.astype(jnp.int32).reshape(b, ts, 1)
    trg_ids = trg.astype(jnp.int32).reshape(b, tt, 1)

    def pinned(shape):  # full-array block, VMEM-resident across the batch grid
        zeros = (0,) * len(shape)
        return pl.BlockSpec(shape, lambda i: zeros)

    in_specs = [
        pl.BlockSpec((None, ts, 1), lambda i: (i, 0, 0)),     # src ids (per batch)
        pl.BlockSpec((None, tt, 1), lambda i: (i, 0, 0)),     # trg ids (per batch)
        pinned((v_in, e)),                                    # enc token table
        pl.BlockSpec((ts, e), lambda i: (0, 0)),              # enc pos rows [0,Ts)
        pinned((e, h)), pinned((1, h)),                       # enc emb2hid
        pinned((l_enc, k, h, 2 * h)), pinned((l_enc, 1, 2 * h)),  # enc convs
        pinned((h, e)), pinned((1, e)),                       # enc hid2emb
        pinned((v_out, e)),                                   # dec token table
        pl.BlockSpec((tt, e), lambda i: (0, 0)),              # dec pos rows [0,Tt)
        pinned((e, h)), pinned((1, h)),                       # dec emb2hid
        pinned((l_dec, k, h, 2 * h)), pinned((l_dec, 1, 2 * h)),  # dec convs
        pinned((h, e)), pinned((1, e)),                       # attn_hid2emb
        pinned((e, h)), pinned((1, h)),                       # attn_emb2hid
        pinned((h, e)), pinned((1, e)),                       # dec hid2emb
        pinned((e, v_out)), pinned((1, v_out)),               # fc
    ]
    out_specs = (
        pl.BlockSpec((None, tt, v_out), lambda i: (i, 0, 0)),
        pl.BlockSpec((None, tt, ts), lambda i: (i, 0, 0)),
    )
    out_shape = (
        jax.ShapeDtypeStruct((b, tt, v_out), jnp.float32),
        jax.ShapeDtypeStruct((b, tt, ts), jnp.float32),
    )
    return pl.pallas_call(
        _g2p_kernel,
        out_shape=out_shape,
        grid=(b,),
        in_specs=in_specs,
        out_specs=out_specs,
        compiler_params=pltpu.CompilerParams(
            dimension_semantics=("parallel",)),   # 2-way split for v7x dual TCs
    )(src_ids, trg_ids,
      enc["tok_emb"], enc["pos_emb"], enc["e2h"]["w"], enc["e2h"]["b"],
      enc["conv_w"], enc["conv_b"], enc["h2e"]["w"], enc["h2e"]["b"],
      dec["tok_emb"], dec["pos_emb"], dec["e2h"]["w"], dec["e2h"]["b"],
      dec["conv_w"], dec["conv_b"],
      dec["attn_h2e"]["w"], dec["attn_h2e"]["b"],
      dec["attn_e2h"]["w"], dec["attn_e2h"]["b"],
      dec["h2e"]["w"], dec["h2e"]["b"], dec["fc"]["w"], dec["fc"]["b"])


# ----------------------------- parameter init ------------------------------
def _lin(key, din, dout):
    kw, kb = jax.random.split(key)
    w = (0.1 * jax.random.normal(kw, (din, dout), jnp.float32)).astype(jnp.bfloat16)
    b = 0.1 * jax.random.normal(kb, (1, dout), jnp.float32)
    return {"w": w, "b": b}


def _convs(key, n_layers, hid, ksize):
    # Layout: w[l, k, i, o] = torch Conv1d_l.weight[o, i, k];
    # out-channels [0,H) are the GLU value half, [H,2H) the gate half.
    kw, kb = jax.random.split(key)
    w = 0.1 * jax.random.normal(kw, (n_layers, ksize, hid, 2 * hid), jnp.float32)
    b = 0.1 * jax.random.normal(kb, (n_layers, 1, 2 * hid), jnp.float32)
    return w.astype(jnp.bfloat16), b


def init_params(key, v_in, v_out, emb, hid, n_enc, n_dec, ksize, max_len=100):
    k = jax.random.split(key, 13)
    enc_conv_w, enc_conv_b = _convs(k[4], n_enc, hid, ksize)
    dec_conv_w, dec_conv_b = _convs(k[11], n_dec, hid, ksize)
    return {
        "enc": {
            "tok_emb": 0.1 * jax.random.normal(k[0], (v_in, emb), jnp.float32),
            "pos_emb": 0.1 * jax.random.normal(k[1], (max_len, emb), jnp.float32),
            "e2h": _lin(k[2], emb, hid),
            "h2e": _lin(k[3], hid, emb),
            "conv_w": enc_conv_w,
            "conv_b": enc_conv_b,
        },
        "dec": {
            "tok_emb": 0.1 * jax.random.normal(k[5], (v_out, emb), jnp.float32),
            "pos_emb": 0.1 * jax.random.normal(k[6], (max_len, emb), jnp.float32),
            "e2h": _lin(k[7], emb, hid),
            "h2e": _lin(k[8], hid, emb),
            "attn_h2e": _lin(k[9], hid, emb),
            "attn_e2h": _lin(k[10], emb, hid),
            "fc": _lin(k[12], emb, v_out),
            "conv_w": dec_conv_w,
            "conv_b": dec_conv_b,
        },
    }


# ---------------------------------- main -----------------------------------
if __name__ == "__main__":
    V_IN, V_OUT = 40, 40
    EMB, HID = 32, 32
    N_ENC, N_DEC = 2, 2
    KSIZE = 3
    B, SRC_LEN, TRG_LEN = 2, 16, 8

    key = jax.random.PRNGKey(0)
    kp, ks, kt = jax.random.split(key, 3)
    params = init_params(kp, V_IN, V_OUT, EMB, HID, N_ENC, N_DEC, KSIZE)

    src = jax.random.randint(ks, (B, SRC_LEN), 0, V_IN, dtype=jnp.int32)
    trg = jax.random.randint(kt, (B, TRG_LEN), 0, V_OUT, dtype=jnp.int32)

    fwd = jax.jit(g2pcnn_forward)
    output, attn = fwd(params, src, trg)
    jax.block_until_ready((output, attn))

    assert output.shape == (B, TRG_LEN, V_OUT)
    assert attn.shape == (B, TRG_LEN, SRC_LEN)
    assert bool(jnp.all(jnp.isfinite(output)))
    assert bool(jnp.all(jnp.isfinite(attn)))
    # exact-divide softmax: rows sum to 1 within f32 rounding
    assert bool(jnp.allclose(jnp.sum(attn, axis=-1), 1.0, atol=1e-3))

    print("KERNEL_OK")
</pallas_src>

<mosaic_0001>
module attributes {stable_mosaic.version = 11 : i64} {
  func.func @_g2p_kernel(%arg0: i32, %arg1: memref<1x16x1xi32, #tpu.memory_space<vmem>>, %arg2: memref<1x8x1xi32, #tpu.memory_space<vmem>>, %arg3: memref<40x32xf32, #tpu.memory_space<vmem>>, %arg4: memref<16x32xf32, #tpu.memory_space<vmem>>, %arg5: memref<32x32xbf16, #tpu.memory_space<vmem>>, %arg6: memref<1x32xf32, #tpu.memory_space<vmem>>, %arg7: memref<2x3x32x64xbf16, #tpu.memory_space<vmem>>, %arg8: memref<2x1x64xf32, #tpu.memory_space<vmem>>, %arg9: memref<32x32xbf16, #tpu.memory_space<vmem>>, %arg10: memref<1x32xf32, #tpu.memory_space<vmem>>, %arg11: memref<40x32xf32, #tpu.memory_space<vmem>>, %arg12: memref<8x32xf32, #tpu.memory_space<vmem>>, %arg13: memref<32x32xbf16, #tpu.memory_space<vmem>>, %arg14: memref<1x32xf32, #tpu.memory_space<vmem>>, %arg15: memref<2x3x32x64xbf16, #tpu.memory_space<vmem>>, %arg16: memref<2x1x64xf32, #tpu.memory_space<vmem>>, %arg17: memref<32x32xbf16, #tpu.memory_space<vmem>>, %arg18: memref<1x32xf32, #tpu.memory_space<vmem>>, %arg19: memref<32x32xbf16, #tpu.memory_space<vmem>>, %arg20: memref<1x32xf32, #tpu.memory_space<vmem>>, %arg21: memref<32x32xbf16, #tpu.memory_space<vmem>>, %arg22: memref<1x32xf32, #tpu.memory_space<vmem>>, %arg23: memref<32x40xbf16, #tpu.memory_space<vmem>>, %arg24: memref<1x40xf32, #tpu.memory_space<vmem>>, %arg25: memref<1x8x40xf32, #tpu.memory_space<vmem>>, %arg26: memref<1x8x16xf32, #tpu.memory_space<vmem>>) attributes {dimension_semantics = [#tpu.dimension_semantics<parallel>], iteration_bounds = array<i64: 2>, scalar_prefetch = 0 : i64, scratch_operands = 0 : i64, tpu.core_type = #tpu.core_type<tc>, window_params = [{transform_indices = @transform_0, window_bounds = array<i64: 1, 16, 1>}, {transform_indices = @transform_1, window_bounds = array<i64: 1, 8, 1>}, {pipeline_mode = #tpu.pipeline_mode<synchronous>, transform_indices = @transform_2, window_bounds = array<i64: 40, 32>}, {transform_indices = @transform_3, window_bounds = array<i64: 16, 32>}, {pipeline_mode = #tpu.pipeline_mode<synchronous>, transform_indices = @transform_4, window_bounds = array<i64: 32, 32>}, {pipeline_mode = #tpu.pipeline_mode<synchronous>, transform_indices = @transform_5, window_bounds = array<i64: 1, 32>}, {pipeline_mode = #tpu.pipeline_mode<synchronous>, transform_indices = @transform_6, window_bounds = array<i64: 2, 3, 32, 64>}, {pipeline_mode = #tpu.pipeline_mode<synchronous>, transform_indices = @transform_7, window_bounds = array<i64: 2, 1, 64>}, {pipeline_mode = #tpu.pipeline_mode<synchronous>, transform_indices = @transform_8, window_bounds = array<i64: 32, 32>}, {pipeline_mode = #tpu.pipeline_mode<synchronous>, transform_indices = @transform_9, window_bounds = array<i64: 1, 32>}, {pipeline_mode = #tpu.pipeline_mode<synchronous>, transform_indices = @transform_10, window_bounds = array<i64: 40, 32>}, {transform_indices = @transform_11, window_bounds = array<i64: 8, 32>}, {pipeline_mode = #tpu.pipeline_mode<synchronous>, transform_indices = @transform_12, window_bounds = array<i64: 32, 32>}, {pipeline_mode = #tpu.pipeline_mode<synchronous>, transform_indices = @transform_13, window_bounds = array<i64: 1, 32>}, {pipeline_mode = #tpu.pipeline_mode<synchronous>, transform_indices = @transform_14, window_bounds = array<i64: 2, 3, 32, 64>}, {pipeline_mode = #tpu.pipeline_mode<synchronous>, transform_indices = @transform_15, window_bounds = array<i64: 2, 1, 64>}, {pipeline_mode = #tpu.pipeline_mode<synchronous>, transform_indices = @transform_16, window_bounds = array<i64: 32, 32>}, {pipeline_mode = #tpu.pipeline_mode<synchronous>, transform_indices = @transform_17, window_bounds = array<i64: 1, 32>}, {pipeline_mode = #tpu.pipeline_mode<synchronous>, transform_indices = @transform_18, window_bounds = array<i64: 32, 32>}, {pipeline_mode = #tpu.pipeline_mode<synchronous>, transform_indices = @transform_19, window_bounds = array<i64: 1, 32>}, {pipeline_mode = #tpu.pipeline_mode<synchronous>, transform_indices = @transform_20, window_bounds = array<i64: 32, 32>}, {pipeline_mode = #tpu.pipeline_mode<synchronous>, transform_indices = @transform_21, window_bounds = array<i64: 1, 32>}, {pipeline_mode = #tpu.pipeline_mode<synchronous>, transform_indices = @transform_22, window_bounds = array<i64: 32, 40>}, {pipeline_mode = #tpu.pipeline_mode<synchronous>, transform_indices = @transform_23, window_bounds = array<i64: 1, 40>}, {transform_indices = @transform_24, window_bounds = array<i64: 1, 8, 40>}, {transform_indices = @transform_25, window_bounds = array<i64: 1, 8, 16>}]} {
    %0 = tpu.iota {dimensions = array<i32: 1>} : vector<16x40xi32>
    %c0 = arith.constant 0 : index
    %c0_0 = arith.constant 0 : index
    %c0_1 = arith.constant 0 : index
    %1 = vector.load %arg1[%c0, %c0_0, %c0_1] : memref<1x16x1xi32, #tpu.memory_space<vmem>>, vector<1x16x1xi32>
    %2 = vector.shape_cast %1 : vector<1x16x1xi32> to vector<16x1xi32>
    %3 = vector.broadcast %2 : vector<16x1xi32> to vector<16x40xi32>
    %4 = arith.cmpi eq, %0, %3 : vector<16x40xi32>
    %5 = arith.extui %4 : vector<16x40xi1> to vector<16x40xi32>
    %6 = arith.sitofp %5 : vector<16x40xi32> to vector<16x40xf32>
    %c0_2 = arith.constant 0 : index
    %c0_3 = arith.constant 0 : index
    %7 = vector.load %arg3[%c0_2, %c0_3] : memref<40x32xf32, #tpu.memory_space<vmem>>, vector<40x32xf32>
    %cst = arith.constant dense<0.000000e+00> : vector<16x32xf32>
    %8 = tpu.matmul %6, %7, %cst {dimension_numbers = #tpu.dot_dimension_numbers<[1], [0], [0], [1], [0, 0, 1, 1], [], []>} : vector<16x40xf32>, vector<40x32xf32>, vector<16x32xf32> -> vector<16x32xf32>
    %c0_4 = arith.constant 0 : index
    %c0_5 = arith.constant 0 : index
    %9 = vector.load %arg4[%c0_4, %c0_5] : memref<16x32xf32, #tpu.memory_space<vmem>>, vector<16x32xf32>
    %10 = arith.addf %8, %9 : vector<16x32xf32>
    %11 = arith.truncf %10 : vector<16x32xf32> to vector<16x32xbf16>
    %c0_6 = arith.constant 0 : index
    %c0_7 = arith.constant 0 : index
    %12 = vector.load %arg5[%c0_6, %c0_7] : memref<32x32xbf16, #tpu.memory_space<vmem>>, vector<32x32xbf16>
    %cst_8 = arith.constant dense<0.000000e+00> : vector<16x32xf32>
    %13 = tpu.matmul %11, %12, %cst_8 {dimension_numbers = #tpu.dot_dimension_numbers<[1], [0], [0], [1], [0, 0, 1, 1], [], []>} : vector<16x32xbf16>, vector<32x32xbf16>, vector<16x32xf32> -> vector<16x32xf32>
    %c0_9 = arith.constant 0 : index
    %c0_10 = arith.constant 0 : index
    %14 = vector.load %arg6[%c0_9, %c0_10] : memref<1x32xf32, #tpu.memory_space<vmem>>, vector<1x32xf32>
    %15 = vector.broadcast %14 : vector<1x32xf32> to vector<16x32xf32>
    %16 = arith.addf %13, %15 : vector<16x32xf32>
    %17 = tpu.iota {dimensions = array<i32: 0>} : vector<16x1xi32>
    %cst_11 = arith.constant 0.000000e+00 : f32
    %18 = vector.broadcast %cst_11 : f32 to vector<16x64xf32>
    %c0_12 = arith.constant 0 : index
    %c0_13 = arith.constant 0 : index
    %c0_14 = arith.constant 0 : index
    %19 = vector.load %arg8[%c0_12, %c0_13, %c0_14] : memref<2x1x64xf32, #tpu.memory_space<vmem>>, vector<1x1x64xf32>
    %20 = vector.shape_cast %19 : vector<1x1x64xf32> to vector<1x64xf32>
    %21 = vector.broadcast %20 : vector<1x64xf32> to vector<16x64xf32>
    %22 = arith.addf %18, %21 : vector<16x64xf32>
    %c1_i32 = arith.constant 1 : i32
    %23 = tpu.dynamic_rotate %16 by %c1_i32 dim 0 : vector<16x32xf32>, i32 -> vector<16x32xf32>
    %c1_i32_15 = arith.constant 1 : i32
    %24 = vector.broadcast %c1_i32_15 : i32 to vector<16x1xi32>
    %25 = arith.cmpi sge, %17, %24 : vector<16x1xi32>
    %c17_i32 = arith.constant 17 : i32
    %26 = vector.broadcast %c17_i32 : i32 to vector<16x1xi32>
    %27 = arith.cmpi slt, %17, %26 : vector<16x1xi32>
    %28 = arith.andi %25, %27 : vector<16x1xi1>
    %cst_16 = arith.constant 0.000000e+00 : f32
    %29 = vector.shape_cast %28 : vector<16x1xi1> to vector<16x1xi1>
    %30 = vector.broadcast %29 : vector<16x1xi1> to vector<16x32xi1>
    %31 = vector.broadcast %cst_16 : f32 to vector<16x32xf32>
    %32 = arith.select %30, %23, %31 : vector<16x32xi1>, vector<16x32xf32>
    %33 = arith.truncf %32 : vector<16x32xf32> to vector<16x32xbf16>
    %c0_17 = arith.constant 0 : index
    %c0_18 = arith.constant 0 : index
    %c0_19 = arith.constant 0 : index
    %c0_20 = arith.constant 0 : index
    %34 = vector.load %arg7[%c0_17, %c0_18, %c0_19, %c0_20] : memref<2x3x32x64xbf16, #tpu.memory_space<vmem>>, vector<1x1x32x64xbf16>
    %35 = vector.shape_cast %34 : vector<1x1x32x64xbf16> to vector<32x64xbf16>
    %cst_21 = arith.constant dense<0.000000e+00> : vector<16x64xf32>
    %36 = tpu.matmul %33, %35, %cst_21 {dimension_numbers = #tpu.dot_dimension_numbers<[1], [0], [0], [1], [0, 0, 1, 1], [], []>} : vector<16x32xbf16>, vector<32x64xbf16>, vector<16x64xf32> -> vector<16x64xf32>
    %37 = arith.addf %22, %36 : vector<16x64xf32>
    %38 = arith.truncf %16 : vector<16x32xf32> to vector<16x32xbf16>
    %c0_22 = arith.constant 0 : index
    %c1 = arith.constant 1 : index
    %c0_23 = arith.constant 0 : index
    %c0_24 = arith.constant 0 : index
    %39 = vector.load %arg7[%c0_22, %c1, %c0_23, %c0_24] : memref<2x3x32x64xbf16, #tpu.memory_space<vmem>>, vector<1x1x32x64xbf16>
    %40 = vector.shape_cast %39 : vector<1x1x32x64xbf16> to vector<32x64xbf16>
    %cst_25 = arith.constant dense<0.000000e+00> : vector<16x64xf32>
    %41 = tpu.matmul %38, %40, %cst_25 {dimension_numbers = #tpu.dot_dimension_numbers<[1], [0], [0], [1], [0, 0, 1, 1], [], []>} : vector<16x32xbf16>, vector<32x64xbf16>, vector<16x64xf32> -> vector<16x64xf32>
    %42 = arith.addf %37, %41 : vector<16x64xf32>
    %c15_i32 = arith.constant 15 : i32
    %43 = tpu.dynamic_rotate %16 by %c15_i32 dim 0 : vector<16x32xf32>, i32 -> vector<16x32xf32>
    %c-1_i32 = arith.constant -1 : i32
    %44 = vector.broadcast %c-1_i32 : i32 to vector<16x1xi32>
    %45 = arith.cmpi sge, %17, %44 : vector<16x1xi32>
    %c15_i32_26 = arith.constant 15 : i32
    %46 = vector.broadcast %c15_i32_26 : i32 to vector<16x1xi32>
    %47 = arith.cmpi slt, %17, %46 : vector<16x1xi32>
    %48 = arith.andi %45, %47 : vector<16x1xi1>
    %cst_27 = arith.constant 0.000000e+00 : f32
    %49 = vector.shape_cast %48 : vector<16x1xi1> to vector<16x1xi1>
    %50 = vector.broadcast %49 : vector<16x1xi1> to vector<16x32xi1>
    %51 = vector.broadcast %cst_27 : f32 to vector<16x32xf32>
    %52 = arith.select %50, %43, %51 : vector<16x32xi1>, vector<16x32xf32>
    %53 = arith.truncf %52 : vector<16x32xf32> to vector<16x32xbf16>
    %c0_28 = arith.constant 0 : index
    %c2 = arith.constant 2 : index
    %c0_29 = arith.constant 0 : index
    %c0_30 = arith.constant 0 : index
    %54 = vector.load %arg7[%c0_28, %c2, %c0_29, %c0_30] : memref<2x3x32x64xbf16, #tpu.memory_space<vmem>>, vector<1x1x32x64xbf16>
    %55 = vector.shape_cast %54 : vector<1x1x32x64xbf16> to vector<32x64xbf16>
    %cst_31 = arith.constant dense<0.000000e+00> : vector<16x64xf32>
    %56 = tpu.matmul %53, %55, %cst_31 {dimension_numbers = #tpu.dot_dimension_numbers<[1], [0], [0], [1], [0, 0, 1, 1], [], []>} : vector<16x32xbf16>, vector<32x64xbf16>, vector<16x64xf32> -> vector<16x64xf32>
    %57 = arith.addf %42, %56 : vector<16x64xf32>
    %58 = vector.extract_strided_slice %57 {offsets = [0, 0], sizes = [16, 32], strides = [1, 1]} : vector<16x64xf32> to vector<16x32xf32>
    %59 = vector.extract_strided_slice %57 {offsets = [0, 32], sizes = [16, 32], strides = [1, 1]} : vector<16x64xf32> to vector<16x32xf32>
    %60 = arith.negf %59 : vector<16x32xf32>
    %61 = math.exp %60 : vector<16x32xf32>
    %cst_32 = arith.constant 1.000000e+00 : f32
    %62 = vector.broadcast %cst_32 : f32 to vector<16x32xf32>
    %63 = arith.addf %62, %61 : vector<16x32xf32>
    %64 = arith.divf %62, %63 : vector<16x32xf32>
    %65 = arith.mulf %58, %64 : vector<16x32xf32>
    %66 = arith.addf %65, %16 : vector<16x32xf32>
    %cst_33 = arith.constant 0.707106769 : f32
    %67 = vector.broadcast %cst_33 : f32 to vector<16x32xf32>
    %68 = arith.mulf %66, %67 : vector<16x32xf32>
    %69 = tpu.iota {dimensions = array<i32: 0>} : vector<16x1xi32>
    %cst_34 = arith.constant 0.000000e+00 : f32
    %70 = vector.broadcast %cst_34 : f32 to vector<16x64xf32>
    %c1_35 = arith.constant 1 : index
    %c0_36 = arith.constant 0 : index
    %c0_37 = arith.constant 0 : index
    %71 = vector.load %arg8[%c1_35, %c0_36, %c0_37] : memref<2x1x64xf32, #tpu.memory_space<vmem>>, vector<1x1x64xf32>
    %72 = vector.shape_cast %71 : vector<1x1x64xf32> to vector<1x64xf32>
    %73 = vector.broadcast %72 : vector<1x64xf32> to vector<16x64xf32>
    %74 = arith.addf %70, %73 : vector<16x64xf32>
    %c1_i32_38 = arith.constant 1 : i32
    %75 = tpu.dynamic_rotate %68 by %c1_i32_38 dim 0 : vector<16x32xf32>, i32 -> vector<16x32xf32>
    %c1_i32_39 = arith.constant 1 : i32
    %76 = vector.broadcast %c1_i32_39 : i32 to vector<16x1xi32>
    %77 = arith.cmpi sge, %69, %76 : vector<16x1xi32>
    %c17_i32_40 = arith.constant 17 : i32
    %78 = vector.broadcast %c17_i32_40 : i32 to vector<16x1xi32>
    %79 = arith.cmpi slt, %69, %78 : vector<16x1xi32>
    %80 = arith.andi %77, %79 : vector<16x1xi1>
    %cst_41 = arith.constant 0.000000e+00 : f32
    %81 = vector.shape_cast %80 : vector<16x1xi1> to vector<16x1xi1>
    %82 = vector.broadcast %81 : vector<16x1xi1> to vector<16x32xi1>
    %83 = vector.broadcast %cst_41 : f32 to vector<16x32xf32>
    %84 = arith.select %82, %75, %83 : vector<16x32xi1>, vector<16x32xf32>
    %85 = arith.truncf %84 : vector<16x32xf32> to vector<16x32xbf16>
    %c1_42 = arith.constant 1 : index
    %c0_43 = arith.constant 0 : index
    %c0_44 = arith.constant 0 : index
    %c0_45 = arith.constant 0 : index
    %86 = vector.load %arg7[%c1_42, %c0_43, %c0_44, %c0_45] : memref<2x3x32x64xbf16, #tpu.memory_space<vmem>>, vector<1x1x32x64xbf16>
    %87 = vector.shape_cast %86 : vector<1x1x32x64xbf16> to vector<32x64xbf16>
    %cst_46 = arith.constant dense<0.000000e+00> : vector<16x64xf32>
    %88 = tpu.matmul %85, %87, %cst_46 {dimension_numbers = #tpu.dot_dimension_numbers<[1], [0], [0], [1], [0, 0, 1, 1], [], []>} : vector<16x32xbf16>, vector<32x64xbf16>, vector<16x64xf32> -> vector<16x64xf32>
    %89 = arith.addf %74, %88 : vector<16x64xf32>
    %90 = arith.truncf %68 : vector<16x32xf32> to vector<16x32xbf16>
    %c1_47 = arith.constant 1 : index
    %c1_48 = arith.constant 1 : index
    %c0_49 = arith.constant 0 : index
    %c0_50 = arith.constant 0 : index
    %91 = vector.load %arg7[%c1_47, %c1_48, %c0_49, %c0_50] : memref<2x3x32x64xbf16, #tpu.memory_space<vmem>>, vector<1x1x32x64xbf16>
    %92 = vector.shape_cast %91 : vector<1x1x32x64xbf16> to vector<32x64xbf16>
    %cst_51 = arith.constant dense<0.000000e+00> : vector<16x64xf32>
    %93 = tpu.matmul %90, %92, %cst_51 {dimension_numbers = #tpu.dot_dimension_numbers<[1], [0], [0], [1], [0, 0, 1, 1], [], []>} : vector<16x32xbf16>, vector<32x64xbf16>, vector<16x64xf32> -> vector<16x64xf32>
    %94 = arith.addf %89, %93 : vector<16x64xf32>
    %c15_i32_52 = arith.constant 15 : i32
    %95 = tpu.dynamic_rotate %68 by %c15_i32_52 dim 0 : vector<16x32xf32>, i32 -> vector<16x32xf32>
    %c-1_i32_53 = arith.constant -1 : i32
    %96 = vector.broadcast %c-1_i32_53 : i32 to vector<16x1xi32>
    %97 = arith.cmpi sge, %69, %96 : vector<16x1xi32>
    %c15_i32_54 = arith.constant 15 : i32
    %98 = vector.broadcast %c15_i32_54 : i32 to vector<16x1xi32>
    %99 = arith.cmpi slt, %69, %98 : vector<16x1xi32>
    %100 = arith.andi %97, %99 : vector<16x1xi1>
    %cst_55 = arith.constant 0.000000e+00 : f32
    %101 = vector.shape_cast %100 : vector<16x1xi1> to vector<16x1xi1>
    %102 = vector.broadcast %101 : vector<16x1xi1> to vector<16x32xi1>
    %103 = vector.broadcast %cst_55 : f32 to vector<16x32xf32>
    %104 = arith.select %102, %95, %103 : vector<16x32xi1>, vector<16x32xf32>
    %105 = arith.truncf %104 : vector<16x32xf32> to vector<16x32xbf16>
    %c1_56 = arith.constant 1 : index
    %c2_57 = arith.constant 2 : index
    %c0_58 = arith.constant 0 : index
    %c0_59 = arith.constant 0 : index
    %106 = vector.load %arg7[%c1_56, %c2_57, %c0_58, %c0_59] : memref<2x3x32x64xbf16, #tpu.memory_space<vmem>>, vector<1x1x32x64xbf16>
    %107 = vector.shape_cast %106 : vector<1x1x32x64xbf16> to vector<32x64xbf16>
    %cst_60 = arith.constant dense<0.000000e+00> : vector<16x64xf32>
    %108 = tpu.matmul %105, %107, %cst_60 {dimension_numbers = #tpu.dot_dimension_numbers<[1], [0], [0], [1], [0, 0, 1, 1], [], []>} : vector<16x32xbf16>, vector<32x64xbf16>, vector<16x64xf32> -> vector<16x64xf32>
    %109 = arith.addf %94, %108 : vector<16x64xf32>
    %110 = vector.extract_strided_slice %109 {offsets = [0, 0], sizes = [16, 32], strides = [1, 1]} : vector<16x64xf32> to vector<16x32xf32>
    %111 = vector.extract_strided_slice %109 {offsets = [0, 32], sizes = [16, 32], strides = [1, 1]} : vector<16x64xf32> to vector<16x32xf32>
    %112 = arith.negf %111 : vector<16x32xf32>
    %113 = math.exp %112 : vector<16x32xf32>
    %cst_61 = arith.constant 1.000000e+00 : f32
    %114 = vector.broadcast %cst_61 : f32 to vector<16x32xf32>
    %115 = arith.addf %114, %113 : vector<16x32xf32>
    %116 = arith.divf %114, %115 : vector<16x32xf32>
    %117 = arith.mulf %110, %116 : vector<16x32xf32>
    %118 = arith.addf %117, %68 : vector<16x32xf32>
    %cst_62 = arith.constant 0.707106769 : f32
    %119 = vector.broadcast %cst_62 : f32 to vector<16x32xf32>
    %120 = arith.mulf %118, %119 : vector<16x32xf32>
    %121 = arith.truncf %120 : vector<16x32xf32> to vector<16x32xbf16>
    %c0_63 = arith.constant 0 : index
    %c0_64 = arith.constant 0 : index
    %122 = vector.load %arg9[%c0_63, %c0_64] : memref<32x32xbf16, #tpu.memory_space<vmem>>, vector<32x32xbf16>
    %cst_65 = arith.constant dense<0.000000e+00> : vector<16x32xf32>
    %123 = tpu.matmul %121, %122, %cst_65 {dimension_numbers = #tpu.dot_dimension_numbers<[1], [0], [0], [1], [0, 0, 1, 1], [], []>} : vector<16x32xbf16>, vector<32x32xbf16>, vector<16x32xf32> -> vector<16x32xf32>
    %c0_66 = arith.constant 0 : index
    %c0_67 = arith.constant 0 : index
    %124 = vector.load %arg10[%c0_66, %c0_67] : memref<1x32xf32, #tpu.memory_space<vmem>>, vector<1x32xf32>
    %125 = vector.broadcast %124 : vector<1x32xf32> to vector<16x32xf32>
    %126 = arith.addf %123, %125 : vector<16x32xf32>
    %127 = arith.addf %126, %10 : vector<16x32xf32>
    %cst_68 = arith.constant 0.707106769 : f32
    %128 = vector.broadcast %cst_68 : f32 to vector<16x32xf32>
    %129 = arith.mulf %127, %128 : vector<16x32xf32>
    %130 = arith.truncf %126 : vector<16x32xf32> to vector<16x32xbf16>
    %131 = arith.truncf %129 : vector<16x32xf32> to vector<16x32xbf16>
    %132 = tpu.iota {dimensions = array<i32: 1>} : vector<8x40xi32>
    %c0_69 = arith.constant 0 : index
    %c0_70 = arith.constant 0 : index
    %c0_71 = arith.constant 0 : index
    %133 = vector.load %arg2[%c0_69, %c0_70, %c0_71] : memref<1x8x1xi32, #tpu.memory_space<vmem>>, vector<1x8x1xi32>
    %134 = vector.shape_cast %133 : vector<1x8x1xi32> to vector<8x1xi32>
    %135 = vector.broadcast %134 : vector<8x1xi32> to vector<8x40xi32>
    %136 = arith.cmpi eq, %132, %135 : vector<8x40xi32>
    %137 = arith.extui %136 : vector<8x40xi1> to vector<8x40xi32>
    %138 = arith.sitofp %137 : vector<8x40xi32> to vector<8x40xf32>
    %c0_72 = arith.constant 0 : index
    %c0_73 = arith.constant 0 : index
    %139 = vector.load %arg11[%c0_72, %c0_73] : memref<40x32xf32, #tpu.memory_space<vmem>>, vector<40x32xf32>
    %cst_74 = arith.constant dense<0.000000e+00> : vector<8x32xf32>
    %140 = tpu.matmul %138, %139, %cst_74 {dimension_numbers = #tpu.dot_dimension_numbers<[1], [0], [0], [1], [0, 0, 1, 1], [], []>} : vector<8x40xf32>, vector<40x32xf32>, vector<8x32xf32> -> vector<8x32xf32>
    %c0_75 = arith.constant 0 : index
    %c0_76 = arith.constant 0 : index
    %141 = vector.load %arg12[%c0_75, %c0_76] : memref<8x32xf32, #tpu.memory_space<vmem>>, vector<8x32xf32>
    %142 = arith.addf %140, %141 : vector<8x32xf32>
    %143 = arith.truncf %142 : vector<8x32xf32> to vector<8x32xbf16>
    %c0_77 = arith.constant 0 : index
    %c0_78 = arith.constant 0 : index
    %144 = vector.load %arg13[%c0_77, %c0_78] : memref<32x32xbf16, #tpu.memory_space<vmem>>, vector<32x32xbf16>
    %cst_79 = arith.constant dense<0.000000e+00> : vector<8x32xf32>
    %145 = tpu.matmul %143, %144, %cst_79 {dimension_numbers = #tpu.dot_dimension_numbers<[1], [0], [0], [1], [0, 0, 1, 1], [], []>} : vector<8x32xbf16>, vector<32x32xbf16>, vector<8x32xf32> -> vector<8x32xf32>
    %c0_80 = arith.constant 0 : index
    %c0_81 = arith.constant 0 : index
    %146 = vector.load %arg14[%c0_80, %c0_81] : memref<1x32xf32, #tpu.memory_space<vmem>>, vector<1x32xf32>
    %147 = vector.broadcast %146 : vector<1x32xf32> to vector<8x32xf32>
    %148 = arith.addf %145, %147 : vector<8x32xf32>
    %c0_82 = arith.constant 0 : index
    %c0_83 = arith.constant 0 : index
    %149 = vector.load %arg17[%c0_82, %c0_83] : memref<32x32xbf16, #tpu.memory_space<vmem>>, vector<32x32xbf16>
    %c0_84 = arith.constant 0 : index
    %c0_85 = arith.constant 0 : index
    %150 = vector.load %arg18[%c0_84, %c0_85] : memref<1x32xf32, #tpu.memory_space<vmem>>, vector<1x32xf32>
    %c0_86 = arith.constant 0 : index
    %c0_87 = arith.constant 0 : index
    %151 = vector.load %arg19[%c0_86, %c0_87] : memref<32x32xbf16, #tpu.memory_space<vmem>>, vector<32x32xbf16>
    %c0_88 = arith.constant 0 : index
    %c0_89 = arith.constant 0 : index
    %152 = vector.load %arg20[%c0_88, %c0_89] : memref<1x32xf32, #tpu.memory_space<vmem>>, vector<1x32xf32>
    %153 = tpu.iota {dimensions = array<i32: 0>} : vector<8x1xi32>
    %cst_90 = arith.constant 0.000000e+00 : f32
    %154 = vector.broadcast %cst_90 : f32 to vector<8x64xf32>
    %c0_91 = arith.constant 0 : index
    %c0_92 = arith.constant 0 : index
    %c0_93 = arith.constant 0 : index
    %155 = vector.load %arg16[%c0_91, %c0_92, %c0_93] : memref<2x1x64xf32, #tpu.memory_space<vmem>>, vector<1x1x64xf32>
    %156 = vector.shape_cast %155 : vector<1x1x64xf32> to vector<1x64xf32>
    %157 = vector.broadcast %156 : vector<1x64xf32> to vector<8x64xf32>
    %158 = arith.addf %154, %157 : vector<8x64xf32>
    %c2_i32 = arith.constant 2 : i32
    %159 = tpu.dynamic_rotate %148 by %c2_i32 dim 0 : vector<8x32xf32>, i32 -> vector<8x32xf32>
    %c2_i32_94 = arith.constant 2 : i32
    %160 = vector.broadcast %c2_i32_94 : i32 to vector<8x1xi32>
    %161 = arith.cmpi sge, %153, %160 : vector<8x1xi32>
    %c10_i32 = arith.constant 10 : i32
    %162 = vector.broadcast %c10_i32 : i32 to vector<8x1xi32>
    %163 = arith.cmpi slt, %153, %162 : vector<8x1xi32>
    %164 = arith.andi %161, %163 : vector<8x1xi1>
    %cst_95 = arith.constant 0.000000e+00 : f32
    %165 = vector.shape_cast %164 : vector<8x1xi1> to vector<8x1xi1>
    %166 = vector.broadcast %165 : vector<8x1xi1> to vector<8x32xi1>
    %167 = vector.broadcast %cst_95 : f32 to vector<8x32xf32>
    %168 = arith.select %166, %159, %167 : vector<8x32xi1>, vector<8x32xf32>
    %169 = arith.truncf %168 : vector<8x32xf32> to vector<8x32xbf16>
    %c0_96 = arith.constant 0 : index
    %c0_97 = arith.constant 0 : index
    %c0_98 = arith.constant 0 : index
    %c0_99 = arith.constant 0 : index
    %170 = vector.load %arg15[%c0_96, %c0_97, %c0_98, %c0_99] : memref<2x3x32x64xbf16, #tpu.memory_space<vmem>>, vector<1x1x32x64xbf16>
    %171 = vector.shape_cast %170 : vector<1x1x32x64xbf16> to vector<32x64xbf16>
    %cst_100 = arith.constant dense<0.000000e+00> : vector<8x64xf32>
    %172 = tpu.matmul %169, %171, %cst_100 {dimension_numbers = #tpu.dot_dimension_numbers<[1], [0], [0], [1], [0, 0, 1, 1], [], []>} : vector<8x32xbf16>, vector<32x64xbf16>, vector<8x64xf32> -> vector<8x64xf32>
    %173 = arith.addf %158, %172 : vector<8x64xf32>
    %c1_i32_101 = arith.constant 1 : i32
    %174 = tpu.dynamic_rotate %148 by %c1_i32_101 dim 0 : vector<8x32xf32>, i32 -> vector<8x32xf32>
    %c1_i32_102 = arith.constant 1 : i32
    %175 = vector.broadcast %c1_i32_102 : i32 to vector<8x1xi32>
    %176 = arith.cmpi sge, %153, %175 : vector<8x1xi32>
    %c9_i32 = arith.constant 9 : i32
    %177 = vector.broadcast %c9_i32 : i32 to vector<8x1xi32>
    %178 = arith.cmpi slt, %153, %177 : vector<8x1xi32>
    %179 = arith.andi %176, %178 : vector<8x1xi1>
    %cst_103 = arith.constant 0.000000e+00 : f32
    %180 = vector.shape_cast %179 : vector<8x1xi1> to vector<8x1xi1>
    %181 = vector.broadcast %180 : vector<8x1xi1> to vector<8x32xi1>
    %182 = vector.broadcast %cst_103 : f32 to vector<8x32xf32>
    %183 = arith.select %181, %174, %182 : vector<8x32xi1>, vector<8x32xf32>
    %184 = arith.truncf %183 : vector<8x32xf32> to vector<8x32xbf16>
    %c0_104 = arith.constant 0 : index
    %c1_105 = arith.constant 1 : index
    %c0_106 = arith.constant 0 : index
    %c0_107 = arith.constant 0 : index
    %185 = vector.load %arg15[%c0_104, %c1_105, %c0_106, %c0_107] : memref<2x3x32x64xbf16, #tpu.memory_space<vmem>>, vector<1x1x32x64xbf16>
    %186 = vector.shape_cast %185 : vector<1x1x32x64xbf16> to vector<32x64xbf16>
    %cst_108 = arith.constant dense<0.000000e+00> : vector<8x64xf32>
    %187 = tpu.matmul %184, %186, %cst_108 {dimension_numbers = #tpu.dot_dimension_numbers<[1], [0], [0], [1], [0, 0, 1, 1], [], []>} : vector<8x32xbf16>, vector<32x64xbf16>, vector<8x64xf32> -> vector<8x64xf32>
    %188 = arith.addf %173, %187 : vector<8x64xf32>
    %189 = arith.truncf %148 : vector<8x32xf32> to vector<8x32xbf16>
    %c0_109 = arith.constant 0 : index
    %c2_110 = arith.constant 2 : index
    %c0_111 = arith.constant 0 : index
    %c0_112 = arith.constant 0 : index
    %190 = vector.load %arg15[%c0_109, %c2_110, %c0_111, %c0_112] : memref<2x3x32x64xbf16, #tpu.memory_space<vmem>>, vector<1x1x32x64xbf16>
    %191 = vector.shape_cast %190 : vector<1x1x32x64xbf16> to vector<32x64xbf16>
    %cst_113 = arith.constant dense<0.000000e+00> : vector<8x64xf32>
    %192 = tpu.matmul %189, %191, %cst_113 {dimension_numbers = #tpu.dot_dimension_numbers<[1], [0], [0], [1], [0, 0, 1, 1], [], []>} : vector<8x32xbf16>, vector<32x64xbf16>, vector<8x64xf32> -> vector<8x64xf32>
    %193 = arith.addf %188, %192 : vector<8x64xf32>
    %194 = vector.extract_strided_slice %193 {offsets = [0, 0], sizes = [8, 32], strides = [1, 1]} : vector<8x64xf32> to vector<8x32xf32>
    %195 = vector.extract_strided_slice %193 {offsets = [0, 32], sizes = [8, 32], strides = [1, 1]} : vector<8x64xf32> to vector<8x32xf32>
    %196 = arith.negf %195 : vector<8x32xf32>
    %197 = math.exp %196 : vector<8x32xf32>
    %cst_114 = arith.constant 1.000000e+00 : f32
    %198 = vector.broadcast %cst_114 : f32 to vector<8x32xf32>
    %199 = arith.addf %198, %197 : vector<8x32xf32>
    %200 = arith.divf %198, %199 : vector<8x32xf32>
    %201 = arith.mulf %194, %200 : vector<8x32xf32>
    %202 = arith.truncf %201 : vector<8x32xf32> to vector<8x32xbf16>
    %cst_115 = arith.constant dense<0.000000e+00> : vector<8x32xf32>
    %203 = tpu.matmul %202, %149, %cst_115 {dimension_numbers = #tpu.dot_dimension_numbers<[1], [0], [0], [1], [0, 0, 1, 1], [], []>} : vector<8x32xbf16>, vector<32x32xbf16>, vector<8x32xf32> -> vector<8x32xf32>
    %204 = vector.broadcast %150 : vector<1x32xf32> to vector<8x32xf32>
    %205 = arith.addf %203, %204 : vector<8x32xf32>
    %206 = arith.addf %205, %142 : vector<8x32xf32>
    %cst_116 = arith.constant 0.707106769 : f32
    %207 = vector.broadcast %cst_116 : f32 to vector<8x32xf32>
    %208 = arith.mulf %206, %207 : vector<8x32xf32>
    %209 = arith.truncf %208 : vector<8x32xf32> to vector<8x32xbf16>
    %cst_117 = arith.constant dense<0.000000e+00> : vector<8x16xf32>
    %210 = tpu.matmul %209, %130, %cst_117 {dimension_numbers = #tpu.dot_dimension_numbers<[1], [1], [0], [0], [0, 0, 1, 0], [], []>} : vector<8x32xbf16>, vector<16x32xbf16>, vector<8x16xf32> -> vector<8x16xf32>
    %cst_118 = arith.constant dense<0xFF800000> : vector<8xf32>
    %211 = vector.multi_reduction <maximumf>, %210, %cst_118 [1] : vector<8x16xf32> to vector<8xf32>
    %212 = vector.shape_cast %211 : vector<8xf32> to vector<8x1xf32>
    %213 = vector.broadcast %212 : vector<8x1xf32> to vector<8x16xf32>
    %214 = arith.subf %210, %213 : vector<8x16xf32>
    %215 = math.exp %214 : vector<8x16xf32>
    %cst_119 = arith.constant dense<0.000000e+00> : vector<8xf32>
    %216 = vector.multi_reduction <add>, %215, %cst_119 [1] : vector<8x16xf32> to vector<8xf32>
    %217 = vector.shape_cast %216 : vector<8xf32> to vector<8x1xf32>
    %218 = vector.broadcast %217 : vector<8x1xf32> to vector<8x16xf32>
    %219 = arith.divf %215, %218 : vector<8x16xf32>
    %220 = arith.truncf %219 : vector<8x16xf32> to vector<8x16xbf16>
    %cst_120 = arith.constant dense<0.000000e+00> : vector<8x32xf32>
    %221 = tpu.matmul %220, %131, %cst_120 {dimension_numbers = #tpu.dot_dimension_numbers<[1], [0], [0], [1], [0, 0, 1, 1], [], []>} : vector<8x16xbf16>, vector<16x32xbf16>, vector<8x32xf32> -> vector<8x32xf32>
    %222 = arith.truncf %221 : vector<8x32xf32> to vector<8x32xbf16>
    %cst_121 = arith.constant dense<0.000000e+00> : vector<8x32xf32>
    %223 = tpu.matmul %222, %151, %cst_121 {dimension_numbers = #tpu.dot_dimension_numbers<[1], [0], [0], [1], [0, 0, 1, 1], [], []>} : vector<8x32xbf16>, vector<32x32xbf16>, vector<8x32xf32> -> vector<8x32xf32>
    %224 = vector.broadcast %152 : vector<1x32xf32> to vector<8x32xf32>
    %225 = arith.addf %223, %224 : vector<8x32xf32>
    %226 = arith.addf %201, %225 : vector<8x32xf32>
    %cst_122 = arith.constant 0.707106769 : f32
    %227 = vector.broadcast %cst_122 : f32 to vector<8x32xf32>
    %228 = arith.mulf %226, %227 : vector<8x32xf32>
    %229 = arith.addf %228, %148 : vector<8x32xf32>
    %cst_123 = arith.constant 0.707106769 : f32
    %230 = vector.broadcast %cst_123 : f32 to vector<8x32xf32>
    %231 = arith.mulf %229, %230 : vector<8x32xf32>
    %232 = tpu.iota {dimensions = array<i32: 0>} : vector<8x1xi32>
    %cst_124 = arith.constant 0.000000e+00 : f32
    %233 = vector.broadcast %cst_124 : f32 to vector<8x64xf32>
    %c1_125 = arith.constant 1 : index
    %c0_126 = arith.constant 0 : index
    %c0_127 = arith.constant 0 : index
    %234 = vector.load %arg16[%c1_125, %c0_126, %c0_127] : memref<2x1x64xf32, #tpu.memory_space<vmem>>, vector<1x1x64xf32>
    %235 = vector.shape_cast %234 : vector<1x1x64xf32> to vector<1x64xf32>
    %236 = vector.broadcast %235 : vector<1x64xf32> to vector<8x64xf32>
    %237 = arith.addf %233, %236 : vector<8x64xf32>
    %c2_i32_128 = arith.constant 2 : i32
    %238 = tpu.dynamic_rotate %231 by %c2_i32_128 dim 0 : vector<8x32xf32>, i32 -> vector<8x32xf32>
    %c2_i32_129 = arith.constant 2 : i32
    %239 = vector.broadcast %c2_i32_129 : i32 to vector<8x1xi32>
    %240 = arith.cmpi sge, %232, %239 : vector<8x1xi32>
    %c10_i32_130 = arith.constant 10 : i32
    %241 = vector.broadcast %c10_i32_130 : i32 to vector<8x1xi32>
    %242 = arith.cmpi slt, %232, %241 : vector<8x1xi32>
    %243 = arith.andi %240, %242 : vector<8x1xi1>
    %cst_131 = arith.constant 0.000000e+00 : f32
    %244 = vector.shape_cast %243 : vector<8x1xi1> to vector<8x1xi1>
    %245 = vector.broadcast %244 : vector<8x1xi1> to vector<8x32xi1>
    %246 = vector.broadcast %cst_131 : f32 to vector<8x32xf32>
    %247 = arith.select %245, %238, %246 : vector<8x32xi1>, vector<8x32xf32>
    %248 = arith.truncf %247 : vector<8x32xf32> to vector<8x32xbf16>
    %c1_132 = arith.constant 1 : index
    %c0_133 = arith.constant 0 : index
    %c0_134 = arith.constant 0 : index
    %c0_135 = arith.constant 0 : index
    %249 = vector.load %arg15[%c1_132, %c0_133, %c0_134, %c0_135] : memref<2x3x32x64xbf16, #tpu.memory_space<vmem>>, vector<1x1x32x64xbf16>
    %250 = vector.shape_cast %249 : vector<1x1x32x64xbf16> to vector<32x64xbf16>
    %cst_136 = arith.constant dense<0.000000e+00> : vector<8x64xf32>
    %251 = tpu.matmul %248, %250, %cst_136 {dimension_numbers = #tpu.dot_dimension_numbers<[1], [0], [0], [1], [0, 0, 1, 1], [], []>} : vector<8x32xbf16>, vector<32x64xbf16>, vector<8x64xf32> -> vector<8x64xf32>
    %252 = arith.addf %237, %251 : vector<8x64xf32>
    %c1_i32_137 = arith.constant 1 : i32
    %253 = tpu.dynamic_rotate %231 by %c1_i32_137 dim 0 : vector<8x32xf32>, i32 -> vector<8x32xf32>
    %c1_i32_138 = arith.constant 1 : i32
    %254 = vector.broadcast %c1_i32_138 : i32 to vector<8x1xi32>
    %255 = arith.cmpi sge, %232, %254 : vector<8x1xi32>
    %c9_i32_139 = arith.constant 9 : i32
    %256 = vector.broadcast %c9_i32_139 : i32 to vector<8x1xi32>
    %257 = arith.cmpi slt, %232, %256 : vector<8x1xi32>
    %258 = arith.andi %255, %257 : vector<8x1xi1>
    %cst_140 = arith.constant 0.000000e+00 : f32
    %259 = vector.shape_cast %258 : vector<8x1xi1> to vector<8x1xi1>
    %260 = vector.broadcast %259 : vector<8x1xi1> to vector<8x32xi1>
    %261 = vector.broadcast %cst_140 : f32 to vector<8x32xf32>
    %262 = arith.select %260, %253, %261 : vector<8x32xi1>, vector<8x32xf32>
    %263 = arith.truncf %262 : vector<8x32xf32> to vector<8x32xbf16>
    %c1_141 = arith.constant 1 : index
    %c1_142 = arith.constant 1 : index
    %c0_143 = arith.constant 0 : index
    %c0_144 = arith.constant 0 : index
    %264 = vector.load %arg15[%c1_141, %c1_142, %c0_143, %c0_144] : memref<2x3x32x64xbf16, #tpu.memory_space<vmem>>, vector<1x1x32x64xbf16>
    %265 = vector.shape_cast %264 : vector<1x1x32x64xbf16> to vector<32x64xbf16>
    %cst_145 = arith.constant dense<0.000000e+00> : vector<8x64xf32>
    %266 = tpu.matmul %263, %265, %cst_145 {dimension_numbers = #tpu.dot_dimension_numbers<[1], [0], [0], [1], [0, 0, 1, 1], [], []>} : vector<8x32xbf16>, vector<32x64xbf16>, vector<8x64xf32> -> vector<8x64xf32>
    %267 = arith.addf %252, %266 : vector<8x64xf32>
    %268 = arith.truncf %231 : vector<8x32xf32> to vector<8x32xbf16>
    %c1_146 = arith.constant 1 : index
    %c2_147 = arith.constant 2 : index
    %c0_148 = arith.constant 0 : index
    %c0_149 = arith.constant 0 : index
    %269 = vector.load %arg15[%c1_146, %c2_147, %c0_148, %c0_149] : memref<2x3x32x64xbf16, #tpu.memory_space<vmem>>, vector<1x1x32x64xbf16>
    %270 = vector.shape_cast %269 : vector<1x1x32x64xbf16> to vector<32x64xbf16>
    %cst_150 = arith.constant dense<0.000000e+00> : vector<8x64xf32>
    %271 = tpu.matmul %268, %270, %cst_150 {dimension_numbers = #tpu.dot_dimension_numbers<[1], [0], [0], [1], [0, 0, 1, 1], [], []>} : vector<8x32xbf16>, vector<32x64xbf16>, vector<8x64xf32> -> vector<8x64xf32>
    %272 = arith.addf %267, %271 : vector<8x64xf32>
    %273 = vector.extract_strided_slice %272 {offsets = [0, 0], sizes = [8, 32], strides = [1, 1]} : vector<8x64xf32> to vector<8x32xf32>
    %274 = vector.extract_strided_slice %272 {offsets = [0, 32], sizes = [8, 32], strides = [1, 1]} : vector<8x64xf32> to vector<8x32xf32>
    %275 = arith.negf %274 : vector<8x32xf32>
    %276 = math.exp %275 : vector<8x32xf32>
    %cst_151 = arith.constant 1.000000e+00 : f32
    %277 = vector.broadcast %cst_151 : f32 to vector<8x32xf32>
    %278 = arith.addf %277, %276 : vector<8x32xf32>
    %279 = arith.divf %277, %278 : vector<8x32xf32>
    %280 = arith.mulf %273, %279 : vector<8x32xf32>
    %281 = arith.truncf %280 : vector<8x32xf32> to vector<8x32xbf16>
    %cst_152 = arith.constant dense<0.000000e+00> : vector<8x32xf32>
    %282 = tpu.matmul %281, %149, %cst_152 {dimension_numbers = #tpu.dot_dimension_numbers<[1], [0], [0], [1], [0, 0, 1, 1], [], []>} : vector<8x32xbf16>, vector<32x32xbf16>, vector<8x32xf32> -> vector<8x32xf32>
    %283 = vector.broadcast %150 : vector<1x32xf32> to vector<8x32xf32>
    %284 = arith.addf %282, %283 : vector<8x32xf32>
    %285 = arith.addf %284, %142 : vector<8x32xf32>
    %cst_153 = arith.constant 0.707106769 : f32
    %286 = vector.broadcast %cst_153 : f32 to vector<8x32xf32>
    %287 = arith.mulf %285, %286 : vector<8x32xf32>
    %288 = arith.truncf %287 : vector<8x32xf32> to vector<8x32xbf16>
    %cst_154 = arith.constant dense<0.000000e+00> : vector<8x16xf32>
    %289 = tpu.matmul %288, %130, %cst_154 {dimension_numbers = #tpu.dot_dimension_numbers<[1], [1], [0], [0], [0, 0, 1, 0], [], []>} : vector<8x32xbf16>, vector<16x32xbf16>, vector<8x16xf32> -> vector<8x16xf32>
    %cst_155 = arith.constant dense<0xFF800000> : vector<8xf32>
    %290 = vector.multi_reduction <maximumf>, %289, %cst_155 [1] : vector<8x16xf32> to vector<8xf32>
    %291 = vector.shape_cast %290 : vector<8xf32> to vector<8x1xf32>
    %292 = vector.broadcast %291 : vector<8x1xf32> to vector<8x16xf32>
    %293 = arith.subf %289, %292 : vector<8x16xf32>
    %294 = math.exp %293 : vector<8x16xf32>
    %cst_156 = arith.constant dense<0.000000e+00> : vector<8xf32>
    %295 = vector.multi_reduction <add>, %294, %cst_156 [1] : vector<8x16xf32> to vector<8xf32>
    %296 = vector.shape_cast %295 : vector<8xf32> to vector<8x1xf32>
    %297 = vector.broadcast %296 : vector<8x1xf32> to vector<8x16xf32>
    %298 = arith.divf %294, %297 : vector<8x16xf32>
    %299 = arith.truncf %298 : vector<8x16xf32> to vector<8x16xbf16>
    %cst_157 = arith.constant dense<0.000000e+00> : vector<8x32xf32>
    %300 = tpu.matmul %299, %131, %cst_157 {dimension_numbers = #tpu.dot_dimension_numbers<[1], [0], [0], [1], [0, 0, 1, 1], [], []>} : vector<8x16xbf16>, vector<16x32xbf16>, vector<8x32xf32> -> vector<8x32xf32>
    %301 = arith.truncf %300 : vector<8x32xf32> to vector<8x32xbf16>
    %cst_158 = arith.constant dense<0.000000e+00> : vector<8x32xf32>
    %302 = tpu.matmul %301, %151, %cst_158 {dimension_numbers = #tpu.dot_dimension_numbers<[1], [0], [0], [1], [0, 0, 1, 1], [], []>} : vector<8x32xbf16>, vector<32x32xbf16>, vector<8x32xf32> -> vector<8x32xf32>
    %303 = vector.broadcast %152 : vector<1x32xf32> to vector<8x32xf32>
    %304 = arith.addf %302, %303 : vector<8x32xf32>
    %305 = arith.addf %280, %304 : vector<8x32xf32>
    %cst_159 = arith.constant 0.707106769 : f32
    %306 = vector.broadcast %cst_159 : f32 to vector<8x32xf32>
    %307 = arith.mulf %305, %306 : vector<8x32xf32>
    %308 = arith.addf %307, %231 : vector<8x32xf32>
    %cst_160 = arith.constant 0.707106769 : f32
    %309 = vector.broadcast %cst_160 : f32 to vector<8x32xf32>
    %310 = arith.mulf %308, %309 : vector<8x32xf32>
    %311 = arith.truncf %310 : vector<8x32xf32> to vector<8x32xbf16>
    %c0_161 = arith.constant 0 : index
    %c0_162 = arith.constant 0 : index
    %312 = vector.load %arg21[%c0_161, %c0_162] : memref<32x32xbf16, #tpu.memory_space<vmem>>, vector<32x32xbf16>
    %cst_163 = arith.constant dense<0.000000e+00> : vector<8x32xf32>
    %313 = tpu.matmul %311, %312, %cst_163 {dimension_numbers = #tpu.dot_dimension_numbers<[1], [0], [0], [1], [0, 0, 1, 1], [], []>} : vector<8x32xbf16>, vector<32x32xbf16>, vector<8x32xf32> -> vector<8x32xf32>
    %c0_164 = arith.constant 0 : index
    %c0_165 = arith.constant 0 : index
    %314 = vector.load %arg22[%c0_164, %c0_165] : memref<1x32xf32, #tpu.memory_space<vmem>>, vector<1x32xf32>
    %315 = vector.broadcast %314 : vector<1x32xf32> to vector<8x32xf32>
    %316 = arith.addf %313, %315 : vector<8x32xf32>
    %317 = arith.truncf %316 : vector<8x32xf32> to vector<8x32xbf16>
    %c0_166 = arith.constant 0 : index
    %c0_167 = arith.constant 0 : index
    %318 = vector.load %arg23[%c0_166, %c0_167] : memref<32x40xbf16, #tpu.memory_space<vmem>>, vector<32x40xbf16>
    %cst_168 = arith.constant dense<0.000000e+00> : vector<8x40xf32>
    %319 = tpu.matmul %317, %318, %cst_168 {dimension_numbers = #tpu.dot_dimension_numbers<[1], [0], [0], [1], [0, 0, 1, 1], [], []>} : vector<8x32xbf16>, vector<32x40xbf16>, vector<8x40xf32> -> vector<8x40xf32>
    %c0_169 = arith.constant 0 : index
    %c0_170 = arith.constant 0 : index
    %320 = vector.load %arg24[%c0_169, %c0_170] : memref<1x40xf32, #tpu.memory_space<vmem>>, vector<1x40xf32>
    %321 = vector.broadcast %320 : vector<1x40xf32> to vector<8x40xf32>
    %322 = arith.addf %319, %321 : vector<8x40xf32>
    %c0_171 = arith.constant 0 : index
    %c0_172 = arith.constant 0 : index
    %c0_173 = arith.constant 0 : index
    %323 = vector.load %arg25[%c0_171, %c0_172, %c0_173] : memref<1x8x40xf32, #tpu.memory_space<vmem>>, vector<1x8x40xf32>
    %324 = vector.shape_cast %323 : vector<1x8x40xf32> to vector<8x40xf32>
    %325 = vector.shape_cast %322 : vector<8x40xf32> to vector<1x8x40xf32>
    tpu.vector_store %arg25[%c0_171, %c0_172, %c0_173], %325 {strides = array<i32>} : memref<1x8x40xf32, #tpu.memory_space<vmem>>, vector<1x8x40xf32>,
    %c0_174 = arith.constant 0 : index
    %c0_175 = arith.constant 0 : index
    %c0_176 = arith.constant 0 : index
    %326 = vector.load %arg26[%c0_174, %c0_175, %c0_176] : memref<1x8x16xf32, #tpu.memory_space<vmem>>, vector<1x8x16xf32>
    %327 = vector.shape_cast %326 : vector<1x8x16xf32> to vector<8x16xf32>
    %328 = vector.shape_cast %298 : vector<8x16xf32> to vector<1x8x16xf32>
    tpu.vector_store %arg26[%c0_174, %c0_175, %c0_176], %328 {strides = array<i32>} : memref<1x8x16xf32, #tpu.memory_space<vmem>>, vector<1x8x16xf32>,
    return
  }
  func.func @transform_0(%arg0: i32) -> (i32, i32, i32) {
    %c0_i32 = arith.constant 0 : i32
    %c0_i32_0 = arith.constant 0 : i32
    %c0_i32_1 = arith.constant 0 : i32
    return %arg0, %c0_i32, %c0_i32_0 : i32, i32, i32
  }
  func.func @transform_1(%arg0: i32) -> (i32, i32, i32) {
    %c0_i32 = arith.constant 0 : i32
    %c0_i32_0 = arith.constant 0 : i32
    %c0_i32_1 = arith.constant 0 : i32
    return %arg0, %c0_i32, %c0_i32_0 : i32, i32, i32
  }
  func.func @transform_2(%arg0: i32) -> (i32, i32) {
    %c0_i32 = arith.constant 0 : i32
    %c0_i32_0 = arith.constant 0 : i32
    %c0_i32_1 = arith.constant 0 : i32
    return %c0_i32, %c0_i32_0 : i32, i32
  }
  func.func @transform_3(%arg0: i32) -> (i32, i32) {
    %c0_i32 = arith.constant 0 : i32
    %c0_i32_0 = arith.constant 0 : i32
    %c0_i32_1 = arith.constant 0 : i32
    return %c0_i32, %c0_i32_0 : i32, i32
  }
  func.func @transform_4(%arg0: i32) -> (i32, i32) {
    %c0_i32 = arith.constant 0 : i32
    %c0_i32_0 = arith.constant 0 : i32
    %c0_i32_1 = arith.constant 0 : i32
    return %c0_i32, %c0_i32_0 : i32, i32
  }
  func.func @transform_5(%arg0: i32) -> (i32, i32) {
    %c0_i32 = arith.constant 0 : i32
    %c0_i32_0 = arith.constant 0 : i32
    %c0_i32_1 = arith.constant 0 : i32
    return %c0_i32, %c0_i32_0 : i32, i32
  }
  func.func @transform_6(%arg0: i32) -> (i32, i32, i32, i32) {
    %c0_i32 = arith.constant 0 : i32
    %c0_i32_0 = arith.constant 0 : i32
    %c0_i32_1 = arith.constant 0 : i32
    %c0_i32_2 = arith.constant 0 : i32
    %c0_i32_3 = arith.constant 0 : i32
    return %c0_i32, %c0_i32_0, %c0_i32_1, %c0_i32_2 : i32, i32, i32, i32
  }
  func.func @transform_7(%arg0: i32) -> (i32, i32, i32) {
    %c0_i32 = arith.constant 0 : i32
    %c0_i32_0 = arith.constant 0 : i32
    %c0_i32_1 = arith.constant 0 : i32
    %c0_i32_2 = arith.constant 0 : i32
    return %c0_i32, %c0_i32_0, %c0_i32_1 : i32, i32, i32
  }
  func.func @transform_8(%arg0: i32) -> (i32, i32) {
    %c0_i32 = arith.constant 0 : i32
    %c0_i32_0 = arith.constant 0 : i32
    %c0_i32_1 = arith.constant 0 : i32
    return %c0_i32, %c0_i32_0 : i32, i32
  }
  func.func @transform_9(%arg0: i32) -> (i32, i32) {
    %c0_i32 = arith.constant 0 : i32
    %c0_i32_0 = arith.constant 0 : i32
    %c0_i32_1 = arith.constant 0 : i32
    return %c0_i32, %c0_i32_0 : i32, i32
  }
  func.func @transform_10(%arg0: i32) -> (i32, i32) {
    %c0_i32 = arith.constant 0 : i32
    %c0_i32_0 = arith.constant 0 : i32
    %c0_i32_1 = arith.constant 0 : i32
    return %c0_i32, %c0_i32_0 : i32, i32
  }
  func.func @transform_11(%arg0: i32) -> (i32, i32) {
    %c0_i32 = arith.constant 0 : i32
    %c0_i32_0 = arith.constant 0 : i32
    %c0_i32_1 = arith.constant 0 : i32
    return %c0_i32, %c0_i32_0 : i32, i32
  }
  func.func @transform_12(%arg0: i32) -> (i32, i32) {
    %c0_i32 = arith.constant 0 : i32
    %c0_i32_0 = arith.constant 0 : i32
    %c0_i32_1 = arith.constant 0 : i32
    return %c0_i32, %c0_i32_0 : i32, i32
  }
  func.func @transform_13(%arg0: i32) -> (i32, i32) {
    %c0_i32 = arith.constant 0 : i32
    %c0_i32_0 = arith.constant 0 : i32
    %c0_i32_1 = arith.constant 0 : i32
    return %c0_i32, %c0_i32_0 : i32, i32
  }
  func.func @transform_14(%arg0: i32) -> (i32, i32, i32, i32) {
    %c0_i32 = arith.constant 0 : i32
    %c0_i32_0 = arith.constant 0 : i32
    %c0_i32_1 = arith.constant 0 : i32
    %c0_i32_2 = arith.constant 0 : i32
    %c0_i32_3 = arith.constant 0 : i32
    return %c0_i32, %c0_i32_0, %c0_i32_1, %c0_i32_2 : i32, i32, i32, i32
  }
  func.func @transform_15(%arg0: i32) -> (i32, i32, i32) {
    %c0_i32 = arith.constant 0 : i32
    %c0_i32_0 = arith.constant 0 : i32
    %c0_i32_1 = arith.constant 0 : i32
    %c0_i32_2 = arith.constant 0 : i32
    return %c0_i32, %c0_i32_0, %c0_i32_1 : i32, i32, i32
  }
  func.func @transform_16(%arg0: i32) -> (i32, i32) {
    %c0_i32 = arith.constant 0 : i32
    %c0_i32_0 = arith.constant 0 : i32
    %c0_i32_1 = arith.constant 0 : i32
    return %c0_i32, %c0_i32_0 : i32, i32
  }
  func.func @transform_17(%arg0: i32) -> (i32, i32) {
    %c0_i32 = arith.constant 0 : i32
    %c0_i32_0 = arith.constant 0 : i32
    %c0_i32_1 = arith.constant 0 : i32
    return %c0_i32, %c0_i32_0 : i32, i32
  }
  func.func @transform_18(%arg0: i32) -> (i32, i32) {
    %c0_i32 = arith.constant 0 : i32
    %c0_i32_0 = arith.constant 0 : i32
    %c0_i32_1 = arith.constant 0 : i32
    return %c0_i32, %c0_i32_0 : i32, i32
  }
  func.func @transform_19(%arg0: i32) -> (i32, i32) {
    %c0_i32 = arith.constant 0 : i32
    %c0_i32_0 = arith.constant 0 : i32
    %c0_i32_1 = arith.constant 0 : i32
    return %c0_i32, %c0_i32_0 : i32, i32
  }
  func.func @transform_20(%arg0: i32) -> (i32, i32) {
    %c0_i32 = arith.constant 0 : i32
    %c0_i32_0 = arith.constant 0 : i32
    %c0_i32_1 = arith.constant 0 : i32
    return %c0_i32, %c0_i32_0 : i32, i32
  }
  func.func @transform_21(%arg0: i32) -> (i32, i32) {
    %c0_i32 = arith.constant 0 : i32
    %c0_i32_0 = arith.constant 0 : i32
    %c0_i32_1 = arith.constant 0 : i32
    return %c0_i32, %c0_i32_0 : i32, i32
  }
  func.func @transform_22(%arg0: i32) -> (i32, i32) {
    %c0_i32 = arith.constant 0 : i32
    %c0_i32_0 = arith.constant 0 : i32
    %c0_i32_1 = arith.constant 0 : i32
    return %c0_i32, %c0_i32_0 : i32, i32
  }
  func.func @transform_23(%arg0: i32) -> (i32, i32) {
    %c0_i32 = arith.constant 0 : i32
    %c0_i32_0 = arith.constant 0 : i32
    %c0_i32_1 = arith.constant 0 : i32
    return %c0_i32, %c0_i32_0 : i32, i32
  }
  func.func @transform_24(%arg0: i32) -> (i32, i32, i32) {
    %c0_i32 = arith.constant 0 : i32
    %c0_i32_0 = arith.constant 0 : i32
    %c0_i32_1 = arith.constant 0 : i32
    return %arg0, %c0_i32, %c0_i32_0 : i32, i32, i32
  }
  func.func @transform_25(%arg0: i32) -> (i32, i32, i32) {
    %c0_i32 = arith.constant 0 : i32
    %c0_i32_0 = arith.constant 0 : i32
    %c0_i32_1 = arith.constant 0 : i32
    return %arg0, %c0_i32, %c0_i32_0 : i32, i32, i32
  }
}

</mosaic_0001>

<llo_original>
// kernel: g2pcnn_forward.1
$region0: #{g2pcnn_forward.1}
  #allocation0 [shape = 'u32[]', space=smem, size = 0x4, offset = 0x4, fixed_abs, tag = 'smem constant byte address 0x4 - core index']
  #allocation1 [shape = 'u32[144,128]{1,0:T(1,128)}', space=vmem, size = 0x12000, scoped, tag = 'internal scratch']
  %s0 = inlined_call_operand.vmem [shape: s32[2,16,1], index: 0, kind: input, shape index: {}]
  %s1 = inlined_call_operand.vmem [shape: s32[2,8,1], index: 1, kind: input, shape index: {}]
  %s2 = inlined_call_operand.vmem [shape: f32[40,32], index: 2, kind: input, shape index: {}]
  %s3 = inlined_call_operand.vmem [shape: f32[100,32], index: 3, kind: input, shape index: {}]
  %s4 = inlined_call_operand.vmem [shape: bf16[32,32], index: 4, kind: input, shape index: {}]
  %s5 = inlined_call_operand.vmem [shape: f32[1,32], index: 5, kind: input, shape index: {}]
  %s6 = inlined_call_operand.vmem [shape: bf16[2,3,32,64], index: 6, kind: input, shape index: {}]
  %s7 = inlined_call_operand.vmem [shape: f32[2,1,64], index: 7, kind: input, shape index: {}]
  %s8 = inlined_call_operand.vmem [shape: bf16[32,32], index: 8, kind: input, shape index: {}]
  %s9 = inlined_call_operand.vmem [shape: f32[1,32], index: 9, kind: input, shape index: {}]
  %s10 = inlined_call_operand.vmem [shape: f32[40,32], index: 10, kind: input, shape index: {}]
  %s11 = inlined_call_operand.vmem [shape: f32[100,32], index: 11, kind: input, shape index: {}]
  %s12 = inlined_call_operand.vmem [shape: bf16[32,32], index: 12, kind: input, shape index: {}]
  %s13 = inlined_call_operand.vmem [shape: f32[1,32], index: 13, kind: input, shape index: {}]
  %s14 = inlined_call_operand.vmem [shape: bf16[2,3,32,64], index: 14, kind: input, shape index: {}]
  %s15 = inlined_call_operand.vmem [shape: f32[2,1,64], index: 15, kind: input, shape index: {}]
  %s16 = inlined_call_operand.vmem [shape: bf16[32,32], index: 16, kind: input, shape index: {}]
  %s17 = inlined_call_operand.vmem [shape: f32[1,32], index: 17, kind: input, shape index: {}]
  %s18 = inlined_call_operand.vmem [shape: bf16[32,32], index: 18, kind: input, shape index: {}]
  %s19 = inlined_call_operand.vmem [shape: f32[1,32], index: 19, kind: input, shape index: {}]
  %s20 = inlined_call_operand.vmem [shape: bf16[32,32], index: 20, kind: input, shape index: {}]
  %s21 = inlined_call_operand.vmem [shape: f32[1,32], index: 21, kind: input, shape index: {}]
  %s22 = inlined_call_operand.vmem [shape: bf16[32,40], index: 22, kind: input, shape index: {}]
  %s23 = inlined_call_operand.vmem [shape: f32[1,40], index: 23, kind: input, shape index: {}]
  %s24 = inlined_call_operand.hbm [shape: f32[2,8,40], index: 24, kind: output, shape index: {0}]
  %s25 = inlined_call_operand.hbm [shape: f32[2,8,16], index: 25, kind: output, shape index: {1}]
  %26 = xla_tuple %s24, %s25
  %s27 = sld [smem:[#allocation0]]
  $region137: #{g2pcnn_forward.1} parent=0
    _
  %s29 = ssub.s32 1, %s27
  %s30 = scalar_select 0, %s29, %s27
  $region1: #{g2pcnn_forward.1} parent=0
    #allocation2 [shape = 'u8[8192]{0}', space=vmem, size = 0x2000, scoped, tag = 'output window, operand 0']
    #allocation3 [shape = 's32[2]{0}', space=sflag, size = 0x8, scoped, tag = 'scoped memory for g2pcnn_forward.1']
    #allocation4 [shape = 'u8[8192]{0}', space=vmem, size = 0x2000, scoped, tag = 'output window, operand 1']
    #allocation5 [shape = 's32[2]{0}', space=sflag, size = 0x8, scoped, tag = 'scoped memory for g2pcnn_forward.1']
    %31 = vsyncpa [#allocation3], 0
    %s32 = scalar_lea.sflag [#allocation3], 1
    %33 = vsyncpa %s32, 0
    %34 = vsyncpa [#allocation5], 0
    %s35 = scalar_lea.sflag [#allocation5], 1
    %36 = vsyncpa %s35, 0
    loop: start=0, step=1, limit=4
    $region2: #{g2pcnn_forward.1} parent=1 // loop_pre_header
      _
    $region3: #{g2pcnn_forward.1} parent=1 // loop_header
      %s38 = sphi 0, %s42
      %p39 = scmp.ge.s32.totalorder %s38, 4
      %s48 = sphi 0, %s50
      %s51 = sphi 0, %s48
      %s52 = sphi 0, %s51
      %s68 = sphi 0, %s52
      %s74 = sphi 0, %s76
      %s77 = sphi 0, %s74
      %s78 = sphi 0, %s77
      %s94 = sphi 0, %s78
      %s98 = sphi 0, %s98
      %s100 = sphi 0, %s98
      %s101 = sphi 0, %s100
      %s115 = sphi 0, %s101
      %s119 = sphi 0, %s119
      %s121 = sphi 0, %s119
      %s122 = sphi 0, %s121
      %s136 = sphi 0, %s122
      %s140 = sphi 0, %s140
      %s142 = sphi 0, %s140
      %s143 = sphi 0, %s142
      %s157 = sphi 0, %s143
      %s161 = sphi 0, %s161
      %s163 = sphi 0, %s161
      %s164 = sphi 0, %s163
      %s178 = sphi 0, %s164
      %s182 = sphi 0, %s182
      %s184 = sphi 0, %s182
      %s185 = sphi 0, %s184
      %s199 = sphi 0, %s185
      %s203 = sphi 0, %s203
      %s205 = sphi 0, %s203
      %s206 = sphi 0, %s205
      %s220 = sphi 0, %s206
      %s224 = sphi 0, %s224
      %s226 = sphi 0, %s224
      %s227 = sphi 0, %s226
      %s241 = sphi 0, %s227
      %s245 = sphi 0, %s245
      %s247 = sphi 0, %s245
      %s248 = sphi 0, %s247
      %s262 = sphi 0, %s248
      %s266 = sphi 0, %s266
      %s268 = sphi 0, %s266
      %s269 = sphi 0, %s268
      %s283 = sphi 0, %s269
      %s287 = sphi 0, %s287
      %s289 = sphi 0, %s287
      %s290 = sphi 0, %s289
      %s304 = sphi 0, %s290
      %s308 = sphi 0, %s308
      %s310 = sphi 0, %s308
      %s311 = sphi 0, %s310
      %s325 = sphi 0, %s311
      %s329 = sphi 0, %s329
      %s331 = sphi 0, %s329
      %s332 = sphi 0, %s331
      %s346 = sphi 0, %s332
      %s350 = sphi 0, %s350
      %s352 = sphi 0, %s350
      %s353 = sphi 0, %s352
      %s367 = sphi 0, %s353
      %s371 = sphi 0, %s371
      %s373 = sphi 0, %s371
      %s374 = sphi 0, %s373
      %s388 = sphi 0, %s374
      %s392 = sphi 0, %s392
      %s394 = sphi 0, %s392
      %s395 = sphi 0, %s394
      %s409 = sphi 0, %s395
      %s413 = sphi 0, %s413
      %s415 = sphi 0, %s413
      %s416 = sphi 0, %s415
      %s430 = sphi 0, %s416
      %s434 = sphi 0, %s434
      %s436 = sphi 0, %s434
      %s437 = sphi 0, %s436
      %s451 = sphi 0, %s437
      %s455 = sphi 0, %s455
      %s457 = sphi 0, %s455
      %s458 = sphi 0, %s457
      %s472 = sphi 0, %s458
      %s476 = sphi 0, %s476
      %s478 = sphi 0, %s476
      %s479 = sphi 0, %s478
      %s493 = sphi 0, %s479
      %s497 = sphi 0, %s497
      %s499 = sphi 0, %s497
      %s500 = sphi 0, %s499
      %s514 = sphi 0, %s500
      %s518 = sphi 0, %s518
      %s520 = sphi 0, %s518
      %s521 = sphi 0, %s520
      %s535 = sphi 0, %s521
      %s539 = sphi 0, %s539
      %s541 = sphi 0, %s539
      %s542 = sphi 0, %s541
      %s556 = sphi 0, %s542
      %s562 = sphi 0, %s564
      %s565 = sphi 0, %s562
      %s566 = sphi 0, %s565
      %s582 = sphi 0, %s566
      %s588 = sphi 0, %s590
      %s591 = sphi 0, %s588
      %s592 = sphi 0, %s591
      %s608 = sphi 0, %s592
    $region4: #{g2pcnn_forward.1} parent=1 // loop_header_branch
      %41 = sbr.rel (%p39) target = $region8
    $region5: #{g2pcnn_forward.1} parent=1 // loop_body
      %s43 = ssub.s32 %s38, 1
      %s44 = ssub.s32 %s38, 2
      %s45 = sadd.s32 %s38, 1
      %s46 = ssub.s32 %s38, %s45
      %p47 = scmp.eq.s32.totalorder %s46, 0
      %s49 = sadd.s32 %s48, 1
      %s50 = scalar_select %p47, %s48, %s49
      %p53 = pneg %p47
      %p54 = scmp.eq.s32.totalorder %s38, 1
      %p55 = por %p53, %p54
      %p56 = scmp.ne.s32.totalorder %s48, %s51
      %p57 = scmp.eq.s32.totalorder %s38, 0
      %p58 = por %p56, %p57
      %p59 = scmp.ne.s32.totalorder %s48, %s51
      %p60 = scmp.eq.s32.totalorder %s43, 1
      %p61 = por %p59, %p60
      %p62 = scmp.ne.s32.totalorder %s51, %s52
      %p63 = scmp.eq.s32.totalorder %s43, 0
      %p64 = por %p62, %p63
      %p65 = scmp.ne.s32.totalorder %s51, %s52
      %p66 = scmp.eq.s32.totalorder %s44, 1
      %p67 = por %p65, %p66
      %p69 = scmp.ne.s32.totalorder %s52, %s68
      %p70 = scmp.eq.s32.totalorder %s44, 0
      %p71 = por %p69, %p70
      %s72 = ssub.s32 %s38, %s45
      %p73 = scmp.eq.s32.totalorder %s72, 0
      %s75 = sadd.s32 %s74, 1
      %s76 = scalar_select %p73, %s74, %s75
      %p79 = pneg %p73
      %p80 = scmp.eq.s32.totalorder %s38, 1
      %p81 = por %p79, %p80
      %p82 = scmp.ne.s32.totalorder %s74, %s77
      %p83 = scmp.eq.s32.totalorder %s38, 0
      %p84 = por %p82, %p83
      %p85 = scmp.ne.s32.totalorder %s74, %s77
      %p86 = scmp.eq.s32.totalorder %s43, 1
      %p87 = por %p85, %p86
      %p88 = scmp.ne.s32.totalorder %s77, %s78
      %p89 = scmp.eq.s32.totalorder %s43, 0
      %p90 = por %p88, %p89
      %p91 = scmp.ne.s32.totalorder %s77, %s78
      %p92 = scmp.eq.s32.totalorder %s44, 1
      %p93 = por %p91, %p92
      %p95 = scmp.ne.s32.totalorder %s78, %s94
      %p96 = scmp.eq.s32.totalorder %s44, 0
      %p97 = por %p95, %p96
      %s99 = sadd.s32 %s98, 1
      %p102 = scmp.eq.s32.totalorder %s38, 1
      %p103 = scmp.ne.s32.totalorder %s98, %s100
      %p104 = scmp.eq.s32.totalorder %s38, 0
      %p105 = por %p103, %p104
      %p106 = scmp.ne.s32.totalorder %s98, %s100
      %p107 = scmp.eq.s32.totalorder %s43, 1
      %p108 = por %p106, %p107
      %p109 = scmp.ne.s32.totalorder %s100, %s101
      %p110 = scmp.eq.s32.totalorder %s43, 0
      %p111 = por %p109, %p110
      %p112 = scmp.ne.s32.totalorder %s100, %s101
      %p113 = scmp.eq.s32.totalorder %s44, 1
      %p114 = por %p112, %p113
      %p116 = scmp.ne.s32.totalorder %s101, %s115
      %p117 = scmp.eq.s32.totalorder %s44, 0
      %p118 = por %p116, %p117
      %s120 = sadd.s32 %s119, 1
      %p123 = scmp.eq.s32.totalorder %s38, 1
      %p124 = scmp.ne.s32.totalorder %s119, %s121
      %p125 = scmp.eq.s32.totalorder %s38, 0
      %p126 = por %p124, %p125
      %p127 = scmp.ne.s32.totalorder %s119, %s121
      %p128 = scmp.eq.s32.totalorder %s43, 1
      %p129 = por %p127, %p128
      %p130 = scmp.ne.s32.totalorder %s121, %s122
      %p131 = scmp.eq.s32.totalorder %s43, 0
      %p132 = por %p130, %p131
      %p133 = scmp.ne.s32.totalorder %s121, %s122
      %p134 = scmp.eq.s32.totalorder %s44, 1
      %p135 = por %p133, %p134
      %p137 = scmp.ne.s32.totalorder %s122, %s136
      %p138 = scmp.eq.s32.totalorder %s44, 0
      %p139 = por %p137, %p138
      %s141 = sadd.s32 %s140, 1
      %p144 = scmp.eq.s32.totalorder %s38, 1
      %p145 = scmp.ne.s32.totalorder %s140, %s142
      %p146 = scmp.eq.s32.totalorder %s38, 0
      %p147 = por %p145, %p146
      %p148 = scmp.ne.s32.totalorder %s140, %s142
      %p149 = scmp.eq.s32.totalorder %s43, 1
      %p150 = por %p148, %p149
      %p151 = scmp.ne.s32.totalorder %s142, %s143
      %p152 = scmp.eq.s32.totalorder %s43, 0
      %p153 = por %p151, %p152
      %p154 = scmp.ne.s32.totalorder %s142, %s143
      %p155 = scmp.eq.s32.totalorder %s44, 1
      %p156 = por %p154, %p155
      %p158 = scmp.ne.s32.totalorder %s143, %s157
      %p159 = scmp.eq.s32.totalorder %s44, 0
      %p160 = por %p158, %p159
      %s162 = sadd.s32 %s161, 1
      %p165 = scmp.eq.s32.totalorder %s38, 1
      %p166 = scmp.ne.s32.totalorder %s161, %s163
      %p167 = scmp.eq.s32.totalorder %s38, 0
      %p168 = por %p166, %p167
      %p169 = scmp.ne.s32.totalorder %s161, %s163
      %p170 = scmp.eq.s32.totalorder %s43, 1
      %p171 = por %p169, %p170
      %p172 = scmp.ne.s32.totalorder %s163, %s164
      %p173 = scmp.eq.s32.totalorder %s43, 0
      %p174 = por %p172, %p173
      %p175 = scmp.ne.s32.totalorder %s163, %s164
      %p176 = scmp.eq.s32.totalorder %s44, 1
      %p177 = por %p175, %p176
      %p179 = scmp.ne.s32.totalorder %s164, %s178
      %p180 = scmp.eq.s32.totalorder %s44, 0
      %p181 = por %p179, %p180
      %s183 = sadd.s32 %s182, 1
      %p186 = scmp.eq.s32.totalorder %s38, 1
      %p187 = scmp.ne.s32.totalorder %s182, %s184
      %p188 = scmp.eq.s32.totalorder %s38, 0
      %p189 = por %p187, %p188
      %p190 = scmp.ne.s32.totalorder %s182, %s184
      %p191 = scmp.eq.s32.totalorder %s43, 1
      %p192 = por %p190, %p191
      %p193 = scmp.ne.s32.totalorder %s184, %s185
      %p194 = scmp.eq.s32.totalorder %s43, 0
      %p195 = por %p193, %p194
      %p196 = scmp.ne.s32.totalorder %s184, %s185
      %p197 = scmp.eq.s32.totalorder %s44, 1
      %p198 = por %p196, %p197
      %p200 = scmp.ne.s32.totalorder %s185, %s199
      %p201 = scmp.eq.s32.totalorder %s44, 0
      %p202 = por %p200, %p201
      %s204 = sadd.s32 %s203, 1
      %p207 = scmp.eq.s32.totalorder %s38, 1
      %p208 = scmp.ne.s32.totalorder %s203, %s205
      %p209 = scmp.eq.s32.totalorder %s38, 0
      %p210 = por %p208, %p209
      %p211 = scmp.ne.s32.totalorder %s203, %s205
      %p212 = scmp.eq.s32.totalorder %s43, 1
      %p213 = por %p211, %p212
      %p214 = scmp.ne.s32.totalorder %s205, %s206
      %p215 = scmp.eq.s32.totalorder %s43, 0
      %p216 = por %p214, %p215
      %p217 = scmp.ne.s32.totalorder %s205, %s206
      %p218 = scmp.eq.s32.totalorder %s44, 1
      %p219 = por %p217, %p218
      %p221 = scmp.ne.s32.totalorder %s206, %s220
      %p222 = scmp.eq.s32.totalorder %s44, 0
      %p223 = por %p221, %p222
      %s225 = sadd.s32 %s224, 1
      %p228 = scmp.eq.s32.totalorder %s38, 1
      %p229 = scmp.ne.s32.totalorder %s224, %s226
      %p230 = scmp.eq.s32.totalorder %s38, 0
      %p231 = por %p229, %p230
      %p232 = scmp.ne.s32.totalorder %s224, %s226
      %p233 = scmp.eq.s32.totalorder %s43, 1
      %p234 = por %p232, %p233
      %p235 = scmp.ne.s32.totalorder %s226, %s227
      %p236 = scmp.eq.s32.totalorder %s43, 0
      %p237 = por %p235, %p236
      %p238 = scmp.ne.s32.totalorder %s226, %s227
      %p239 = scmp.eq.s32.totalorder %s44, 1
      %p240 = por %p238, %p239
      %p242 = scmp.ne.s32.totalorder %s227, %s241
      %p243 = scmp.eq.s32.totalorder %s44, 0
      %p244 = por %p242, %p243
      %s246 = sadd.s32 %s245, 1
      %p249 = scmp.eq.s32.totalorder %s38, 1
      %p250 = scmp.ne.s32.totalorder %s245, %s247
      %p251 = scmp.eq.s32.totalorder %s38, 0
      %p252 = por %p250, %p251
      %p253 = scmp.ne.s32.totalorder %s245, %s247
      %p254 = scmp.eq.s32.totalorder %s43, 1
      %p255 = por %p253, %p254
      %p256 = scmp.ne.s32.totalorder %s247, %s248
      %p257 = scmp.eq.s32.totalorder %s43, 0
      %p258 = por %p256, %p257
      %p259 = scmp.ne.s32.totalorder %s247, %s248
      %p260 = scmp.eq.s32.totalorder %s44, 1
      %p261 = por %p259, %p260
      %p263 = scmp.ne.s32.totalorder %s248, %s262
      %p264 = scmp.eq.s32.totalorder %s44, 0
      %p265 = por %p263, %p264
      %s267 = sadd.s32 %s266, 1
      %p270 = scmp.eq.s32.totalorder %s38, 1
      %p271 = scmp.ne.s32.totalorder %s266, %s268
      %p272 = scmp.eq.s32.totalorder %s38, 0
      %p273 = por %p271, %p272
      %p274 = scmp.ne.s32.totalorder %s266, %s268
      %p275 = scmp.eq.s32.totalorder %s43, 1
      %p276 = por %p274, %p275
      %p277 = scmp.ne.s32.totalorder %s268, %s269
      %p278 = scmp.eq.s32.totalorder %s43, 0
      %p279 = por %p277, %p278
      %p280 = scmp.ne.s32.totalorder %s268, %s269
      %p281 = scmp.eq.s32.totalorder %s44, 1
      %p282 = por %p280, %p281
      %p284 = scmp.ne.s32.totalorder %s269, %s283
      %p285 = scmp.eq.s32.totalorder %s44, 0
      %p286 = por %p284, %p285
      %s288 = sadd.s32 %s287, 1
      %p291 = scmp.eq.s32.totalorder %s38, 1
      %p292 = scmp.ne.s32.totalorder %s287, %s289
      %p293 = scmp.eq.s32.totalorder %s38, 0
      %p294 = por %p292, %p293
      %p295 = scmp.ne.s32.totalorder %s287, %s289
      %p296 = scmp.eq.s32.totalorder %s43, 1
      %p297 = por %p295, %p296
      %p298 = scmp.ne.s32.totalorder %s289, %s290
      %p299 = scmp.eq.s32.totalorder %s43, 0
      %p300 = por %p298, %p299
      %p301 = scmp.ne.s32.totalorder %s289, %s290
      %p302 = scmp.eq.s32.totalorder %s44, 1
      %p303 = por %p301, %p302
      %p305 = scmp.ne.s32.totalorder %s290, %s304
      %p306 = scmp.eq.s32.totalorder %s44, 0
      %p307 = por %p305, %p306
      %s309 = sadd.s32 %s308, 1
      %p312 = scmp.eq.s32.totalorder %s38, 1
      %p313 = scmp.ne.s32.totalorder %s308, %s310
      %p314 = scmp.eq.s32.totalorder %s38, 0
      %p315 = por %p313, %p314
      %p316 = scmp.ne.s32.totalorder %s308, %s310
      %p317 = scmp.eq.s32.totalorder %s43, 1
      %p318 = por %p316, %p317
      %p319 = scmp.ne.s32.totalorder %s310, %s311
      %p320 = scmp.eq.s32.totalorder %s43, 0
      %p321 = por %p319, %p320
      %p322 = scmp.ne.s32.totalorder %s310, %s311
      %p323 = scmp.eq.s32.totalorder %s44, 1
      %p324 = por %p322, %p323
      %p326 = scmp.ne.s32.totalorder %s311, %s325
      %p327 = scmp.eq.s32.totalorder %s44, 0
      %p328 = por %p326, %p327
      %s330 = sadd.s32 %s329, 1
      %p333 = scmp.eq.s32.totalorder %s38, 1
      %p334 = scmp.ne.s32.totalorder %s329, %s331
      %p335 = scmp.eq.s32.totalorder %s38, 0
      %p336 = por %p334, %p335
      %p337 = scmp.ne.s32.totalorder %s329, %s331
      %p338 = scmp.eq.s32.totalorder %s43, 1
      %p339 = por %p337, %p338
      %p340 = scmp.ne.s32.totalorder %s331, %s332
      %p341 = scmp.eq.s32.totalorder %s43, 0
      %p342 = por %p340, %p341
      %p343 = scmp.ne.s32.totalorder %s331, %s332
      %p344 = scmp.eq.s32.totalorder %s44, 1
      %p345 = por %p343, %p344
      %p347 = scmp.ne.s32.totalorder %s332, %s346
      %p348 = scmp.eq.s32.totalorder %s44, 0
      %p349 = por %p347, %p348
      %s351 = sadd.s32 %s350, 1
      %p354 = scmp.eq.s32.totalorder %s38, 1
      %p355 = scmp.ne.s32.totalorder %s350, %s352
      %p356 = scmp.eq.s32.totalorder %s38, 0
      %p357 = por %p355, %p356
      %p358 = scmp.ne.s32.totalorder %s350, %s352
      %p359 = scmp.eq.s32.totalorder %s43, 1
      %p360 = por %p358, %p359
      %p361 = scmp.ne.s32.totalorder %s352, %s353
      %p362 = scmp.eq.s32.totalorder %s43, 0
      %p363 = por %p361, %p362
      %p364 = scmp.ne.s32.totalorder %s352, %s353
      %p365 = scmp.eq.s32.totalorder %s44, 1
      %p366 = por %p364, %p365
      %p368 = scmp.ne.s32.totalorder %s353, %s367
      %p369 = scmp.eq.s32.totalorder %s44, 0
      %p370 = por %p368, %p369
      %s372 = sadd.s32 %s371, 1
      %p375 = scmp.eq.s32.totalorder %s38, 1
      %p376 = scmp.ne.s32.totalorder %s371, %s373
      %p377 = scmp.eq.s32.totalorder %s38, 0
      %p378 = por %p376, %p377
      %p379 = scmp.ne.s32.totalorder %s371, %s373
      %p380 = scmp.eq.s32.totalorder %s43, 1
      %p381 = por %p379, %p380
      %p382 = scmp.ne.s32.totalorder %s373, %s374
      %p383 = scmp.eq.s32.totalorder %s43, 0
      %p384 = por %p382, %p383
      %p385 = scmp.ne.s32.totalorder %s373, %s374
      %p386 = scmp.eq.s32.totalorder %s44, 1
      %p387 = por %p385, %p386
      %p389 = scmp.ne.s32.totalorder %s374, %s388
      %p390 = scmp.eq.s32.totalorder %s44, 0
      %p391 = por %p389, %p390
      %s393 = sadd.s32 %s392, 1
      %p396 = scmp.eq.s32.totalorder %s38, 1
      %p397 = scmp.ne.s32.totalorder %s392, %s394
      %p398 = scmp.eq.s32.totalorder %s38, 0
      %p399 = por %p397, %p398
      %p400 = scmp.ne.s32.totalorder %s392, %s394
      %p401 = scmp.eq.s32.totalorder %s43, 1
      %p402 = por %p400, %p401
      %p403 = scmp.ne.s32.totalorder %s394, %s395
      %p404 = scmp.eq.s32.totalorder %s43, 0
      %p405 = por %p403, %p404
      %p406 = scmp.ne.s32.totalorder %s394, %s395
      %p407 = scmp.eq.s32.totalorder %s44, 1
      %p408 = por %p406, %p407
      %p410 = scmp.ne.s32.totalorder %s395, %s409
      %p411 = scmp.eq.s32.totalorder %s44, 0
      %p412 = por %p410, %p411
      %s414 = sadd.s32 %s413, 1
      %p417 = scmp.eq.s32.totalorder %s38, 1
      %p418 = scmp.ne.s32.totalorder %s413, %s415
      %p419 = scmp.eq.s32.totalorder %s38, 0
      %p420 = por %p418, %p419
      %p421 = scmp.ne.s32.totalorder %s413, %s415
      %p422 = scmp.eq.s32.totalorder %s43, 1
      %p423 = por %p421, %p422
      %p424 = scmp.ne.s32.totalorder %s415, %s416
      %p425 = scmp.eq.s32.totalorder %s43, 0
      %p426 = por %p424, %p425
      %p427 = scmp.ne.s32.totalorder %s415, %s416
      %p428 = scmp.eq.s32.totalorder %s44, 1
      %p429 = por %p427, %p428
      %p431 = scmp.ne.s32.totalorder %s416, %s430
      %p432 = scmp.eq.s32.totalorder %s44, 0
      %p433 = por %p431, %p432
      %s435 = sadd.s32 %s434, 1
      %p438 = scmp.eq.s32.totalorder %s38, 1
      %p439 = scmp.ne.s32.totalorder %s434, %s436
      %p440 = scmp.eq.s32.totalorder %s38, 0
      %p441 = por %p439, %p440
      %p442 = scmp.ne.s32.totalorder %s434, %s436
      %p443 = scmp.eq.s32.totalorder %s43, 1
      %p444 = por %p442, %p443
      %p445 = scmp.ne.s32.totalorder %s436, %s437
      %p446 = scmp.eq.s32.totalorder %s43, 0
      %p447 = por %p445, %p446
      %p448 = scmp.ne.s32.totalorder %s436, %s437
      %p449 = scmp.eq.s32.totalorder %s44, 1
      %p450 = por %p448, %p449
      %p452 = scmp.ne.s32.totalorder %s437, %s451
      %p453 = scmp.eq.s32.totalorder %s44, 0
      %p454 = por %p452, %p453
      %s456 = sadd.s32 %s455, 1
      %p459 = scmp.eq.s32.totalorder %s38, 1
      %p460 = scmp.ne.s32.totalorder %s455, %s457
      %p461 = scmp.eq.s32.totalorder %s38, 0
      %p462 = por %p460, %p461
      %p463 = scmp.ne.s32.totalorder %s455, %s457
      %p464 = scmp.eq.s32.totalorder %s43, 1
      %p465 = por %p463, %p464
      %p466 = scmp.ne.s32.totalorder %s457, %s458
      %p467 = scmp.eq.s32.totalorder %s43, 0
      %p468 = por %p466, %p467
      %p469 = scmp.ne.s32.totalorder %s457, %s458
      %p470 = scmp.eq.s32.totalorder %s44, 1
      %p471 = por %p469, %p470
      %p473 = scmp.ne.s32.totalorder %s458, %s472
      %p474 = scmp.eq.s32.totalorder %s44, 0
      %p475 = por %p473, %p474
      %s477 = sadd.s32 %s476, 1
      %p480 = scmp.eq.s32.totalorder %s38, 1
      %p481 = scmp.ne.s32.totalorder %s476, %s478
      %p482 = scmp.eq.s32.totalorder %s38, 0
      %p483 = por %p481, %p482
      %p484 = scmp.ne.s32.totalorder %s476, %s478
      %p485 = scmp.eq.s32.totalorder %s43, 1
      %p486 = por %p484, %p485
      %p487 = scmp.ne.s32.totalorder %s478, %s479
      %p488 = scmp.eq.s32.totalorder %s43, 0
      %p489 = por %p487, %p488
      %p490 = scmp.ne.s32.totalorder %s478, %s479
      %p491 = scmp.eq.s32.totalorder %s44, 1
      %p492 = por %p490, %p491
      %p494 = scmp.ne.s32.totalorder %s479, %s493
      %p495 = scmp.eq.s32.totalorder %s44, 0
      %p496 = por %p494, %p495
      %s498 = sadd.s32 %s497, 1
      %p501 = scmp.eq.s32.totalorder %s38, 1
      %p502 = scmp.ne.s32.totalorder %s497, %s499
      %p503 = scmp.eq.s32.totalorder %s38, 0
      %p504 = por %p502, %p503
      %p505 = scmp.ne.s32.totalorder %s497, %s499
      %p506 = scmp.eq.s32.totalorder %s43, 1
      %p507 = por %p505, %p506
      %p508 = scmp.ne.s32.totalorder %s499, %s500
      %p509 = scmp.eq.s32.totalorder %s43, 0
      %p510 = por %p508, %p509
      %p511 = scmp.ne.s32.totalorder %s499, %s500
      %p512 = scmp.eq.s32.totalorder %s44, 1
      %p513 = por %p511, %p512
      %p515 = scmp.ne.s32.totalorder %s500, %s514
      %p516 = scmp.eq.s32.totalorder %s44, 0
      %p517 = por %p515, %p516
      %s519 = sadd.s32 %s518, 1
      %p522 = scmp.eq.s32.totalorder %s38, 1
      %p523 = scmp.ne.s32.totalorder %s518, %s520
      %p524 = scmp.eq.s32.totalorder %s38, 0
      %p525 = por %p523, %p524
      %p526 = scmp.ne.s32.totalorder %s518, %s520
      %p527 = scmp.eq.s32.totalorder %s43, 1
      %p528 = por %p526, %p527
      %p529 = scmp.ne.s32.totalorder %s520, %s521
      %p530 = scmp.eq.s32.totalorder %s43, 0
      %p531 = por %p529, %p530
      %p532 = scmp.ne.s32.totalorder %s520, %s521
      %p533 = scmp.eq.s32.totalorder %s44, 1
      %p534 = por %p532, %p533
      %p536 = scmp.ne.s32.totalorder %s521, %s535
      %p537 = scmp.eq.s32.totalorder %s44, 0
      %p538 = por %p536, %p537
      %s540 = sadd.s32 %s539, 1
      %p543 = scmp.eq.s32.totalorder %s38, 1
      %p544 = scmp.ne.s32.totalorder %s539, %s541
      %p545 = scmp.eq.s32.totalorder %s38, 0
      %p546 = por %p544, %p545
      %p547 = scmp.ne.s32.totalorder %s539, %s541
      %p548 = scmp.eq.s32.totalorder %s43, 1
      %p549 = por %p547, %p548
      %p550 = scmp.ne.s32.totalorder %s541, %s542
      %p551 = scmp.eq.s32.totalorder %s43, 0
      %p552 = por %p550, %p551
      %p553 = scmp.ne.s32.totalorder %s541, %s542
      %p554 = scmp.eq.s32.totalorder %s44, 1
      %p555 = por %p553, %p554
      %p557 = scmp.ne.s32.totalorder %s542, %s556
      %p558 = scmp.eq.s32.totalorder %s44, 0
      %p559 = por %p557, %p558
      %s560 = ssub.s32 %s38, %s45
      %p561 = scmp.eq.s32.totalorder %s560, 0
      %s563 = sadd.s32 %s562, 1
      %s564 = scalar_select %p561, %s562, %s563
      %p567 = pneg %p561
      %p568 = scmp.eq.s32.totalorder %s38, 1
      %p569 = por %p567, %p568
      %p570 = scmp.ne.s32.totalorder %s562, %s565
      %p571 = scmp.eq.s32.totalorder %s38, 0
      %p572 = por %p570, %p571
      %p573 = scmp.ne.s32.totalorder %s562, %s565
      %p574 = scmp.eq.s32.totalorder %s43, 1
      %p575 = por %p573, %p574
      %p576 = scmp.ne.s32.totalorder %s565, %s566
      %p577 = scmp.eq.s32.totalorder %s43, 0
      %p578 = por %p576, %p577
      %p579 = scmp.ne.s32.totalorder %s565, %s566
      %p580 = scmp.eq.s32.totalorder %s44, 1
      %p581 = por %p579, %p580
      %p583 = scmp.ne.s32.totalorder %s566, %s582
      %p584 = scmp.eq.s32.totalorder %s44, 0
      %p585 = por %p583, %p584
      %s586 = ssub.s32 %s38, %s45
      %p587 = scmp.eq.s32.totalorder %s586, 0
      %s589 = sadd.s32 %s588, 1
      %s590 = scalar_select %p587, %s588, %s589
      %p593 = pneg %p587
      %p594 = scmp.eq.s32.totalorder %s38, 1
      %p595 = por %p593, %p594
      %p596 = scmp.ne.s32.totalorder %s588, %s591
      %p597 = scmp.eq.s32.totalorder %s38, 0
      %p598 = por %p596, %p597
      %p599 = scmp.ne.s32.totalorder %s588, %s591
      %p600 = scmp.eq.s32.totalorder %s43, 1
      %p601 = por %p599, %p600
      %p602 = scmp.ne.s32.totalorder %s591, %s592
      %p603 = scmp.eq.s32.totalorder %s43, 0
      %p604 = por %p602, %p603
      %p605 = scmp.ne.s32.totalorder %s591, %s592
      %p606 = scmp.eq.s32.totalorder %s44, 1
      %p607 = por %p605, %p606
      %p609 = scmp.ne.s32.totalorder %s592, %s608
      %p610 = scmp.eq.s32.totalorder %s44, 0
      %p611 = por %p609, %p610
      %p612 = scmp.le.s32.totalorder 1, %s38
      %p613 = scmp.lt.s32.totalorder %s38, 3
      %p614 = pnand %p612, %p613
      %p615 = pneg %p614
      // Predicated region
      $region9: #{g2pcnn_forward.1} parent=5 // pred_check
        _
      $region10: #{g2pcnn_forward.1} parent=5 // pred_check_branch
        %617 = sbr.rel (%p614) target = $region12
      $region11: #{g2pcnn_forward.1} parent=5 // pred_region
        %s618 = ssub.s32 %s38, 1
        // Predicated region
        $region13: #{g2pcnn_forward.1} parent=11 // pred_check
          %p619 = pneg %p111
        $region14: #{g2pcnn_forward.1} parent=11 // pred_check_branch
          %621 = sbr.rel (%p619) target = $region16
        $region15: #{g2pcnn_forward.1} parent=11 // pred_region
          _
        $region16: #{g2pcnn_forward.1} parent=11 // pred_fallthru
          _
        // Predicated region
        $region17: #{g2pcnn_forward.1} parent=11 // pred_check
          %p622 = pneg %p132
        $region18: #{g2pcnn_forward.1} parent=11 // pred_check_branch
          %624 = sbr.rel (%p622) target = $region20
        $region19: #{g2pcnn_forward.1} parent=11 // pred_region
          _
        $region20: #{g2pcnn_forward.1} parent=11 // pred_fallthru
          _
        // Predicated region
        $region21: #{g2pcnn_forward.1} parent=11 // pred_check
          %p625 = pneg %p153
        $region22: #{g2pcnn_forward.1} parent=11 // pred_check_branch
          %627 = sbr.rel (%p625) target = $region24
        $region23: #{g2pcnn_forward.1} parent=11 // pred_region
          _
        $region24: #{g2pcnn_forward.1} parent=11 // pred_fallthru
          _
        // Predicated region
        $region25: #{g2pcnn_forward.1} parent=11 // pred_check
          %p628 = pneg %p174
        $region26: #{g2pcnn_forward.1} parent=11 // pred_check_branch
          %630 = sbr.rel (%p628) target = $region28
        $region27: #{g2pcnn_forward.1} parent=11 // pred_region
          _
        $region28: #{g2pcnn_forward.1} parent=11 // pred_fallthru
          _
        // Predicated region
        $region29: #{g2pcnn_forward.1} parent=11 // pred_check
          %p631 = pneg %p195
        $region30: #{g2pcnn_forward.1} parent=11 // pred_check_branch
          %633 = sbr.rel (%p631) target = $region32
        $region31: #{g2pcnn_forward.1} parent=11 // pred_region
          _
        $region32: #{g2pcnn_forward.1} parent=11 // pred_fallthru
          _
        // Predicated region
        $region33: #{g2pcnn_forward.1} parent=11 // pred_check
          %p634 = pneg %p216
        $region34: #{g2pcnn_forward.1} parent=11 // pred_check_branch
          %636 = sbr.rel (%p634) target = $region36
        $region35: #{g2pcnn_forward.1} parent=11 // pred_region
          _
        $region36: #{g2pcnn_forward.1} parent=11 // pred_fallthru
          _
        // Predicated region
        $region37: #{g2pcnn_forward.1} parent=11 // pred_check
          %p637 = pneg %p237
        $region38: #{g2pcnn_forward.1} parent=11 // pred_check_branch
          %639 = sbr.rel (%p637) target = $region40
        $region39: #{g2pcnn_forward.1} parent=11 // pred_region
          _
        $region40: #{g2pcnn_forward.1} parent=11 // pred_fallthru
          _
        // Predicated region
        $region41: #{g2pcnn_forward.1} parent=11 // pred_check
          %p640 = pneg %p258
        $region42: #{g2pcnn_forward.1} parent=11 // pred_check_branch
          %642 = sbr.rel (%p640) target = $region44
        $region43: #{g2pcnn_forward.1} parent=11 // pred_region
          _
        $region44: #{g2pcnn_forward.1} parent=11 // pred_fallthru
          _
        // Predicated region
        $region45: #{g2pcnn_forward.1} parent=11 // pred_check
          %p643 = pneg %p279
        $region46: #{g2pcnn_forward.1} parent=11 // pred_check_branch
          %645 = sbr.rel (%p643) target = $region48
        $region47: #{g2pcnn_forward.1} parent=11 // pred_region
          _
        $region48: #{g2pcnn_forward.1} parent=11 // pred_fallthru
          _
        // Predicated region
        $region49: #{g2pcnn_forward.1} parent=11 // pred_check
          %p646 = pneg %p300
        $region50: #{g2pcnn_forward.1} parent=11 // pred_check_branch
          %648 = sbr.rel (%p646) target = $region52
        $region51: #{g2pcnn_forward.1} parent=11 // pred_region
          _
        $region52: #{g2pcnn_forward.1} parent=11 // pred_fallthru
          _
        // Predicated region
        $region53: #{g2pcnn_forward.1} parent=11 // pred_check
          %p649 = pneg %p321
        $region54: #{g2pcnn_forward.1} parent=11 // pred_check_branch
          %651 = sbr.rel (%p649) target = $region56
        $region55: #{g2pcnn_forward.1} parent=11 // pred_region
          _
        $region56: #{g2pcnn_forward.1} parent=11 // pred_fallthru
          _
        // Predicated region
        $region57: #{g2pcnn_forward.1} parent=11 // pred_check
          %p652 = pneg %p342
        $region58: #{g2pcnn_forward.1} parent=11 // pred_check_branch
          %654 = sbr.rel (%p652) target = $region60
        $region59: #{g2pcnn_forward.1} parent=11 // pred_region
          _
        $region60: #{g2pcnn_forward.1} parent=11 // pred_fallthru
          _
        // Predicated region
        $region61: #{g2pcnn_forward.1} parent=11 // pred_check
          %p655 = pneg %p363
        $region62: #{g2pcnn_forward.1} parent=11 // pred_check_branch
          %657 = sbr.rel (%p655) target = $region64
        $region63: #{g2pcnn_forward.1} parent=11 // pred_region
          _
        $region64: #{g2pcnn_forward.1} parent=11 // pred_fallthru
          _
        // Predicated region
        $region65: #{g2pcnn_forward.1} parent=11 // pred_check
          %p658 = pneg %p384
        $region66: #{g2pcnn_forward.1} parent=11 // pred_check_branch
          %660 = sbr.rel (%p658) target = $region68
        $region67: #{g2pcnn_forward.1} parent=11 // pred_region
          _
        $region68: #{g2pcnn_forward.1} parent=11 // pred_fallthru
          _
        // Predicated region
        $region69: #{g2pcnn_forward.1} parent=11 // pred_check
          %p661 = pneg %p405
        $region70: #{g2pcnn_forward.1} parent=11 // pred_check_branch
          %663 = sbr.rel (%p661) target = $region72
        $region71: #{g2pcnn_forward.1} parent=11 // pred_region
          _
        $region72: #{g2pcnn_forward.1} parent=11 // pred_fallthru
          _
        // Predicated region
        $region73: #{g2pcnn_forward.1} parent=11 // pred_check
          %p664 = pneg %p426
        $region74: #{g2pcnn_forward.1} parent=11 // pred_check_branch
          %666 = sbr.rel (%p664) target = $region76
        $region75: #{g2pcnn_forward.1} parent=11 // pred_region
          _
        $region76: #{g2pcnn_forward.1} parent=11 // pred_fallthru
          _
        // Predicated region
        $region77: #{g2pcnn_forward.1} parent=11 // pred_check
          %p667 = pneg %p447
        $region78: #{g2pcnn_forward.1} parent=11 // pred_check_branch
          %669 = sbr.rel (%p667) target = $region80
        $region79: #{g2pcnn_forward.1} parent=11 // pred_region
          _
        $region80: #{g2pcnn_forward.1} parent=11 // pred_fallthru
          _
        // Predicated region
        $region81: #{g2pcnn_forward.1} parent=11 // pred_check
          %p670 = pneg %p468
        $region82: #{g2pcnn_forward.1} parent=11 // pred_check_branch
          %672 = sbr.rel (%p670) target = $region84
        $region83: #{g2pcnn_forward.1} parent=11 // pred_region
          _
        $region84: #{g2pcnn_forward.1} parent=11 // pred_fallthru
          _
        // Predicated region
        $region85: #{g2pcnn_forward.1} parent=11 // pred_check
          %p673 = pneg %p489
        $region86: #{g2pcnn_forward.1} parent=11 // pred_check_branch
          %675 = sbr.rel (%p673) target = $region88
        $region87: #{g2pcnn_forward.1} parent=11 // pred_region
          _
        $region88: #{g2pcnn_forward.1} parent=11 // pred_fallthru
          _
        // Predicated region
        $region89: #{g2pcnn_forward.1} parent=11 // pred_check
          %p676 = pneg %p510
        $region90: #{g2pcnn_forward.1} parent=11 // pred_check_branch
          %678 = sbr.rel (%p676) target = $region92
        $region91: #{g2pcnn_forward.1} parent=11 // pred_region
          _
        $region92: #{g2pcnn_forward.1} parent=11 // pred_fallthru
          _
        // Predicated region
        $region93: #{g2pcnn_forward.1} parent=11 // pred_check
          %p679 = pneg %p531
        $region94: #{g2pcnn_forward.1} parent=11 // pred_check_branch
          %681 = sbr.rel (%p679) target = $region96
        $region95: #{g2pcnn_forward.1} parent=11 // pred_region
          _
        $region96: #{g2pcnn_forward.1} parent=11 // pred_fallthru
          _
        // Predicated region
        $region97: #{g2pcnn_forward.1} parent=11 // pred_check
          %p682 = pneg %p552
        $region98: #{g2pcnn_forward.1} parent=11 // pred_check_branch
          %684 = sbr.rel (%p682) target = $region100
        $region99: #{g2pcnn_forward.1} parent=11 // pred_region
          _
        $region100: #{g2pcnn_forward.1} parent=11 // pred_fallthru
          _
      $region12: #{g2pcnn_forward.1} parent=5 // pred_fallthru
        _
      %p685 = scmp.lt.s32.totalorder %s38, 2
      // Predicated region
      $region101: #{g2pcnn_forward.1} parent=5 // pred_check
        %p686 = pneg %p685
      $region102: #{g2pcnn_forward.1} parent=5 // pred_check_branch
        %688 = sbr.rel (%p686) target = $region104
      $region103: #{g2pcnn_forward.1} parent=5 // pred_region
        // Predicated region
        $region105: #{g2pcnn_forward.1} parent=103 // pred_check
          %p689 = pneg %p58
        $region106: #{g2pcnn_forward.1} parent=103 // pred_check_branch
          %691 = sbr.rel (%p689) target = $region108
        $region107: #{g2pcnn_forward.1} parent=103 // pred_region
          %p692 = scmp.lt.s32.totalorder %s38, 1
          %s693 = scalar_select %p692, %s38, 1
          %s694 = smul.addr %s693, 2
          %s695 = smul.addr %s694, 8
          %s696 = scalar_lea.vmem %s0, %s695
        $region108: #{g2pcnn_forward.1} parent=103 // pred_fallthru
          _
        // Predicated region
        $region109: #{g2pcnn_forward.1} parent=103 // pred_check
          %p697 = pneg %p84
        $region110: #{g2pcnn_forward.1} parent=103 // pred_check_branch
          %699 = sbr.rel (%p697) target = $region112
        $region111: #{g2pcnn_forward.1} parent=103 // pred_region
          %p700 = scmp.lt.s32.totalorder %s38, 1
          %s701 = scalar_select %p700, %s38, 1
          %s702 = smul.addr %s701, 8
          %s703 = scalar_lea.vmem %s1, %s702
        $region112: #{g2pcnn_forward.1} parent=103 // pred_fallthru
          _
      $region104: #{g2pcnn_forward.1} parent=5 // pred_fallthru
        _
      %p704 = scmp.le.s32.totalorder 1, %s38
      %p705 = scmp.lt.s32.totalorder %s38, 3
      %p706 = pnand %p704, %p705
      %p707 = pneg %p706
      // Predicated region
      $region113: #{g2pcnn_forward.1} parent=5 // pred_check
        _
      $region114: #{g2pcnn_forward.1} parent=5 // pred_check_branch
        %709 = sbr.rel (%p706) target = $region116
      $region115: #{g2pcnn_forward.1} parent=5 // pred_region
        %s710 = ssub.s32 %s38, 1
        %p711 = scmp.lt.s32.totalorder %s43, 1
        %s712 = scalar_select %p711, %s43, 1
        %s713 = smul.addr %s712, 2
        %s714 = smul.addr %s713, 8
        %s715 = scalar_lea.vmem %s0, %s714
        %p716 = pneg %p64
        %p717 = pneg %p61
        %p718 = scmp.lt.s32.totalorder %s43, 1
        %s719 = scalar_select %p718, %s43, 1
        %s720 = smul.addr %s719, 8
        %s721 = scalar_lea.vmem %s1, %s720
        %p722 = pneg %p90
        %p723 = pneg %p87
        %p724 = pneg %p111
        %p725 = pneg %p108
        %p726 = pneg %p132
        %p727 = pneg %p129
        %p728 = pneg %p153
        %p729 = pneg %p150
        %p730 = pneg %p174
        %p731 = pneg %p171
        %p732 = pneg %p195
        %p733 = pneg %p192
        %p734 = pneg %p216
        %p735 = pneg %p213
        %p736 = pneg %p237
        %p737 = pneg %p234
        %p738 = pneg %p258
        %p739 = pneg %p255
        %p740 = pneg %p279
        %p741 = pneg %p276
        %p742 = pneg %p300
        %p743 = pneg %p297
        %p744 = pneg %p321
        %p745 = pneg %p318
        %p746 = pneg %p342
        %p747 = pneg %p339
        %p748 = pneg %p363
        %p749 = pneg %p360
        %p750 = pneg %p384
        %p751 = pneg %p381
        %p752 = pneg %p405
        %p753 = pneg %p402
        %p754 = pneg %p426
        %p755 = pneg %p423
        %p756 = pneg %p447
        %p757 = pneg %p444
        %p758 = pneg %p468
        %p759 = pneg %p465
        %p760 = pneg %p489
        %p761 = pneg %p486
        %p762 = pneg %p510
        %p763 = pneg %p507
        %p764 = pneg %p531
        %p765 = pneg %p528
        %p766 = pneg %p552
        %p767 = pneg %p549
        %p768 = pneg %p578
        %p769 = pneg %p575
        %s770 = sand.u32 %s565, 1
        %s771 = scalar_lea.sflag [#allocation3], %s770
        %s772 = sand.u32 %s565, 1
        %s773 = smul.addr %s772, 8
        %s774 = scalar_lea.vmem [#allocation2], %s773
        %p775 = pneg %p604
        %p776 = pneg %p601
        %s777 = sand.u32 %s591, 1
        %s778 = scalar_lea.sflag [#allocation5], %s777
        %s779 = sand.u32 %s591, 1
        %s780 = smul.addr %s779, 8
        %s781 = scalar_lea.vmem [#allocation4], %s780
        %p782 = scmp.lt.s32.totalorder %s43, 1
        %s783 = scalar_select %p782, %s43, 1
        %s784 = smul.addr %s783, 2
        %s785 = smul.addr %s784, 8
        %s786 = scalar_lea.vmem %s0, %s785
        %p787 = scmp.lt.s32.totalorder %s43, 1
        %s788 = scalar_select %p787, %s43, 1
        %s789 = smul.addr %s788, 8
        %s790 = scalar_lea.vmem %s1, %s789
        %v792 = vlaneseq
        %v793 = vand.u32 %v792, 127
        %v794 = vld [vmem:[%s786] sm:$0xff]
        %v795 = vld [vmem:[%s786 + $0x8] sm:$0xff]
        %796 = vset.pattern.permute.xlu0 0
        %797 = vperm.xlu0 %796, %v794
        %v798 = vpop.permute.xlu0 %797
        %799 = vset.pattern.permute.xlu0 0
        %800 = vperm.xlu0 %799, %v795
        %v801 = vpop.permute.xlu0 %800
        %vm802 = vcmp.eq.s32.totalorder %v793, %v798
        %vm803 = vcmp.eq.s32.totalorder %v793, %v801
        %v804 = vsel %vm802, 1, 0
        %v805 = vsel %vm803, 1, 0
        %v806 = vcvt.s32.f32 %v804
        %v807 = vcvt.s32.f32 %v805
        %v808 = vld [vmem:[%s2] sm:$0xff]
        %v809 = vld [vmem:[%s2 + $0x8] sm:$0xff]
        %v810 = vld [vmem:[%s2 + $0x10] sm:$0xff]
        %v811 = vld [vmem:[%s2 + $0x18] sm:$0xff]
        %v812 = vld [vmem:[%s2 + $0x20] sm:$0xff]
        %v813 = vld [vmem:[%s3] sm:$0xff]
        %v814 = vld [vmem:[%s3 + $0x8] sm:$0xff]
        %vm815 = vcmask 326656
        %v817 = vsel %vm815, %v806, 0
        %v820 = vsel %vm815, %v807, 0
        %822 = vmatprep.subr.mxu0 0.0
        %823 = vmatpush1.msra.mxu0 0.0
        %824 = vmatprep.subr.mxu0 0.0
        %825 = vmatpush1.msra.mxu0 0.0
        %826 = vmatprep.subr.mxu0 0.0
        %827 = vmatpush1.msra.mxu0 0.0
        %828 = vmatprep.subr.mxu0 0.0
        %829 = vmatpush1.msra.mxu0 0.0
        %830 = vmatprep.subr.mxu0 0.0
        %831 = vmatpush1.msra.mxu0 0.0
        %832 = vmatprep.subr.mxu0 0.0
        %833 = vmatpush1.msra.mxu0 0.0
        %834 = vmatprep.subr.mxu0 0.0
        %835 = vmatpush1.msra.mxu0 0.0
        %836 = vmatprep.subr.mxu0 0.0
        %837 = vmatpush1.msra.mxu0 0.0
        %838 = vmatprep.subr.mxu0 0.0
        %839 = vmatpush1.msra.mxu0 0.0
        %840 = vmatprep.subr.mxu0 0.0
        %841 = vmatpush1.msra.mxu0 0.0
        %842 = vmatprep.subr.mxu0 0.0
        %843 = vmatpush1.msra.mxu0 0.0
        %844 = vmatprep.subr.mxu0 0.0
        %845 = vmatpush1.msra.mxu0 %v812
        %846 = vmatprep.subr.mxu0 0.0
        %847 = vmatpush1.msra.mxu0 %v811
        %848 = vmatprep.subr.mxu0 0.0
        %849 = vmatpush1.msra.mxu0 %v810
        %850 = vmatprep.subr.mxu0 0.0
        %851 = vmatpush1.msra.mxu0 %v809
        %852 = vmatprep.subr.mxu0 0.0
        %853 = vmatpush1.msra.mxu0 %v808
        %854 = vmatprep.subr.mxu0 0.0
        %855 = vmatpush2.msra.mxu0 0.0
        %856 = vmatprep.subr.mxu0 0.0
        %857 = vmatpush2.msra.mxu0 0.0
        %858 = vmatprep.subr.mxu0 0.0
        %859 = vmatpush2.msra.mxu0 0.0
        %860 = vmatprep.subr.mxu0 0.0
        %861 = vmatpush2.msra.mxu0 0.0
        %862 = vmatprep.subr.mxu0 0.0
        %863 = vmatpush2.msra.mxu0 0.0
        %864 = vmatprep.subr.mxu0 0.0
        %865 = vmatpush2.msra.mxu0 0.0
        %866 = vmatprep.subr.mxu0 0.0
        %867 = vmatpush2.msra.mxu0 0.0
        %868 = vmatprep.subr.mxu0 0.0
        %869 = vmatpush2.msra.mxu0 0.0
        %870 = vmatprep.subr.mxu0 0.0
        %871 = vmatpush2.msra.mxu0 0.0
        %872 = vmatprep.subr.mxu0 0.0
        %873 = vmatpush2.msra.mxu0 0.0
        %874 = vmatprep.subr.mxu0 0.0
        %875 = vmatpush2.msra.mxu0 0.0
        %876 = vmatprep.subr.mxu0 0.0
        %877 = vmatpush2.msra.mxu0 0.0
        %878 = vmatprep.subr.mxu0 0.0
        %879 = vmatpush2.msra.mxu0 0.0
        %880 = vmatprep.subr.mxu0 0.0
        %881 = vmatpush2.msra.mxu0 0.0
        %882 = vmatprep.subr.mxu0 0.0
        %883 = vmatpush2.msra.mxu0 0.0
        %884 = vmatprep.subr.mxu0 0.0
        %885 = vmatpush2.msra.mxu0 0.0
        %886 = vmatprep.mubr.f32.mxu0 0.0
        %887 = vmatmul.mubr.f32.gmra.mxu0 %v817
        %v888 = vpop.f32.mrf.mxu0
        %v889 = vadd.f32 %v813, %v888
        %v890 = vpop.f32.mrf.mxu0
        %891 = vmatprep.mubr.f32.mxu0 0.0
        %892 = vmatmul.mubr.f32.gmra.mxu0 %v820
        %v893 = vpop.f32.mrf.mxu0
        %v894 = vadd.f32 %v814, %v893
        %v895 = vpop.f32.mrf.mxu0
        %896 = vdwg.mxu0
        %v897 = vpack.c.bf16 %v894, %v889
        %v898 = vld [vmem:[%s4] sm:$0xf]
        %v899 = vld [vmem:[%s4 + $0x4] sm:$0xf]
        %v900 = vld [vmem:[%s4 + $0x8] sm:$0xf]
        %v901 = vld [vmem:[%s4 + $0xc] sm:$0xf]
        %v902 = vld [vmem:[%s5] sm:$0x1]
        %v904 = vlaneseq
        %v905 = vshrl.u32 %v904, 7
        %v906 = vsub.s32 0, %v905
        %v907 = vrot.slane %v902, %v906
        %v913 = vunpack.c.l.b16 %v898
        %v914 = vunpack.c.l.b16 %v899
        %v915 = vunpack.c.l.b16 %v900
        %v916 = vunpack.c.l.b16 %v901
        %v917 = vpack.c.b16 %v914, %v913
        %v918 = vpack.c.b16 %v916, %v915
        %vm921 = vcmask 261120
        %v923 = vsel %vm921, %v897, 0
        %925 = vmatprep.subr.bf16.mxu0 0
        %926 = vmatpush1.bf16.msra.mxu0 0
        %927 = vmatprep.subr.bf16.mxu0 0
        %928 = vmatpush1.bf16.msra.mxu0 0
        %929 = vmatprep.subr.bf16.mxu0 0
        %930 = vmatpush1.bf16.msra.mxu0 0
        %931 = vmatprep.subr.bf16.mxu0 0
        %932 = vmatpush1.bf16.msra.mxu0 0
        %933 = vmatprep.subr.bf16.mxu0 0
        %934 = vmatpush1.bf16.msra.mxu0 0
        %935 = vmatprep.subr.bf16.mxu0 0
        %936 = vmatpush1.bf16.msra.mxu0 0
        %937 = vmatprep.subr.bf16.mxu0 0
        %938 = vmatpush1.bf16.msra.mxu0 %v918
        %939 = vmatprep.subr.bf16.mxu0 0
        %940 = vmatpush1.bf16.msra.mxu0 %v917
        %941 = vmatprep.subr.bf16.mxu0 0
        %942 = vmatpush2.bf16.msra.mxu0 0
        %943 = vmatprep.subr.bf16.mxu0 0
        %944 = vmatpush2.bf16.msra.mxu0 0
        %945 = vmatprep.subr.bf16.mxu0 0
        %946 = vmatpush2.bf16.msra.mxu0 0
        %947 = vmatprep.subr.bf16.mxu0 0
        %948 = vmatpush2.bf16.msra.mxu0 0
        %949 = vmatprep.subr.bf16.mxu0 0
        %950 = vmatpush2.bf16.msra.mxu0 0
        %951 = vmatprep.subr.bf16.mxu0 0
        %952 = vmatpush2.bf16.msra.mxu0 0
        %953 = vmatprep.subr.bf16.mxu0 0
        %954 = vmatpush2.bf16.msra.mxu0 0
        %955 = vmatprep.subr.bf16.mxu0 0
        %956 = vmatpush2.bf16.msra.mxu0 0
        %957 = vmatprep.mubr.bf16.mxu0 0
        %958 = vmatmul.mubr.bf16.gmra.mxu0 %v923
        %v959 = vpop.f32.mrf.mxu0
        %v960 = vadd.f32 %v907, %v959
        %v961 = vpop.f32.mrf.mxu0
        %v962 = vpop.f32.mrf.mxu0
        %v963 = vadd.f32 %v907, %v962
        %v964 = vpop.f32.mrf.mxu0
        %965 = vdwg.mxu0
        %v966 = vlaneseq
        %v967 = vshrl.u32 %v966, 7
        %v968 = vadd.s32 %v967, 8
        %v969 = vld [vmem:[%s7] sm:$0x1]
        %v971 = vlaneseq
        %v972 = vshrl.u32 %v971, 7
        %v973 = vsub.s32 0, %v972
        %v974 = vrot.slane %v969, %v973
        %v976 = vadd.f32 %v974, 0.0
        %v977 = vrot.slane %v960, 7
        %v978 = vrot.slane %v963, 7
        %vm979 = vcmp.lt.s32.totalorder %v967, 1
        %v980 = vsel %vm979, %v977, %v978
        %v981 = vsel %vm979, %v978, %v977
        %vm982 = vcmp.ge.s32.totalorder %v967, 1
        %vm983 = vcmp.ge.s32.totalorder %v968, 1
        %vm984 = vcmp.lt.s32.totalorder %v967, 17
        %vm985 = vcmp.lt.s32.totalorder %v968, 17
        %vm986 = vmand %vm982, %vm984
        %vm987 = vmand %vm983, %vm985
        %v988 = vsel %vm986, 1, 0
        %v989 = vsel %vm987, 1, 0
        %vm990 = vcmp.eq.s32.totalorder %v988, 1
        %vm991 = vcmp.eq.s32.totalorder %v989, 1
        %v992 = vsel %vm990, %v981, 0.0
        %v993 = vsel %vm991, %v980, 0.0
        %v994 = vpack.c.bf16 %v993, %v992
        %v995 = vld [vmem:[%s6] sm:$0xf]
        %v996 = vld [vmem:[%s6 + $0x4] sm:$0xf]
        %v997 = vld [vmem:[%s6 + $0x8] sm:$0xf]
        %v998 = vld [vmem:[%s6 + $0xc] sm:$0xf]
        %v1003 = vunpack.c.l.b16 %v995
        %v1004 = vunpack.c.l.b16 %v996
        %v1005 = vunpack.c.l.b16 %v997
        %v1006 = vunpack.c.l.b16 %v998
        %v1007 = vpack.c.b16 %v1004, %v1003
        %v1008 = vpack.c.b16 %v1006, %v1005
        %v1012 = vsel %vm921, %v994, 0
        %1014 = vmatprep.subr.bf16.mxu0 0
        %1015 = vmatpush1.bf16.msra.mxu0 0
        %1016 = vmatprep.subr.bf16.mxu0 0
        %1017 = vmatpush1.bf16.msra.mxu0 0
        %1018 = vmatprep.subr.bf16.mxu0 0
        %1019 = vmatpush1.bf16.msra.mxu0 0
        %1020 = vmatprep.subr.bf16.mxu0 0
        %1021 = vmatpush1.bf16.msra.mxu0 0
        %1022 = vmatprep.subr.bf16.mxu0 0
        %1023 = vmatpush1.bf16.msra.mxu0 0
        %1024 = vmatprep.subr.bf16.mxu0 0
        %1025 = vmatpush1.bf16.msra.mxu0 0
        %1026 = vmatprep.subr.bf16.mxu0 0
        %1027 = vmatpush1.bf16.msra.mxu0 %v1008
        %1028 = vmatprep.subr.bf16.mxu0 0
        %1029 = vmatpush1.bf16.msra.mxu0 %v1007
        %1030 = vmatprep.subr.bf16.mxu0 0
        %1031 = vmatpush2.bf16.msra.mxu0 0
        %1032 = vmatprep.subr.bf16.mxu0 0
        %1033 = vmatpush2.bf16.msra.mxu0 0
        %1034 = vmatprep.subr.bf16.mxu0 0
        %1035 = vmatpush2.bf16.msra.mxu0 0
        %1036 = vmatprep.subr.bf16.mxu0 0
        %1037 = vmatpush2.bf16.msra.mxu0 0
        %1038 = vmatprep.subr.bf16.mxu0 0
        %1039 = vmatpush2.bf16.msra.mxu0 0
        %1040 = vmatprep.subr.bf16.mxu0 0
        %1041 = vmatpush2.bf16.msra.mxu0 0
        %1042 = vmatprep.subr.bf16.mxu0 0
        %1043 = vmatpush2.bf16.msra.mxu0 0
        %1044 = vmatprep.subr.bf16.mxu0 0
        %1045 = vmatpush2.bf16.msra.mxu0 0
        %1046 = vmatprep.mubr.bf16.mxu0 0
        %1047 = vmatmul.mubr.bf16.gmra.mxu0 %v1012
        %v1048 = vpop.f32.mrf.mxu0
        %v1049 = vadd.f32 0.0, %v1048
        %v1050 = vpop.f32.mrf.mxu0
        %v1051 = vpop.f32.mrf.mxu0
        %v1052 = vadd.f32 0.0, %v1051
        %v1053 = vpop.f32.mrf.mxu0
        %1054 = vdwg.mxu0
        %v1055 = vadd.f32 %v976, %v1049
        %v1056 = vadd.f32 %v976, %v1052
        %v1057 = vpack.c.bf16 %v963, %v960
        %s1058 = scalar_lea.vmem %s6, 16
        %v1059 = vld [vmem:[%s1058] sm:$0xf]
        %v1060 = vld [vmem:[%s1058 + $0x4] sm:$0xf]
        %v1061 = vld [vmem:[%s1058 + $0x8] sm:$0xf]
        %v1062 = vld [vmem:[%s1058 + $0xc] sm:$0xf]
        %v1067 = vunpack.c.l.b16 %v1059
        %v1068 = vunpack.c.l.b16 %v1060
        %v1069 = vunpack.c.l.b16 %v1061
        %v1070 = vunpack.c.l.b16 %v1062
        %v1071 = vpack.c.b16 %v1068, %v1067
        %v1072 = vpack.c.b16 %v1070, %v1069
        %v1076 = vsel %vm921, %v1057, 0
        %1078 = vmatprep.subr.bf16.mxu0 0
        %1079 = vmatpush1.bf16.msra.mxu0 0
        %1080 = vmatprep.subr.bf16.mxu0 0
        %1081 = vmatpush1.bf16.msra.mxu0 0
        %1082 = vmatprep.subr.bf16.mxu0 0
        %1083 = vmatpush1.bf16.msra.mxu0 0
        %1084 = vmatprep.subr.bf16.mxu0 0
        %1085 = vmatpush1.bf16.msra.mxu0 0
        %1086 = vmatprep.subr.bf16.mxu0 0
        %1087 = vmatpush1.bf16.msra.mxu0 0
        %1088 = vmatprep.subr.bf16.mxu0 0
        %1089 = vmatpush1.bf16.msra.mxu0 0
        %1090 = vmatprep.subr.bf16.mxu0 0
        %1091 = vmatpush1.bf16.msra.mxu0 %v1072
        %1092 = vmatprep.subr.bf16.mxu0 0
        %1093 = vmatpush1.bf16.msra.mxu0 %v1071
        %1094 = vmatprep.subr.bf16.mxu0 0
        %1095 = vmatpush2.bf16.msra.mxu0 0
        %1096 = vmatprep.subr.bf16.mxu0 0
        %1097 = vmatpush2.bf16.msra.mxu0 0
        %1098 = vmatprep.subr.bf16.mxu0 0
        %1099 = vmatpush2.bf16.msra.mxu0 0
        %1100 = vmatprep.subr.bf16.mxu0 0
        %1101 = vmatpush2.bf16.msra.mxu0 0
        %1102 = vmatprep.subr.bf16.mxu0 0
        %1103 = vmatpush2.bf16.msra.mxu0 0
        %1104 = vmatprep.subr.bf16.mxu0 0
        %1105 = vmatpush2.bf16.msra.mxu0 0
        %1106 = vmatprep.subr.bf16.mxu0 0
        %1107 = vmatpush2.bf16.msra.mxu0 0
        %1108 = vmatprep.subr.bf16.mxu0 0
        %1109 = vmatpush2.bf16.msra.mxu0 0
        %1110 = vmatprep.mubr.bf16.mxu0 0
        %1111 = vmatmul.mubr.bf16.gmra.mxu0 %v1076
        %v1112 = vpop.f32.mrf.mxu0
        %v1113 = vadd.f32 0.0, %v1112
        %v1114 = vpop.f32.mrf.mxu0
        %v1115 = vpop.f32.mrf.mxu0
        %v1116 = vadd.f32 0.0, %v1115
        %v1117 = vpop.f32.mrf.mxu0
        %1118 = vdwg.mxu0
        %v1119 = vadd.f32 %v1055, %v1113
        %v1120 = vadd.f32 %v1056, %v1116
        %v1121 = vrot.slane %v960, 1
        %v1122 = vrot.slane %v963, 1
        %vm1123 = vcmp.lt.s32.totalorder %v967, 7
        %v1124 = vsel %vm1123, %v1121, %v1122
        %v1125 = vsel %vm1123, %v1122, %v1121
        %vm1126 = vcmp.ge.s32.totalorder %v967, 4294967295
        %vm1127 = vcmp.ge.s32.totalorder %v968, 4294967295
        %vm1128 = vcmp.lt.s32.totalorder %v967, 15
        %vm1129 = vcmp.lt.s32.totalorder %v968, 15
        %vm1130 = vmand %vm1126, %vm1128
        %vm1131 = vmand %vm1127, %vm1129
        %v1132 = vsel %vm1130, 1, 0
        %v1133 = vsel %vm1131, 1, 0
        %vm1134 = vcmp.eq.s32.totalorder %v1132, 1
        %vm1135 = vcmp.eq.s32.totalorder %v1133, 1
        %v1136 = vsel %vm1134, %v1124, 0.0
        %v1137 = vsel %vm1135, %v1125, 0.0
        %v1138 = vpack.c.bf16 %v1137, %v1136
        %s1139 = scalar_lea.vmem %s6, 32
        %v1140 = vld [vmem:[%s1139] sm:$0xf]
        %v1141 = vld [vmem:[%s1139 + $0x4] sm:$0xf]
        %v1142 = vld [vmem:[%s1139 + $0x8] sm:$0xf]
        %v1143 = vld [vmem:[%s1139 + $0xc] sm:$0xf]
        %v1148 = vunpack.c.l.b16 %v1140
        %v1149 = vunpack.c.l.b16 %v1141
        %v1150 = vunpack.c.l.b16 %v1142
        %v1151 = vunpack.c.l.b16 %v1143
        %v1152 = vpack.c.b16 %v1149, %v1148
        %v1153 = vpack.c.b16 %v1151, %v1150
        %v1157 = vsel %vm921, %v1138, 0
        %1159 = vmatprep.subr.bf16.mxu0 0
        %1160 = vmatpush1.bf16.msra.mxu0 0
        %1161 = vmatprep.subr.bf16.mxu0 0
        %1162 = vmatpush1.bf16.msra.mxu0 0
        %1163 = vmatprep.subr.bf16.mxu0 0
        %1164 = vmatpush1.bf16.msra.mxu0 0
        %1165 = vmatprep.subr.bf16.mxu0 0
        %1166 = vmatpush1.bf16.msra.mxu0 0
        %1167 = vmatprep.subr.bf16.mxu0 0
        %1168 = vmatpush1.bf16.msra.mxu0 0
        %1169 = vmatprep.subr.bf16.mxu0 0
        %1170 = vmatpush1.bf16.msra.mxu0 0
        %1171 = vmatprep.subr.bf16.mxu0 0
        %1172 = vmatpush1.bf16.msra.mxu0 %v1153
        %1173 = vmatprep.subr.bf16.mxu0 0
        %1174 = vmatpush1.bf16.msra.mxu0 %v1152
        %1175 = vmatprep.subr.bf16.mxu0 0
        %1176 = vmatpush2.bf16.msra.mxu0 0
        %1177 = vmatprep.subr.bf16.mxu0 0
        %1178 = vmatpush2.bf16.msra.mxu0 0
        %1179 = vmatprep.subr.bf16.mxu0 0
        %1180 = vmatpush2.bf16.msra.mxu0 0
        %1181 = vmatprep.subr.bf16.mxu0 0
        %1182 = vmatpush2.bf16.msra.mxu0 0
        %1183 = vmatprep.subr.bf16.mxu0 0
        %1184 = vmatpush2.bf16.msra.mxu0 0
        %1185 = vmatprep.subr.bf16.mxu0 0
        %1186 = vmatpush2.bf16.msra.mxu0 0
        %1187 = vmatprep.subr.bf16.mxu0 0
        %1188 = vmatpush2.bf16.msra.mxu0 0
        %1189 = vmatprep.subr.bf16.mxu0 0
        %1190 = vmatpush2.bf16.msra.mxu0 0
        %1191 = vmatprep.mubr.bf16.mxu0 0
        %1192 = vmatmul.mubr.bf16.gmra.mxu0 %v1157
        %v1193 = vpop.f32.mrf.mxu0
        %v1194 = vadd.f32 0.0, %v1193
        %v1195 = vpop.f32.mrf.mxu0
        %v1196 = vpop.f32.mrf.mxu0
        %v1197 = vadd.f32 0.0, %v1196
        %v1198 = vpop.f32.mrf.mxu0
        %1199 = vdwg.mxu0
        %v1200 = vadd.f32 %v1119, %v1194
        %v1201 = vadd.f32 %v1120, %v1197
        %v1202 = vxor.u32 %v1200, 2147483648
        %v1203 = vxor.u32 %v1201, 2147483648
        %v1204 = vmul.f32 %v1202, 1.442695
        %v1205 = vpow.pop %v1204
        %v1206 = vmul.f32 %v1203, 1.442695
        %v1207 = vpow.pop %v1206
        %v1208 = vadd.f32 %v1205, 1.0
        %v1209 = vadd.f32 %v1207, 1.0
        %v1210 = vrcp.pop %v1208
        %v1211 = vmul.f32 1.0, %v1210
        %v1212 = vrcp.pop %v1209
        %v1213 = vmul.f32 1.0, %v1212
        %1216 = vrot.lane.b32.xlu0 %v1211, 96
        %v1217 = vpop.permute.xlu0 %1216
        %1218 = vrot.lane.b32.xlu0 %v1213, 96
        %v1219 = vpop.permute.xlu0 %1218
        %v1222 = vmul.f32 %v1200, %v1217
        %v1223 = vmul.f32 %v1201, %v1219
        %v1224 = vadd.f32 %v1222, %v960
        %v1225 = vadd.f32 %v1223, %v963
        %v1226 = vmul.f32 %v1224, 0.70710677
        %v1227 = vmul.f32 %v1225, 0.70710677
        %s1228 = scalar_lea.vmem %s7, 1
        %v1229 = vld [vmem:[%s1228] sm:$0x1]
        %v1231 = vlaneseq
        %v1232 = vshrl.u32 %v1231, 7
        %v1233 = vsub.s32 0, %v1232
        %v1234 = vrot.slane %v1229, %v1233
        %v1236 = vadd.f32 %v1234, 0.0
        %v1237 = vrot.slane %v1226, 7
        %v1238 = vrot.slane %v1227, 7
        %v1239 = vsel %vm979, %v1237, %v1238
        %v1240 = vsel %vm979, %v1238, %v1237
        %v1241 = vsel %vm990, %v1240, 0.0
        %v1242 = vsel %vm991, %v1239, 0.0
        %v1243 = vpack.c.bf16 %v1242, %v1241
        %s1244 = scalar_lea.vmem %s6, 48
        %v1245 = vld [vmem:[%s1244] sm:$0xf]
        %v1246 = vld [vmem:[%s1244 + $0x4] sm:$0xf]
        %v1247 = vld [vmem:[%s1244 + $0x8] sm:$0xf]
        %v1248 = vld [vmem:[%s1244 + $0xc] sm:$0xf]
        %v1253 = vunpack.c.l.b16 %v1245
        %v1254 = vunpack.c.l.b16 %v1246
        %v1255 = vunpack.c.l.b16 %v1247
        %v1256 = vunpack.c.l.b16 %v1248
        %v1257 = vpack.c.b16 %v1254, %v1253
        %v1258 = vpack.c.b16 %v1256, %v1255
        %v1262 = vsel %vm921, %v1243, 0
        %1264 = vmatprep.subr.bf16.mxu0 0
        %1265 = vmatpush1.bf16.msra.mxu0 0
        %1266 = vmatprep.subr.bf16.mxu0 0
        %1267 = vmatpush1.bf16.msra.mxu0 0
        %1268 = vmatprep.subr.bf16.mxu0 0
        %1269 = vmatpush1.bf16.msra.mxu0 0
        %1270 = vmatprep.subr.bf16.mxu0 0
        %1271 = vmatpush1.bf16.msra.mxu0 0
        %1272 = vmatprep.subr.bf16.mxu0 0
        %1273 = vmatpush1.bf16.msra.mxu0 0
        %1274 = vmatprep.subr.bf16.mxu0 0
        %1275 = vmatpush1.bf16.msra.mxu0 0
        %1276 = vmatprep.subr.bf16.mxu0 0
        %1277 = vmatpush1.bf16.msra.mxu0 %v1258
        %1278 = vmatprep.subr.bf16.mxu0 0
        %1279 = vmatpush1.bf16.msra.mxu0 %v1257
        %1280 = vmatprep.subr.bf16.mxu0 0
        %1281 = vmatpush2.bf16.msra.mxu0 0
        %1282 = vmatprep.subr.bf16.mxu0 0
        %1283 = vmatpush2.bf16.msra.mxu0 0
        %1284 = vmatprep.subr.bf16.mxu0 0
        %1285 = vmatpush2.bf16.msra.mxu0 0
        %1286 = vmatprep.subr.bf16.mxu0 0
        %1287 = vmatpush2.bf16.msra.mxu0 0
        %1288 = vmatprep.subr.bf16.mxu0 0
        %1289 = vmatpush2.bf16.msra.mxu0 0
        %1290 = vmatprep.subr.bf16.mxu0 0
        %1291 = vmatpush2.bf16.msra.mxu0 0
        %1292 = vmatprep.subr.bf16.mxu0 0
        %1293 = vmatpush2.bf16.msra.mxu0 0
        %1294 = vmatprep.subr.bf16.mxu0 0
        %1295 = vmatpush2.bf16.msra.mxu0 0
        %1296 = vmatprep.mubr.bf16.mxu0 0
        %1297 = vmatmul.mubr.bf16.gmra.mxu0 %v1262
        %v1298 = vpop.f32.mrf.mxu0
        %v1299 = vadd.f32 0.0, %v1298
        %v1300 = vpop.f32.mrf.mxu0
        %v1301 = vpop.f32.mrf.mxu0
        %v1302 = vadd.f32 0.0, %v1301
        %v1303 = vpop.f32.mrf.mxu0
        %1304 = vdwg.mxu0
        %v1305 = vadd.f32 %v1236, %v1299
        %v1306 = vadd.f32 %v1236, %v1302
        %v1307 = vpack.c.bf16 %v1227, %v1226
        %s1308 = scalar_lea.vmem %s6, 64
        %v1309 = vld [vmem:[%s1308] sm:$0xf]
        %v1310 = vld [vmem:[%s1308 + $0x4] sm:$0xf]
        %v1311 = vld [vmem:[%s1308 + $0x8] sm:$0xf]
        %v1312 = vld [vmem:[%s1308 + $0xc] sm:$0xf]
        %v1317 = vunpack.c.l.b16 %v1309
        %v1318 = vunpack.c.l.b16 %v1310
        %v1319 = vunpack.c.l.b16 %v1311
        %v1320 = vunpack.c.l.b16 %v1312
        %v1321 = vpack.c.b16 %v1318, %v1317
        %v1322 = vpack.c.b16 %v1320, %v1319
        %v1326 = vsel %vm921, %v1307, 0
        %1328 = vmatprep.subr.bf16.mxu0 0
        %1329 = vmatpush1.bf16.msra.mxu0 0
        %1330 = vmatprep.subr.bf16.mxu0 0
        %1331 = vmatpush1.bf16.msra.mxu0 0
        %1332 = vmatprep.subr.bf16.mxu0 0
        %1333 = vmatpush1.bf16.msra.mxu0 0
        %1334 = vmatprep.subr.bf16.mxu0 0
        %1335 = vmatpush1.bf16.msra.mxu0 0
        %1336 = vmatprep.subr.bf16.mxu0 0
        %1337 = vmatpush1.bf16.msra.mxu0 0
        %1338 = vmatprep.subr.bf16.mxu0 0
        %1339 = vmatpush1.bf16.msra.mxu0 0
        %1340 = vmatprep.subr.bf16.mxu0 0
        %1341 = vmatpush1.bf16.msra.mxu0 %v1322
        %1342 = vmatprep.subr.bf16.mxu0 0
        %1343 = vmatpush1.bf16.msra.mxu0 %v1321
        %1344 = vmatprep.subr.bf16.mxu0 0
        %1345 = vmatpush2.bf16.msra.mxu0 0
        %1346 = vmatprep.subr.bf16.mxu0 0
        %1347 = vmatpush2.bf16.msra.mxu0 0
        %1348 = vmatprep.subr.bf16.mxu0 0
        %1349 = vmatpush2.bf16.msra.mxu0 0
        %1350 = vmatprep.subr.bf16.mxu0 0
        %1351 = vmatpush2.bf16.msra.mxu0 0
        %1352 = vmatprep.subr.bf16.mxu0 0
        %1353 = vmatpush2.bf16.msra.mxu0 0
        %1354 = vmatprep.subr.bf16.mxu0 0
        %1355 = vmatpush2.bf16.msra.mxu0 0
        %1356 = vmatprep.subr.bf16.mxu0 0
        %1357 = vmatpush2.bf16.msra.mxu0 0
        %1358 = vmatprep.subr.bf16.mxu0 0
        %1359 = vmatpush2.bf16.msra.mxu0 0
        %1360 = vmatprep.mubr.bf16.mxu0 0
        %1361 = vmatmul.mubr.bf16.gmra.mxu0 %v1326
        %v1362 = vpop.f32.mrf.mxu0
        %v1363 = vadd.f32 0.0, %v1362
        %v1364 = vpop.f32.mrf.mxu0
        %v1365 = vpop.f32.mrf.mxu0
        %v1366 = vadd.f32 0.0, %v1365
        %v1367 = vpop.f32.mrf.mxu0
        %1368 = vdwg.mxu0
        %v1369 = vadd.f32 %v1305, %v1363
        %v1370 = vadd.f32 %v1306, %v1366
        %v1371 = vrot.slane %v1226, 1
        %v1372 = vrot.slane %v1227, 1
        %v1373 = vsel %vm1123, %v1371, %v1372
        %v1374 = vsel %vm1123, %v1372, %v1371
        %v1375 = vsel %vm1134, %v1373, 0.0
        %v1376 = vsel %vm1135, %v1374, 0.0
        %v1377 = vpack.c.bf16 %v1376, %v1375
        %s1378 = scalar_lea.vmem %s6, 80
        %v1379 = vld [vmem:[%s1378] sm:$0xf]
        %v1380 = vld [vmem:[%s1378 + $0x4] sm:$0xf]
        %v1381 = vld [vmem:[%s1378 + $0x8] sm:$0xf]
        %v1382 = vld [vmem:[%s1378 + $0xc] sm:$0xf]
        %v1387 = vunpack.c.l.b16 %v1379
        %v1388 = vunpack.c.l.b16 %v1380
        %v1389 = vunpack.c.l.b16 %v1381
        %v1390 = vunpack.c.l.b16 %v1382
        %v1391 = vpack.c.b16 %v1388, %v1387
        %v1392 = vpack.c.b16 %v1390, %v1389
        %v1396 = vsel %vm921, %v1377, 0
        %1398 = vmatprep.subr.bf16.mxu0 0
        %1399 = vmatpush1.bf16.msra.mxu0 0
        %1400 = vmatprep.subr.bf16.mxu0 0
        %1401 = vmatpush1.bf16.msra.mxu0 0
        %1402 = vmatprep.subr.bf16.mxu0 0
        %1403 = vmatpush1.bf16.msra.mxu0 0
        %1404 = vmatprep.subr.bf16.mxu0 0
        %1405 = vmatpush1.bf16.msra.mxu0 0
        %1406 = vmatprep.subr.bf16.mxu0 0
        %1407 = vmatpush1.bf16.msra.mxu0 0
        %1408 = vmatprep.subr.bf16.mxu0 0
        %1409 = vmatpush1.bf16.msra.mxu0 0
        %1410 = vmatprep.subr.bf16.mxu0 0
        %1411 = vmatpush1.bf16.msra.mxu0 %v1392
        %1412 = vmatprep.subr.bf16.mxu0 0
        %1413 = vmatpush1.bf16.msra.mxu0 %v1391
        %1414 = vmatprep.subr.bf16.mxu0 0
        %1415 = vmatpush2.bf16.msra.mxu0 0
        %1416 = vmatprep.subr.bf16.mxu0 0
        %1417 = vmatpush2.bf16.msra.mxu0 0
        %1418 = vmatprep.subr.bf16.mxu0 0
        %1419 = vmatpush2.bf16.msra.mxu0 0
        %1420 = vmatprep.subr.bf16.mxu0 0
        %1421 = vmatpush2.bf16.msra.mxu0 0
        %1422 = vmatprep.subr.bf16.mxu0 0
        %1423 = vmatpush2.bf16.msra.mxu0 0
        %1424 = vmatprep.subr.bf16.mxu0 0
        %1425 = vmatpush2.bf16.msra.mxu0 0
        %1426 = vmatprep.subr.bf16.mxu0 0
        %1427 = vmatpush2.bf16.msra.mxu0 0
        %1428 = vmatprep.subr.bf16.mxu0 0
        %1429 = vmatpush2.bf16.msra.mxu0 0
        %1430 = vmatprep.mubr.bf16.mxu0 0
        %1431 = vmatmul.mubr.bf16.gmra.mxu0 %v1396
        %v1432 = vpop.f32.mrf.mxu0
        %v1433 = vadd.f32 0.0, %v1432
        %v1434 = vpop.f32.mrf.mxu0
        %v1435 = vpop.f32.mrf.mxu0
        %v1436 = vadd.f32 0.0, %v1435
        %v1437 = vpop.f32.mrf.mxu0
        %1438 = vdwg.mxu0
        %v1439 = vadd.f32 %v1369, %v1433
        %v1440 = vadd.f32 %v1370, %v1436
        %v1441 = vxor.u32 %v1439, 2147483648
        %v1442 = vxor.u32 %v1440, 2147483648
        %v1443 = vmul.f32 %v1441, 1.442695
        %v1444 = vpow.pop %v1443
        %v1445 = vmul.f32 %v1442, 1.442695
        %v1446 = vpow.pop %v1445
        %v1447 = vadd.f32 %v1444, 1.0
        %v1448 = vadd.f32 %v1446, 1.0
        %v1449 = vrcp.pop %v1447
        %v1450 = vmul.f32 1.0, %v1449
        %v1451 = vrcp.pop %v1448
        %v1452 = vmul.f32 1.0, %v1451
        %1455 = vrot.lane.b32.xlu0 %v1450, 96
        %v1456 = vpop.permute.xlu0 %1455
        %1457 = vrot.lane.b32.xlu0 %v1452, 96
        %v1458 = vpop.permute.xlu0 %1457
        %v1461 = vmul.f32 %v1439, %v1456
        %v1462 = vmul.f32 %v1440, %v1458
        %v1463 = vadd.f32 %v1461, %v1226
        %v1464 = vadd.f32 %v1462, %v1227
        %v1465 = vmul.f32 %v1463, 0.70710677
        %v1466 = vmul.f32 %v1464, 0.70710677
        %v1467 = vpack.c.bf16 %v1466, %v1465
        %v1468 = vld [vmem:[%s8] sm:$0xf]
        %v1469 = vld [vmem:[%s8 + $0x4] sm:$0xf]
        %v1470 = vld [vmem:[%s8 + $0x8] sm:$0xf]
        %v1471 = vld [vmem:[%s8 + $0xc] sm:$0xf]
        %v1472 = vld [vmem:[%s9] sm:$0x1]
        %v1474 = vlaneseq
        %v1475 = vshrl.u32 %v1474, 7
        %v1476 = vsub.s32 0, %v1475
        %v1477 = vrot.slane %v1472, %v1476
        %v1483 = vunpack.c.l.b16 %v1468
        %v1484 = vunpack.c.l.b16 %v1469
        %v1485 = vunpack.c.l.b16 %v1470
        %v1486 = vunpack.c.l.b16 %v1471
        %v1487 = vpack.c.b16 %v1484, %v1483
        %v1488 = vpack.c.b16 %v1486, %v1485
        %v1492 = vsel %vm921, %v1467, 0
        %1494 = vmatprep.subr.bf16.mxu0 0
        %1495 = vmatpush1.bf16.msra.mxu0 0
        %1496 = vmatprep.subr.bf16.mxu0 0
        %1497 = vmatpush1.bf16.msra.mxu0 0
        %1498 = vmatprep.subr.bf16.mxu0 0
        %1499 = vmatpush1.bf16.msra.mxu0 0
        %1500 = vmatprep.subr.bf16.mxu0 0
        %1501 = vmatpush1.bf16.msra.mxu0 0
        %1502 = vmatprep.subr.bf16.mxu0 0
        %1503 = vmatpush1.bf16.msra.mxu0 0
        %1504 = vmatprep.subr.bf16.mxu0 0
        %1505 = vmatpush1.bf16.msra.mxu0 0
        %1506 = vmatprep.subr.bf16.mxu0 0
        %1507 = vmatpush1.bf16.msra.mxu0 %v1488
        %1508 = vmatprep.subr.bf16.mxu0 0
        %1509 = vmatpush1.bf16.msra.mxu0 %v1487
        %1510 = vmatprep.subr.bf16.mxu0 0
        %1511 = vmatpush2.bf16.msra.mxu0 0
        %1512 = vmatprep.subr.bf16.mxu0 0
        %1513 = vmatpush2.bf16.msra.mxu0 0
        %1514 = vmatprep.subr.bf16.mxu0 0
        %1515 = vmatpush2.bf16.msra.mxu0 0
        %1516 = vmatprep.subr.bf16.mxu0 0
        %1517 = vmatpush2.bf16.msra.mxu0 0
        %1518 = vmatprep.subr.bf16.mxu0 0
        %1519 = vmatpush2.bf16.msra.mxu0 0
        %1520 = vmatprep.subr.bf16.mxu0 0
        %1521 = vmatpush2.bf16.msra.mxu0 0
        %1522 = vmatprep.subr.bf16.mxu0 0
        %1523 = vmatpush2.bf16.msra.mxu0 0
        %1524 = vmatprep.subr.bf16.mxu0 0
        %1525 = vmatpush2.bf16.msra.mxu0 0
        %1526 = vmatprep.mubr.bf16.mxu0 0
        %1527 = vmatmul.mubr.bf16.gmra.mxu0 %v1492
        %v1528 = vpop.f32.mrf.mxu0
        %v1529 = vadd.f32 %v1477, %v1528
        %v1530 = vpop.f32.mrf.mxu0
        %v1531 = vpop.f32.mrf.mxu0
        %v1532 = vadd.f32 %v1477, %v1531
        %v1533 = vpop.f32.mrf.mxu0
        %1534 = vdwg.mxu0
        %v1535 = vadd.f32 %v1529, %v889
        %v1536 = vadd.f32 %v1532, %v894
        %v1537 = vmul.f32 %v1535, 0.70710677
        %v1538 = vmul.f32 %v1536, 0.70710677
        %v1539 = vpack.c.bf16 %v1532, %v1529
        %v1540 = vpack.c.bf16 %v1538, %v1537
        %v1541 = vld [vmem:[%s790] sm:$0xff]
        %1542 = vset.pattern.permute.xlu0 0
        %1543 = vperm.xlu0 %1542, %v1541
        %v1544 = vpop.permute.xlu0 %1543
        %vm1545 = vcmp.eq.s32.totalorder %v793, %v1544
        %v1546 = vsel %vm1545, 1, 0
        %v1547 = vcvt.s32.f32 %v1546
        %v1548 = vld [vmem:[%s10] sm:$0xff]
        %v1549 = vld [vmem:[%s10 + $0x8] sm:$0xff]
        %v1550 = vld [vmem:[%s10 + $0x10] sm:$0xff]
        %v1551 = vld [vmem:[%s10 + $0x18] sm:$0xff]
        %v1552 = vld [vmem:[%s10 + $0x20] sm:$0xff]
        %v1553 = vld [vmem:[%s11] sm:$0xff]
        %v1555 = vsel %vm815, %v1547, 0
        %1557 = vmatprep.subr.mxu0 0.0
        %1558 = vmatpush1.msra.mxu0 0.0
        %1559 = vmatprep.subr.mxu0 0.0
        %1560 = vmatpush1.msra.mxu0 0.0
        %1561 = vmatprep.subr.mxu0 0.0
        %1562 = vmatpush1.msra.mxu0 0.0
        %1563 = vmatprep.subr.mxu0 0.0
        %1564 = vmatpush1.msra.mxu0 0.0
        %1565 = vmatprep.subr.mxu0 0.0
        %1566 = vmatpush1.msra.mxu0 0.0
        %1567 = vmatprep.subr.mxu0 0.0
        %1568 = vmatpush1.msra.mxu0 0.0
        %1569 = vmatprep.subr.mxu0 0.0
        %1570 = vmatpush1.msra.mxu0 0.0
        %1571 = vmatprep.subr.mxu0 0.0
        %1572 = vmatpush1.msra.mxu0 0.0
        %1573 = vmatprep.subr.mxu0 0.0
        %1574 = vmatpush1.msra.mxu0 0.0
        %1575 = vmatprep.subr.mxu0 0.0
        %1576 = vmatpush1.msra.mxu0 0.0
        %1577 = vmatprep.subr.mxu0 0.0
        %1578 = vmatpush1.msra.mxu0 0.0
        %1579 = vmatprep.subr.mxu0 0.0
        %1580 = vmatpush1.msra.mxu0 %v1552
        %1581 = vmatprep.subr.mxu0 0.0
        %1582 = vmatpush1.msra.mxu0 %v1551
        %1583 = vmatprep.subr.mxu0 0.0
        %1584 = vmatpush1.msra.mxu0 %v1550
        %1585 = vmatprep.subr.mxu0 0.0
        %1586 = vmatpush1.msra.mxu0 %v1549
        %1587 = vmatprep.subr.mxu0 0.0
        %1588 = vmatpush1.msra.mxu0 %v1548
        %1589 = vmatprep.subr.mxu0 0.0
        %1590 = vmatpush2.msra.mxu0 0.0
        %1591 = vmatprep.subr.mxu0 0.0
        %1592 = vmatpush2.msra.mxu0 0.0
        %1593 = vmatprep.subr.mxu0 0.0
        %1594 = vmatpush2.msra.mxu0 0.0
        %1595 = vmatprep.subr.mxu0 0.0
        %1596 = vmatpush2.msra.mxu0 0.0
        %1597 = vmatprep.subr.mxu0 0.0
        %1598 = vmatpush2.msra.mxu0 0.0
        %1599 = vmatprep.subr.mxu0 0.0
        %1600 = vmatpush2.msra.mxu0 0.0
        %1601 = vmatprep.subr.mxu0 0.0
        %1602 = vmatpush2.msra.mxu0 0.0
        %1603 = vmatprep.subr.mxu0 0.0
        %1604 = vmatpush2.msra.mxu0 0.0
        %1605 = vmatprep.subr.mxu0 0.0
        %1606 = vmatpush2.msra.mxu0 0.0
        %1607 = vmatprep.subr.mxu0 0.0
        %1608 = vmatpush2.msra.mxu0 0.0
        %1609 = vmatprep.subr.mxu0 0.0
        %1610 = vmatpush2.msra.mxu0 0.0
        %1611 = vmatprep.subr.mxu0 0.0
        %1612 = vmatpush2.msra.mxu0 0.0
        %1613 = vmatprep.subr.mxu0 0.0
        %1614 = vmatpush2.msra.mxu0 0.0
        %1615 = vmatprep.subr.mxu0 0.0
        %1616 = vmatpush2.msra.mxu0 0.0
        %1617 = vmatprep.subr.mxu0 0.0
        %1618 = vmatpush2.msra.mxu0 0.0
        %1619 = vmatprep.subr.mxu0 0.0
        %1620 = vmatpush2.msra.mxu0 0.0
        %1621 = vmatprep.mubr.f32.mxu0 0.0
        %1622 = vmatmul.mubr.f32.gmra.mxu0 %v1555
        %v1623 = vpop.f32.mrf.mxu0
        %v1624 = vadd.f32 %v1553, %v1623
        %v1625 = vpop.f32.mrf.mxu0
        %1626 = vdwg.mxu0
        %v1627 = vpack.c.bf16 %v1624, %v1624
        %v1628 = vld [vmem:[%s12] sm:$0xf]
        %v1629 = vld [vmem:[%s12 + $0x4] sm:$0xf]
        %v1630 = vld [vmem:[%s12 + $0x8] sm:$0xf]
        %v1631 = vld [vmem:[%s12 + $0xc] sm:$0xf]
        %v1632 = vld [vmem:[%s13] sm:$0x1]
        %v1634 = vlaneseq
        %v1635 = vshrl.u32 %v1634, 7
        %v1636 = vsub.s32 0, %v1635
        %v1637 = vrot.slane %v1632, %v1636
        %v1643 = vunpack.c.l.b16 %v1628
        %v1644 = vunpack.c.l.b16 %v1629
        %v1645 = vunpack.c.l.b16 %v1630
        %v1646 = vunpack.c.l.b16 %v1631
        %v1647 = vpack.c.b16 %v1644, %v1643
        %v1648 = vpack.c.b16 %v1646, %v1645
        %v1652 = vsel %vm921, %v1627, 0
        %1654 = vmatprep.subr.bf16.mxu0 0
        %1655 = vmatpush1.bf16.msra.mxu0 0
        %1656 = vmatprep.subr.bf16.mxu0 0
        %1657 = vmatpush1.bf16.msra.mxu0 0
        %1658 = vmatprep.subr.bf16.mxu0 0
        %1659 = vmatpush1.bf16.msra.mxu0 0
        %1660 = vmatprep.subr.bf16.mxu0 0
        %1661 = vmatpush1.bf16.msra.mxu0 0
        %1662 = vmatprep.subr.bf16.mxu0 0
        %1663 = vmatpush1.bf16.msra.mxu0 0
        %1664 = vmatprep.subr.bf16.mxu0 0
        %1665 = vmatpush1.bf16.msra.mxu0 0
        %1666 = vmatprep.subr.bf16.mxu0 0
        %1667 = vmatpush1.bf16.msra.mxu0 %v1648
        %1668 = vmatprep.subr.bf16.mxu0 0
        %1669 = vmatpush1.bf16.msra.mxu0 %v1647
        %1670 = vmatprep.subr.bf16.mxu0 0
        %1671 = vmatpush2.bf16.msra.mxu0 0
        %1672 = vmatprep.subr.bf16.mxu0 0
        %1673 = vmatpush2.bf16.msra.mxu0 0
        %1674 = vmatprep.subr.bf16.mxu0 0
        %1675 = vmatpush2.bf16.msra.mxu0 0
        %1676 = vmatprep.subr.bf16.mxu0 0
        %1677 = vmatpush2.bf16.msra.mxu0 0
        %1678 = vmatprep.subr.bf16.mxu0 0
        %1679 = vmatpush2.bf16.msra.mxu0 0
        %1680 = vmatprep.subr.bf16.mxu0 0
        %1681 = vmatpush2.bf16.msra.mxu0 0
        %1682 = vmatprep.subr.bf16.mxu0 0
        %1683 = vmatpush2.bf16.msra.mxu0 0
        %1684 = vmatprep.subr.bf16.mxu0 0
        %1685 = vmatpush2.bf16.msra.mxu0 0
        %1686 = vmatprep.mubr.bf16.mxu0 0
        %1687 = vmatmul.mubr.bf16.gmra.mxu0 %v1652
        %v1688 = vpop.f32.mrf.mxu0
        %v1689 = vadd.f32 %v1637, %v1688
        %v1690 = vpop.f32.mrf.mxu0
        %v1691 = vpop.f32.mrf.mxu0
        %v1692 = vpop.f32.mrf.mxu0
        %1693 = vdwg.mxu0
        %v1694 = vld [vmem:[%s16] sm:$0xf]
        %v1695 = vld [vmem:[%s16 + $0x4] sm:$0xf]
        %v1696 = vld [vmem:[%s16 + $0x8] sm:$0xf]
        %v1697 = vld [vmem:[%s16 + $0xc] sm:$0xf]
        %v1698 = vld [vmem:[%s17] sm:$0x1]
        %v1699 = vld [vmem:[%s18] sm:$0xf]
        %v1700 = vld [vmem:[%s18 + $0x4] sm:$0xf]
        %v1701 = vld [vmem:[%s18 + $0x8] sm:$0xf]
        %v1702 = vld [vmem:[%s18 + $0xc] sm:$0xf]
        %v1703 = vld [vmem:[%s19] sm:$0x1]
        %v1704 = vld [vmem:[%s15] sm:$0x1]
        %v1706 = vlaneseq
        %v1707 = vshrl.u32 %v1706, 7
        %v1708 = vsub.s32 0, %v1707
        %v1709 = vrot.slane %v1704, %v1708
        %v1711 = vadd.f32 %v1709, 0.0
        %v1712 = vrot.slane %v1689, 6
        %vm1713 = vcmp.ge.s32.totalorder %v967, 2
        %vm1714 = vcmp.lt.s32.totalorder %v967, 10
        %vm1715 = vmand %vm1713, %vm1714
        %v1716 = vsel %vm1715, 1, 0
        %vm1717 = vcmp.eq.s32.totalorder %v1716, 1
        %v1718 = vsel %vm1717, %v1712, 0.0
        %v1719 = vpack.c.bf16 %v1718, %v1718
        %v1720 = vld [vmem:[%s14] sm:$0xf]
        %v1721 = vld [vmem:[%s14 + $0x4] sm:$0xf]
        %v1722 = vld [vmem:[%s14 + $0x8] sm:$0xf]
        %v1723 = vld [vmem:[%s14 + $0xc] sm:$0xf]
        %v1728 = vunpack.c.l.b16 %v1720
        %v1729 = vunpack.c.l.b16 %v1721
        %v1730 = vunpack.c.l.b16 %v1722
        %v1731 = vunpack.c.l.b16 %v1723
        %v1732 = vpack.c.b16 %v1729, %v1728
        %v1733 = vpack.c.b16 %v1731, %v1730
        %v1737 = vsel %vm921, %v1719, 0
        %1739 = vmatprep.subr.bf16.mxu0 0
        %1740 = vmatpush1.bf16.msra.mxu0 0
        %1741 = vmatprep.subr.bf16.mxu0 0
        %1742 = vmatpush1.bf16.msra.mxu0 0
        %1743 = vmatprep.subr.bf16.mxu0 0
        %1744 = vmatpush1.bf16.msra.mxu0 0
        %1745 = vmatprep.subr.bf16.mxu0 0
        %1746 = vmatpush1.bf16.msra.mxu0 0
        %1747 = vmatprep.subr.bf16.mxu0 0
        %1748 = vmatpush1.bf16.msra.mxu0 0
        %1749 = vmatprep.subr.bf16.mxu0 0
        %1750 = vmatpush1.bf16.msra.mxu0 0
        %1751 = vmatprep.subr.bf16.mxu0 0
        %1752 = vmatpush1.bf16.msra.mxu0 %v1733
        %1753 = vmatprep.subr.bf16.mxu0 0
        %1754 = vmatpush1.bf16.msra.mxu0 %v1732
        %1755 = vmatprep.subr.bf16.mxu0 0
        %1756 = vmatpush2.bf16.msra.mxu0 0
        %1757 = vmatprep.subr.bf16.mxu0 0
        %1758 = vmatpush2.bf16.msra.mxu0 0
        %1759 = vmatprep.subr.bf16.mxu0 0
        %1760 = vmatpush2.bf16.msra.mxu0 0
        %1761 = vmatprep.subr.bf16.mxu0 0
        %1762 = vmatpush2.bf16.msra.mxu0 0
        %1763 = vmatprep.subr.bf16.mxu0 0
        %1764 = vmatpush2.bf16.msra.mxu0 0
        %1765 = vmatprep.subr.bf16.mxu0 0
        %1766 = vmatpush2.bf16.msra.mxu0 0
        %1767 = vmatprep.subr.bf16.mxu0 0
        %1768 = vmatpush2.bf16.msra.mxu0 0
        %1769 = vmatprep.subr.bf16.mxu0 0
        %1770 = vmatpush2.bf16.msra.mxu0 0
        %1771 = vmatprep.mubr.bf16.mxu0 0
        %1772 = vmatmul.mubr.bf16.gmra.mxu0 %v1737
        %v1773 = vpop.f32.mrf.mxu0
        %v1774 = vadd.f32 0.0, %v1773
        %v1775 = vpop.f32.mrf.mxu0
        %v1776 = vpop.f32.mrf.mxu0
        %v1777 = vpop.f32.mrf.mxu0
        %1778 = vdwg.mxu0
        %v1779 = vadd.f32 %v1711, %v1774
        %v1780 = vrot.slane %v1689, 7
        %vm1781 = vcmp.lt.s32.totalorder %v967, 9
        %vm1782 = vmand %vm982, %vm1781
        %v1783 = vsel %vm1782, 1, 0
        %vm1784 = vcmp.eq.s32.totalorder %v1783, 1
        %v1785 = vsel %vm1784, %v1780, 0.0
        %v1786 = vpack.c.bf16 %v1785, %v1785
        %s1787 = scalar_lea.vmem %s14, 16
        %v1788 = vld [vmem:[%s1787] sm:$0xf]
        %v1789 = vld [vmem:[%s1787 + $0x4] sm:$0xf]
        %v1790 = vld [vmem:[%s1787 + $0x8] sm:$0xf]
        %v1791 = vld [vmem:[%s1787 + $0xc] sm:$0xf]
        %v1796 = vunpack.c.l.b16 %v1788
        %v1797 = vunpack.c.l.b16 %v1789
        %v1798 = vunpack.c.l.b16 %v1790
        %v1799 = vunpack.c.l.b16 %v1791
        %v1800 = vpack.c.b16 %v1797, %v1796
        %v1801 = vpack.c.b16 %v1799, %v1798
        %v1805 = vsel %vm921, %v1786, 0
        %1807 = vmatprep.subr.bf16.mxu0 0
        %1808 = vmatpush1.bf16.msra.mxu0 0
        %1809 = vmatprep.subr.bf16.mxu0 0
        %1810 = vmatpush1.bf16.msra.mxu0 0
        %1811 = vmatprep.subr.bf16.mxu0 0
        %1812 = vmatpush1.bf16.msra.mxu0 0
        %1813 = vmatprep.subr.bf16.mxu0 0
        %1814 = vmatpush1.bf16.msra.mxu0 0
        %1815 = vmatprep.subr.bf16.mxu0 0
        %1816 = vmatpush1.bf16.msra.mxu0 0
        %1817 = vmatprep.subr.bf16.mxu0 0
        %1818 = vmatpush1.bf16.msra.mxu0 0
        %1819 = vmatprep.subr.bf16.mxu0 0
        %1820 = vmatpush1.bf16.msra.mxu0 %v1801
        %1821 = vmatprep.subr.bf16.mxu0 0
        %1822 = vmatpush1.bf16.msra.mxu0 %v1800
        %1823 = vmatprep.subr.bf16.mxu0 0
        %1824 = vmatpush2.bf16.msra.mxu0 0
        %1825 = vmatprep.subr.bf16.mxu0 0
        %1826 = vmatpush2.bf16.msra.mxu0 0
        %1827 = vmatprep.subr.bf16.mxu0 0
        %1828 = vmatpush2.bf16.msra.mxu0 0
        %1829 = vmatprep.subr.bf16.mxu0 0
        %1830 = vmatpush2.bf16.msra.mxu0 0
        %1831 = vmatprep.subr.bf16.mxu0 0
        %1832 = vmatpush2.bf16.msra.mxu0 0
        %1833 = vmatprep.subr.bf16.mxu0 0
        %1834 = vmatpush2.bf16.msra.mxu0 0
        %1835 = vmatprep.subr.bf16.mxu0 0
        %1836 = vmatpush2.bf16.msra.mxu0 0
        %1837 = vmatprep.subr.bf16.mxu0 0
        %1838 = vmatpush2.bf16.msra.mxu0 0
        %1839 = vmatprep.mubr.bf16.mxu0 0
        %1840 = vmatmul.mubr.bf16.gmra.mxu0 %v1805
        %v1841 = vpop.f32.mrf.mxu0
        %v1842 = vadd.f32 0.0, %v1841
        %v1843 = vpop.f32.mrf.mxu0
        %v1844 = vpop.f32.mrf.mxu0
        %v1845 = vpop.f32.mrf.mxu0
        %1846 = vdwg.mxu0
        %v1847 = vadd.f32 %v1779, %v1842
        %v1848 = vpack.c.bf16 %v1689, %v1689
        %s1849 = scalar_lea.vmem %s14, 32
        %v1850 = vld [vmem:[%s1849] sm:$0xf]
        %v1851 = vld [vmem:[%s1849 + $0x4] sm:$0xf]
        %v1852 = vld [vmem:[%s1849 + $0x8] sm:$0xf]
        %v1853 = vld [vmem:[%s1849 + $0xc] sm:$0xf]
        %v1858 = vunpack.c.l.b16 %v1850
        %v1859 = vunpack.c.l.b16 %v1851
        %v1860 = vunpack.c.l.b16 %v1852
        %v1861 = vunpack.c.l.b16 %v1853
        %v1862 = vpack.c.b16 %v1859, %v1858
        %v1863 = vpack.c.b16 %v1861, %v1860
        %v1867 = vsel %vm921, %v1848, 0
        %1869 = vmatprep.subr.bf16.mxu0 0
        %1870 = vmatpush1.bf16.msra.mxu0 0
        %1871 = vmatprep.subr.bf16.mxu0 0
        %1872 = vmatpush1.bf16.msra.mxu0 0
        %1873 = vmatprep.subr.bf16.mxu0 0
        %1874 = vmatpush1.bf16.msra.mxu0 0
        %1875 = vmatprep.subr.bf16.mxu0 0
        %1876 = vmatpush1.bf16.msra.mxu0 0
        %1877 = vmatprep.subr.bf16.mxu0 0
        %1878 = vmatpush1.bf16.msra.mxu0 0
        %1879 = vmatprep.subr.bf16.mxu0 0
        %1880 = vmatpush1.bf16.msra.mxu0 0
        %1881 = vmatprep.subr.bf16.mxu0 0
        %1882 = vmatpush1.bf16.msra.mxu0 %v1863
        %1883 = vmatprep.subr.bf16.mxu0 0
        %1884 = vmatpush1.bf16.msra.mxu0 %v1862
        %1885 = vmatprep.subr.bf16.mxu0 0
        %1886 = vmatpush2.bf16.msra.mxu0 0
        %1887 = vmatprep.subr.bf16.mxu0 0
        %1888 = vmatpush2.bf16.msra.mxu0 0
        %1889 = vmatprep.subr.bf16.mxu0 0
        %1890 = vmatpush2.bf16.msra.mxu0 0
        %1891 = vmatprep.subr.bf16.mxu0 0
        %1892 = vmatpush2.bf16.msra.mxu0 0
        %1893 = vmatprep.subr.bf16.mxu0 0
        %1894 = vmatpush2.bf16.msra.mxu0 0
        %1895 = vmatprep.subr.bf16.mxu0 0
        %1896 = vmatpush2.bf16.msra.mxu0 0
        %1897 = vmatprep.subr.bf16.mxu0 0
        %1898 = vmatpush2.bf16.msra.mxu0 0
        %1899 = vmatprep.subr.bf16.mxu0 0
        %1900 = vmatpush2.bf16.msra.mxu0 0
        %1901 = vmatprep.mubr.bf16.mxu0 0
        %1902 = vmatmul.mubr.bf16.gmra.mxu0 %v1867
        %v1903 = vpop.f32.mrf.mxu0
        %v1904 = vadd.f32 0.0, %v1903
        %v1905 = vpop.f32.mrf.mxu0
        %v1906 = vpop.f32.mrf.mxu0
        %v1907 = vpop.f32.mrf.mxu0
        %1908 = vdwg.mxu0
        %v1909 = vadd.f32 %v1847, %v1904
        %v1910 = vxor.u32 %v1909, 2147483648
        %v1911 = vmul.f32 %v1910, 1.442695
        %v1912 = vpow.pop %v1911
        %v1913 = vadd.f32 %v1912, 1.0
        %v1914 = vrcp.pop %v1913
        %v1915 = vmul.f32 1.0, %v1914
        %1917 = vrot.lane.b32.xlu0 %v1915, 96
        %v1918 = vpop.permute.xlu0 %1917
        %v1920 = vmul.f32 %v1909, %v1918
        %v1921 = vpack.c.bf16 %v1920, %v1920
        %v1923 = vlaneseq
        %v1924 = vshrl.u32 %v1923, 7
        %v1925 = vsub.s32 0, %v1924
        %v1926 = vrot.slane %v1698, %v1925
        %v1932 = vunpack.c.l.b16 %v1694
        %v1933 = vunpack.c.l.b16 %v1695
        %v1934 = vunpack.c.l.b16 %v1696
        %v1935 = vunpack.c.l.b16 %v1697
        %v1936 = vpack.c.b16 %v1933, %v1932
        %v1937 = vpack.c.b16 %v1935, %v1934
        %v1941 = vsel %vm921, %v1921, 0
        %1943 = vmatprep.subr.bf16.mxu0 0
        %1944 = vmatpush1.bf16.msra.mxu0 0
        %1945 = vmatprep.subr.bf16.mxu0 0
        %1946 = vmatpush1.bf16.msra.mxu0 0
        %1947 = vmatprep.subr.bf16.mxu0 0
        %1948 = vmatpush1.bf16.msra.mxu0 0
        %1949 = vmatprep.subr.bf16.mxu0 0
        %1950 = vmatpush1.bf16.msra.mxu0 0
        %1951 = vmatprep.subr.bf16.mxu0 0
        %1952 = vmatpush1.bf16.msra.mxu0 0
        %1953 = vmatprep.subr.bf16.mxu0 0
        %1954 = vmatpush1.bf16.msra.mxu0 0
        %1955 = vmatprep.subr.bf16.mxu0 0
        %1956 = vmatpush1.bf16.msra.mxu0 %v1937
        %1957 = vmatprep.subr.bf16.mxu0 0
        %1958 = vmatpush1.bf16.msra.mxu0 %v1936
        %1959 = vmatprep.subr.bf16.mxu0 0
        %1960 = vmatpush2.bf16.msra.mxu0 0
        %1961 = vmatprep.subr.bf16.mxu0 0
        %1962 = vmatpush2.bf16.msra.mxu0 0
        %1963 = vmatprep.subr.bf16.mxu0 0
        %1964 = vmatpush2.bf16.msra.mxu0 0
        %1965 = vmatprep.subr.bf16.mxu0 0
        %1966 = vmatpush2.bf16.msra.mxu0 0
        %1967 = vmatprep.subr.bf16.mxu0 0
        %1968 = vmatpush2.bf16.msra.mxu0 0
        %1969 = vmatprep.subr.bf16.mxu0 0
        %1970 = vmatpush2.bf16.msra.mxu0 0
        %1971 = vmatprep.subr.bf16.mxu0 0
        %1972 = vmatpush2.bf16.msra.mxu0 0
        %1973 = vmatprep.subr.bf16.mxu0 0
        %1974 = vmatpush2.bf16.msra.mxu0 0
        %1975 = vmatprep.mubr.bf16.mxu0 0
        %1976 = vmatmul.mubr.bf16.gmra.mxu0 %v1941
        %v1977 = vpop.f32.mrf.mxu0
        %v1978 = vadd.f32 %v1926, %v1977
        %v1979 = vpop.f32.mrf.mxu0
        %v1980 = vpop.f32.mrf.mxu0
        %v1981 = vpop.f32.mrf.mxu0
        %1982 = vdwg.mxu0
        %v1983 = vadd.f32 %v1978, %v1624
        %v1984 = vmul.f32 %v1983, 0.70710677
        %v1985 = vpack.c.bf16 %v1984, %v1984
        %v1987 = vsel %vm921, %v1985, 0
        %v1990 = vsel %vm921, %v1539, 0
        %1992 = vmatprep.subr.bf16.mxu0 0
        %1993 = vmatpush1.bf16.xpose.msra.mxu0 0
        %1994 = vmatprep.subr.bf16.mxu0 0
        %1995 = vmatpush1.bf16.xpose.msra.mxu0 0
        %1996 = vmatprep.subr.bf16.mxu0 0
        %1997 = vmatpush1.bf16.xpose.msra.mxu0 0
        %1998 = vmatprep.subr.bf16.mxu0 0
        %1999 = vmatpush1.bf16.xpose.msra.mxu0 0
        %2000 = vmatprep.subr.bf16.mxu0 0
        %2001 = vmatpush1.bf16.xpose.msra.mxu0 0
        %2002 = vmatprep.subr.bf16.mxu0 0
        %2003 = vmatpush1.bf16.xpose.msra.mxu0 0
        %2004 = vmatprep.subr.bf16.mxu0 0
        %2005 = vmatpush1.bf16.xpose.msra.mxu0 0
        %2006 = vmatprep.subr.bf16.mxu0 0
        %2007 = vmatpush1.bf16.xpose.msra.mxu0 %v1990
        %2008 = vmatprep.subr.bf16.mxu0 0
        %2009 = vmatpush2.bf16.xpose.msra.mxu0 0
        %2010 = vmatprep.subr.bf16.mxu0 0
        %2011 = vmatpush2.bf16.xpose.msra.mxu0 0
        %2012 = vmatprep.subr.bf16.mxu0 0
        %2013 = vmatpush2.bf16.xpose.msra.mxu0 0
        %2014 = vmatprep.subr.bf16.mxu0 0
        %2015 = vmatpush2.bf16.xpose.msra.mxu0 0
        %2016 = vmatprep.subr.bf16.mxu0 0
        %2017 = vmatpush2.bf16.xpose.msra.mxu0 0
        %2018 = vmatprep.subr.bf16.mxu0 0
        %2019 = vmatpush2.bf16.xpose.msra.mxu0 0
        %2020 = vmatprep.subr.bf16.mxu0 0
        %2021 = vmatpush2.bf16.xpose.msra.mxu0 0
        %2022 = vmatprep.subr.bf16.mxu0 0
        %2023 = vmatpush2.bf16.xpose.msra.mxu0 0
        %2024 = vmatprep.mubr.bf16.mxu0 0
        %2025 = vmatmul.mubr.bf16.gmra.mxu0 %v1987
        %v2026 = vpop.f32.mrf.mxu0
        %v2027 = vadd.f32 0.0, %v2026
        %v2028 = vpop.f32.mrf.mxu0
        %v2029 = vpop.f32.mrf.mxu0
        %v2030 = vpop.f32.mrf.mxu0
        %2031 = vdwg.mxu0
        %vm2032 = vcmask 130048
        %v2033 = vsel %vm2032, %v2027, -inf
        %2034 = vmax.xlane.f32.xlu0 %v2033
        %v2035 = vpop.xlane.xlu0 %2034
        %v2036 = vsub.f32 %v2027, %v2035
        %v2037 = vmul.f32 %v2036, 1.442695
        %v2038 = vpow.pop %v2037
        %v2039 = vsel %vm2032, %v2038, 0.0
        %2040 = vadd.xlane.f32.xlu0 %v2039
        %v2041 = vpop.xlane.xlu0 %2040
        %v2042 = vrcp.pop %v2041
        %v2043 = vmul.f32 %v2038, %v2042
        %v2044 = vpack.c.bf16 %v2043, %v2043
        %v2046 = vsel %vm2032, %v2044, 0
        %2048 = vmatprep.subr.bf16.mxu0 0
        %2049 = vmatpush1.bf16.msra.mxu0 0
        %2050 = vmatprep.subr.bf16.mxu0 0
        %2051 = vmatpush1.bf16.msra.mxu0 0
        %2052 = vmatprep.subr.bf16.mxu0 0
        %2053 = vmatpush1.bf16.msra.mxu0 0
        %2054 = vmatprep.subr.bf16.mxu0 0
        %2055 = vmatpush1.bf16.msra.mxu0 0
        %2056 = vmatprep.subr.bf16.mxu0 0
        %2057 = vmatpush1.bf16.msra.mxu0 0
        %2058 = vmatprep.subr.bf16.mxu0 0
        %2059 = vmatpush1.bf16.msra.mxu0 0
        %2060 = vmatprep.subr.bf16.mxu0 0
        %2061 = vmatpush1.bf16.msra.mxu0 0
        %2062 = vmatprep.subr.bf16.mxu0 0
        %2063 = vmatpush1.bf16.msra.mxu0 %v1540
        %2064 = vmatprep.subr.bf16.mxu0 0
        %2065 = vmatpush2.bf16.msra.mxu0 0
        %2066 = vmatprep.subr.bf16.mxu0 0
        %2067 = vmatpush2.bf16.msra.mxu0 0
        %2068 = vmatprep.subr.bf16.mxu0 0
        %2069 = vmatpush2.bf16.msra.mxu0 0
        %2070 = vmatprep.subr.bf16.mxu0 0
        %2071 = vmatpush2.bf16.msra.mxu0 0
        %2072 = vmatprep.subr.bf16.mxu0 0
        %2073 = vmatpush2.bf16.msra.mxu0 0
        %2074 = vmatprep.subr.bf16.mxu0 0
        %2075 = vmatpush2.bf16.msra.mxu0 0
        %2076 = vmatprep.subr.bf16.mxu0 0
        %2077 = vmatpush2.bf16.msra.mxu0 0
        %2078 = vmatprep.subr.bf16.mxu0 0
        %2079 = vmatpush2.bf16.msra.mxu0 0
        %2080 = vmatprep.mubr.bf16.mxu0 0
        %2081 = vmatmul.mubr.bf16.gmra.mxu0 %v2046
        %v2082 = vpop.f32.mrf.mxu0
        %v2083 = vadd.f32 0.0, %v2082
        %v2084 = vpop.f32.mrf.mxu0
        %v2085 = vpop.f32.mrf.mxu0
        %v2086 = vpop.f32.mrf.mxu0
        %2087 = vdwg.mxu0
        %v2088 = vpack.c.bf16 %v2083, %v2083
        %v2090 = vlaneseq
        %v2091 = vshrl.u32 %v2090, 7
        %v2092 = vsub.s32 0, %v2091
        %v2093 = vrot.slane %v1703, %v2092
        %v2099 = vunpack.c.l.b16 %v1699
        %v2100 = vunpack.c.l.b16 %v1700
        %v2101 = vunpack.c.l.b16 %v1701
        %v2102 = vunpack.c.l.b16 %v1702
        %v2103 = vpack.c.b16 %v2100, %v2099
        %v2104 = vpack.c.b16 %v2102, %v2101
        %v2108 = vsel %vm921, %v2088, 0
        %2110 = vmatprep.subr.bf16.mxu0 0
        %2111 = vmatpush1.bf16.msra.mxu0 0
        %2112 = vmatprep.subr.bf16.mxu0 0
        %2113 = vmatpush1.bf16.msra.mxu0 0
        %2114 = vmatprep.subr.bf16.mxu0 0
        %2115 = vmatpush1.bf16.msra.mxu0 0
        %2116 = vmatprep.subr.bf16.mxu0 0
        %2117 = vmatpush1.bf16.msra.mxu0 0
        %2118 = vmatprep.subr.bf16.mxu0 0
        %2119 = vmatpush1.bf16.msra.mxu0 0
        %2120 = vmatprep.subr.bf16.mxu0 0
        %2121 = vmatpush1.bf16.msra.mxu0 0
        %2122 = vmatprep.subr.bf16.mxu0 0
        %2123 = vmatpush1.bf16.msra.mxu0 %v2104
        %2124 = vmatprep.subr.bf16.mxu0 0
        %2125 = vmatpush1.bf16.msra.mxu0 %v2103
        %2126 = vmatprep.subr.bf16.mxu0 0
        %2127 = vmatpush2.bf16.msra.mxu0 0
        %2128 = vmatprep.subr.bf16.mxu0 0
        %2129 = vmatpush2.bf16.msra.mxu0 0
        %2130 = vmatprep.subr.bf16.mxu0 0
        %2131 = vmatpush2.bf16.msra.mxu0 0
        %2132 = vmatprep.subr.bf16.mxu0 0
        %2133 = vmatpush2.bf16.msra.mxu0 0
        %2134 = vmatprep.subr.bf16.mxu0 0
        %2135 = vmatpush2.bf16.msra.mxu0 0
        %2136 = vmatprep.subr.bf16.mxu0 0
        %2137 = vmatpush2.bf16.msra.mxu0 0
        %2138 = vmatprep.subr.bf16.mxu0 0
        %2139 = vmatpush2.bf16.msra.mxu0 0
        %2140 = vmatprep.subr.bf16.mxu0 0
        %2141 = vmatpush2.bf16.msra.mxu0 0
        %2142 = vmatprep.mubr.bf16.mxu0 0
        %2143 = vmatmul.mubr.bf16.gmra.mxu0 %v2108
        %v2144 = vpop.f32.mrf.mxu0
        %v2145 = vadd.f32 %v2093, %v2144
        %v2146 = vpop.f32.mrf.mxu0
        %v2147 = vpop.f32.mrf.mxu0
        %v2148 = vpop.f32.mrf.mxu0
        %2149 = vdwg.mxu0
        %v2150 = vadd.f32 %v1920, %v2145
        %v2151 = vmul.f32 %v2150, 0.70710677
        %v2152 = vadd.f32 %v2151, %v1689
        %v2153 = vmul.f32 %v2152, 0.70710677
        %s2154 = scalar_lea.vmem %s15, 1
        %v2155 = vld [vmem:[%s2154] sm:$0x1]
        %v2157 = vlaneseq
        %v2158 = vshrl.u32 %v2157, 7
        %v2159 = vsub.s32 0, %v2158
        %v2160 = vrot.slane %v2155, %v2159
        %v2162 = vadd.f32 %v2160, 0.0
        %v2163 = vrot.slane %v2153, 6
        %v2164 = vsel %vm1717, %v2163, 0.0
        %v2165 = vpack.c.bf16 %v2164, %v2164
        %s2166 = scalar_lea.vmem %s14, 48
        %v2167 = vld [vmem:[%s2166] sm:$0xf]
        %v2168 = vld [vmem:[%s2166 + $0x4] sm:$0xf]
        %v2169 = vld [vmem:[%s2166 + $0x8] sm:$0xf]
        %v2170 = vld [vmem:[%s2166 + $0xc] sm:$0xf]
        %v2175 = vunpack.c.l.b16 %v2167
        %v2176 = vunpack.c.l.b16 %v2168
        %v2177 = vunpack.c.l.b16 %v2169
        %v2178 = vunpack.c.l.b16 %v2170
        %v2179 = vpack.c.b16 %v2176, %v2175
        %v2180 = vpack.c.b16 %v2178, %v2177
        %v2184 = vsel %vm921, %v2165, 0
        %2186 = vmatprep.subr.bf16.mxu0 0
        %2187 = vmatpush1.bf16.msra.mxu0 0
        %2188 = vmatprep.subr.bf16.mxu0 0
        %2189 = vmatpush1.bf16.msra.mxu0 0
        %2190 = vmatprep.subr.bf16.mxu0 0
        %2191 = vmatpush1.bf16.msra.mxu0 0
        %2192 = vmatprep.subr.bf16.mxu0 0
        %2193 = vmatpush1.bf16.msra.mxu0 0
        %2194 = vmatprep.subr.bf16.mxu0 0
        %2195 = vmatpush1.bf16.msra.mxu0 0
        %2196 = vmatprep.subr.bf16.mxu0 0
        %2197 = vmatpush1.bf16.msra.mxu0 0
        %2198 = vmatprep.subr.bf16.mxu0 0
        %2199 = vmatpush1.bf16.msra.mxu0 %v2180
        %2200 = vmatprep.subr.bf16.mxu0 0
        %2201 = vmatpush1.bf16.msra.mxu0 %v2179
        %2202 = vmatprep.subr.bf16.mxu0 0
        %2203 = vmatpush2.bf16.msra.mxu0 0
        %2204 = vmatprep.subr.bf16.mxu0 0
        %2205 = vmatpush2.bf16.msra.mxu0 0
        %2206 = vmatprep.subr.bf16.mxu0 0
        %2207 = vmatpush2.bf16.msra.mxu0 0
        %2208 = vmatprep.subr.bf16.mxu0 0
        %2209 = vmatpush2.bf16.msra.mxu0 0
        %2210 = vmatprep.subr.bf16.mxu0 0
        %2211 = vmatpush2.bf16.msra.mxu0 0
        %2212 = vmatprep.subr.bf16.mxu0 0
        %2213 = vmatpush2.bf16.msra.mxu0 0
        %2214 = vmatprep.subr.bf16.mxu0 0
        %2215 = vmatpush2.bf16.msra.mxu0 0
        %2216 = vmatprep.subr.bf16.mxu0 0
        %2217 = vmatpush2.bf16.msra.mxu0 0
        %2218 = vmatprep.mubr.bf16.mxu0 0
        %2219 = vmatmul.mubr.bf16.gmra.mxu0 %v2184
        %v2220 = vpop.f32.mrf.mxu0
        %v2221 = vadd.f32 0.0, %v2220
        %v2222 = vpop.f32.mrf.mxu0
        %v2223 = vpop.f32.mrf.mxu0
        %v2224 = vpop.f32.mrf.mxu0
        %2225 = vdwg.mxu0
        %v2226 = vadd.f32 %v2162, %v2221
        %v2227 = vrot.slane %v2153, 7
        %v2228 = vsel %vm1784, %v2227, 0.0
        %v2229 = vpack.c.bf16 %v2228, %v2228
        %s2230 = scalar_lea.vmem %s14, 64
        %v2231 = vld [vmem:[%s2230] sm:$0xf]
        %v2232 = vld [vmem:[%s2230 + $0x4] sm:$0xf]
        %v2233 = vld [vmem:[%s2230 + $0x8] sm:$0xf]
        %v2234 = vld [vmem:[%s2230 + $0xc] sm:$0xf]
        %v2239 = vunpack.c.l.b16 %v2231
        %v2240 = vunpack.c.l.b16 %v2232
        %v2241 = vunpack.c.l.b16 %v2233
        %v2242 = vunpack.c.l.b16 %v2234
        %v2243 = vpack.c.b16 %v2240, %v2239
        %v2244 = vpack.c.b16 %v2242, %v2241
        %v2248 = vsel %vm921, %v2229, 0
        %2250 = vmatprep.subr.bf16.mxu0 0
        %2251 = vmatpush1.bf16.msra.mxu0 0
        %2252 = vmatprep.subr.bf16.mxu0 0
        %2253 = vmatpush1.bf16.msra.mxu0 0
        %2254 = vmatprep.subr.bf16.mxu0 0
        %2255 = vmatpush1.bf16.msra.mxu0 0
        %2256 = vmatprep.subr.bf16.mxu0 0
        %2257 = vmatpush1.bf16.msra.mxu0 0
        %2258 = vmatprep.subr.bf16.mxu0 0
        %2259 = vmatpush1.bf16.msra.mxu0 0
        %2260 = vmatprep.subr.bf16.mxu0 0
        %2261 = vmatpush1.bf16.msra.mxu0 0
        %2262 = vmatprep.subr.bf16.mxu0 0
        %2263 = vmatpush1.bf16.msra.mxu0 %v2244
        %2264 = vmatprep.subr.bf16.mxu0 0
        %2265 = vmatpush1.bf16.msra.mxu0 %v2243
        %2266 = vmatprep.subr.bf16.mxu0 0
        %2267 = vmatpush2.bf16.msra.mxu0 0
        %2268 = vmatprep.subr.bf16.mxu0 0
        %2269 = vmatpush2.bf16.msra.mxu0 0
        %2270 = vmatprep.subr.bf16.mxu0 0
        %2271 = vmatpush2.bf16.msra.mxu0 0
        %2272 = vmatprep.subr.bf16.mxu0 0
        %2273 = vmatpush2.bf16.msra.mxu0 0
        %2274 = vmatprep.subr.bf16.mxu0 0
        %2275 = vmatpush2.bf16.msra.mxu0 0
        %2276 = vmatprep.subr.bf16.mxu0 0
        %2277 = vmatpush2.bf16.msra.mxu0 0
        %2278 = vmatprep.subr.bf16.mxu0 0
        %2279 = vmatpush2.bf16.msra.mxu0 0
        %2280 = vmatprep.subr.bf16.mxu0 0
        %2281 = vmatpush2.bf16.msra.mxu0 0
        %2282 = vmatprep.mubr.bf16.mxu0 0
        %2283 = vmatmul.mubr.bf16.gmra.mxu0 %v2248
        %v2284 = vpop.f32.mrf.mxu0
        %v2285 = vadd.f32 0.0, %v2284
        %v2286 = vpop.f32.mrf.mxu0
        %v2287 = vpop.f32.mrf.mxu0
        %v2288 = vpop.f32.mrf.mxu0
        %2289 = vdwg.mxu0
        %v2290 = vadd.f32 %v2226, %v2285
        %v2291 = vpack.c.bf16 %v2153, %v2153
        %s2292 = scalar_lea.vmem %s14, 80
        %v2293 = vld [vmem:[%s2292] sm:$0xf]
        %v2294 = vld [vmem:[%s2292 + $0x4] sm:$0xf]
        %v2295 = vld [vmem:[%s2292 + $0x8] sm:$0xf]
        %v2296 = vld [vmem:[%s2292 + $0xc] sm:$0xf]
        %v2301 = vunpack.c.l.b16 %v2293
        %v2302 = vunpack.c.l.b16 %v2294
        %v2303 = vunpack.c.l.b16 %v2295
        %v2304 = vunpack.c.l.b16 %v2296
        %v2305 = vpack.c.b16 %v2302, %v2301
        %v2306 = vpack.c.b16 %v2304, %v2303
        %v2310 = vsel %vm921, %v2291, 0
        %2312 = vmatprep.subr.bf16.mxu0 0
        %2313 = vmatpush1.bf16.msra.mxu0 0
        %2314 = vmatprep.subr.bf16.mxu0 0
        %2315 = vmatpush1.bf16.msra.mxu0 0
        %2316 = vmatprep.subr.bf16.mxu0 0
        %2317 = vmatpush1.bf16.msra.mxu0 0
        %2318 = vmatprep.subr.bf16.mxu0 0
        %2319 = vmatpush1.bf16.msra.mxu0 0
        %2320 = vmatprep.subr.bf16.mxu0 0
        %2321 = vmatpush1.bf16.msra.mxu0 0
        %2322 = vmatprep.subr.bf16.mxu0 0
        %2323 = vmatpush1.bf16.msra.mxu0 0
        %2324 = vmatprep.subr.bf16.mxu0 0
        %2325 = vmatpush1.bf16.msra.mxu0 %v2306
        %2326 = vmatprep.subr.bf16.mxu0 0
        %2327 = vmatpush1.bf16.msra.mxu0 %v2305
        %2328 = vmatprep.subr.bf16.mxu0 0
        %2329 = vmatpush2.bf16.msra.mxu0 0
        %2330 = vmatprep.subr.bf16.mxu0 0
        %2331 = vmatpush2.bf16.msra.mxu0 0
        %2332 = vmatprep.subr.bf16.mxu0 0
        %2333 = vmatpush2.bf16.msra.mxu0 0
        %2334 = vmatprep.subr.bf16.mxu0 0
        %2335 = vmatpush2.bf16.msra.mxu0 0
        %2336 = vmatprep.subr.bf16.mxu0 0
        %2337 = vmatpush2.bf16.msra.mxu0 0
        %2338 = vmatprep.subr.bf16.mxu0 0
        %2339 = vmatpush2.bf16.msra.mxu0 0
        %2340 = vmatprep.subr.bf16.mxu0 0
        %2341 = vmatpush2.bf16.msra.mxu0 0
        %2342 = vmatprep.subr.bf16.mxu0 0
        %2343 = vmatpush2.bf16.msra.mxu0 0
        %2344 = vmatprep.mubr.bf16.mxu0 0
        %2345 = vmatmul.mubr.bf16.gmra.mxu0 %v2310
        %v2346 = vpop.f32.mrf.mxu0
        %v2347 = vadd.f32 0.0, %v2346
        %v2348 = vpop.f32.mrf.mxu0
        %v2349 = vpop.f32.mrf.mxu0
        %v2350 = vpop.f32.mrf.mxu0
        %2351 = vdwg.mxu0
        %v2352 = vadd.f32 %v2290, %v2347
        %v2353 = vxor.u32 %v2352, 2147483648
        %v2354 = vmul.f32 %v2353, 1.442695
        %v2355 = vpow.pop %v2354
        %v2356 = vadd.f32 %v2355, 1.0
        %v2357 = vrcp.pop %v2356
        %v2358 = vmul.f32 1.0, %v2357
        %2360 = vrot.lane.b32.xlu0 %v2358, 96
        %v2361 = vpop.permute.xlu0 %2360
        %v2363 = vmul.f32 %v2352, %v2361
        %v2364 = vpack.c.bf16 %v2363, %v2363
        %v2366 = vsel %vm921, %v2364, 0
        %2368 = vmatprep.subr.bf16.mxu0 0
        %2369 = vmatpush1.bf16.msra.mxu0 0
        %2370 = vmatprep.subr.bf16.mxu0 0
        %2371 = vmatpush1.bf16.msra.mxu0 0
        %2372 = vmatprep.subr.bf16.mxu0 0
        %2373 = vmatpush1.bf16.msra.mxu0 0
        %2374 = vmatprep.subr.bf16.mxu0 0
        %2375 = vmatpush1.bf16.msra.mxu0 0
        %2376 = vmatprep.subr.bf16.mxu0 0
        %2377 = vmatpush1.bf16.msra.mxu0 0
        %2378 = vmatprep.subr.bf16.mxu0 0
        %2379 = vmatpush1.bf16.msra.mxu0 0
        %2380 = vmatprep.subr.bf16.mxu0 0
        %2381 = vmatpush1.bf16.msra.mxu0 %v1937
        %2382 = vmatprep.subr.bf16.mxu0 0
        %2383 = vmatpush1.bf16.msra.mxu0 %v1936
        %2384 = vmatprep.subr.bf16.mxu0 0
        %2385 = vmatpush2.bf16.msra.mxu0 0
        %2386 = vmatprep.subr.bf16.mxu0 0
        %2387 = vmatpush2.bf16.msra.mxu0 0
        %2388 = vmatprep.subr.bf16.mxu0 0
        %2389 = vmatpush2.bf16.msra.mxu0 0
        %2390 = vmatprep.subr.bf16.mxu0 0
        %2391 = vmatpush2.bf16.msra.mxu0 0
        %2392 = vmatprep.subr.bf16.mxu0 0
        %2393 = vmatpush2.bf16.msra.mxu0 0
        %2394 = vmatprep.subr.bf16.mxu0 0
        %2395 = vmatpush2.bf16.msra.mxu0 0
        %2396 = vmatprep.subr.bf16.mxu0 0
        %2397 = vmatpush2.bf16.msra.mxu0 0
        %2398 = vmatprep.subr.bf16.mxu0 0
        %2399 = vmatpush2.bf16.msra.mxu0 0
        %2400 = vmatprep.mubr.bf16.mxu0 0
        %2401 = vmatmul.mubr.bf16.gmra.mxu0 %v2366
        %v2402 = vpop.f32.mrf.mxu0
        %v2403 = vadd.f32 %v1926, %v2402
        %v2404 = vpop.f32.mrf.mxu0
        %v2405 = vpop.f32.mrf.mxu0
        %v2406 = vpop.f32.mrf.mxu0
        %2407 = vdwg.mxu0
        %v2408 = vadd.f32 %v2403, %v1624
        %v2409 = vmul.f32 %v2408, 0.70710677
        %v2410 = vpack.c.bf16 %v2409, %v2409
        %v2412 = vsel %vm921, %v2410, 0
        %2414 = vmatprep.subr.bf16.mxu0 0
        %2415 = vmatpush1.bf16.xpose.msra.mxu0 0
        %2416 = vmatprep.subr.bf16.mxu0 0
        %2417 = vmatpush1.bf16.xpose.msra.mxu0 0
        %2418 = vmatprep.subr.bf16.mxu0 0
        %2419 = vmatpush1.bf16.xpose.msra.mxu0 0
        %2420 = vmatprep.subr.bf16.mxu0 0
        %2421 = vmatpush1.bf16.xpose.msra.mxu0 0
        %2422 = vmatprep.subr.bf16.mxu0 0
        %2423 = vmatpush1.bf16.xpose.msra.mxu0 0
        %2424 = vmatprep.subr.bf16.mxu0 0
        %2425 = vmatpush1.bf16.xpose.msra.mxu0 0
        %2426 = vmatprep.subr.bf16.mxu0 0
        %2427 = vmatpush1.bf16.xpose.msra.mxu0 0
        %2428 = vmatprep.subr.bf16.mxu0 0
        %2429 = vmatpush1.bf16.xpose.msra.mxu0 %v1990
        %2430 = vmatprep.subr.bf16.mxu0 0
        %2431 = vmatpush2.bf16.xpose.msra.mxu0 0
        %2432 = vmatprep.subr.bf16.mxu0 0
        %2433 = vmatpush2.bf16.xpose.msra.mxu0 0
        %2434 = vmatprep.subr.bf16.mxu0 0
        %2435 = vmatpush2.bf16.xpose.msra.mxu0 0
        %2436 = vmatprep.subr.bf16.mxu0 0
        %2437 = vmatpush2.bf16.xpose.msra.mxu0 0
        %2438 = vmatprep.subr.bf16.mxu0 0
        %2439 = vmatpush2.bf16.xpose.msra.mxu0 0
        %2440 = vmatprep.subr.bf16.mxu0 0
        %2441 = vmatpush2.bf16.xpose.msra.mxu0 0
        %2442 = vmatprep.subr.bf16.mxu0 0
        %2443 = vmatpush2.bf16.xpose.msra.mxu0 0
        %2444 = vmatprep.subr.bf16.mxu0 0
        %2445 = vmatpush2.bf16.xpose.msra.mxu0 0
        %2446 = vmatprep.mubr.bf16.mxu0 0
        %2447 = vmatmul.mubr.bf16.gmra.mxu0 %v2412
        %v2448 = vpop.f32.mrf.mxu0
        %v2449 = vadd.f32 0.0, %v2448
        %v2450 = vpop.f32.mrf.mxu0
        %v2451 = vpop.f32.mrf.mxu0
        %v2452 = vpop.f32.mrf.mxu0
        %2453 = vdwg.mxu0
        %v2454 = vsel %vm2032, %v2449, -inf
        %2455 = vmax.xlane.f32.xlu0 %v2454
        %v2456 = vpop.xlane.xlu0 %2455
        %v2457 = vsub.f32 %v2449, %v2456
        %v2458 = vmul.f32 %v2457, 1.442695
        %v2459 = vpow.pop %v2458
        %v2460 = vsel %vm2032, %v2459, 0.0
        %2461 = vadd.xlane.f32.xlu0 %v2460
        %v2462 = vpop.xlane.xlu0 %2461
        %v2463 = vrcp.pop %v2462
        %v2464 = vmul.f32 %v2459, %v2463
        %v2465 = vpack.c.bf16 %v2464, %v2464
        %v2467 = vsel %vm2032, %v2465, 0
        %2469 = vmatprep.subr.bf16.mxu0 0
        %2470 = vmatpush1.bf16.msra.mxu0 0
        %2471 = vmatprep.subr.bf16.mxu0 0
        %2472 = vmatpush1.bf16.msra.mxu0 0
        %2473 = vmatprep.subr.bf16.mxu0 0
        %2474 = vmatpush1.bf16.msra.mxu0 0
        %2475 = vmatprep.subr.bf16.mxu0 0
        %2476 = vmatpush1.bf16.msra.mxu0 0
        %2477 = vmatprep.subr.bf16.mxu0 0
        %2478 = vmatpush1.bf16.msra.mxu0 0
        %2479 = vmatprep.subr.bf16.mxu0 0
        %2480 = vmatpush1.bf16.msra.mxu0 0
        %2481 = vmatprep.subr.bf16.mxu0 0
        %2482 = vmatpush1.bf16.msra.mxu0 0
        %2483 = vmatprep.subr.bf16.mxu0 0
        %2484 = vmatpush1.bf16.msra.mxu0 %v1540
        %2485 = vmatprep.subr.bf16.mxu0 0
        %2486 = vmatpush2.bf16.msra.mxu0 0
        %2487 = vmatprep.subr.bf16.mxu0 0
        %2488 = vmatpush2.bf16.msra.mxu0 0
        %2489 = vmatprep.subr.bf16.mxu0 0
        %2490 = vmatpush2.bf16.msra.mxu0 0
        %2491 = vmatprep.subr.bf16.mxu0 0
        %2492 = vmatpush2.bf16.msra.mxu0 0
        %2493 = vmatprep.subr.bf16.mxu0 0
        %2494 = vmatpush2.bf16.msra.mxu0 0
        %2495 = vmatprep.subr.bf16.mxu0 0
        %2496 = vmatpush2.bf16.msra.mxu0 0
        %2497 = vmatprep.subr.bf16.mxu0 0
        %2498 = vmatpush2.bf16.msra.mxu0 0
        %2499 = vmatprep.subr.bf16.mxu0 0
        %2500 = vmatpush2.bf16.msra.mxu0 0
        %2501 = vmatprep.mubr.bf16.mxu0 0
        %2502 = vmatmul.mubr.bf16.gmra.mxu0 %v2467
        %v2503 = vpop.f32.mrf.mxu0
        %v2504 = vadd.f32 0.0, %v2503
        %v2505 = vpop.f32.mrf.mxu0
        %v2506 = vpop.f32.mrf.mxu0
        %v2507 = vpop.f32.mrf.mxu0
        %2508 = vdwg.mxu0
        %v2509 = vpack.c.bf16 %v2504, %v2504
        %v2511 = vsel %vm921, %v2509, 0
        %2513 = vmatprep.subr.bf16.mxu0 0
        %2514 = vmatpush1.bf16.msra.mxu0 0
        %2515 = vmatprep.subr.bf16.mxu0 0
        %2516 = vmatpush1.bf16.msra.mxu0 0
        %2517 = vmatprep.subr.bf16.mxu0 0
        %2518 = vmatpush1.bf16.msra.mxu0 0
        %2519 = vmatprep.subr.bf16.mxu0 0
        %2520 = vmatpush1.bf16.msra.mxu0 0
        %2521 = vmatprep.subr.bf16.mxu0 0
        %2522 = vmatpush1.bf16.msra.mxu0 0
        %2523 = vmatprep.subr.bf16.mxu0 0
        %2524 = vmatpush1.bf16.msra.mxu0 0
        %2525 = vmatprep.subr.bf16.mxu0 0
        %2526 = vmatpush1.bf16.msra.mxu0 %v2104
        %2527 = vmatprep.subr.bf16.mxu0 0
        %2528 = vmatpush1.bf16.msra.mxu0 %v2103
        %2529 = vmatprep.subr.bf16.mxu0 0
        %2530 = vmatpush2.bf16.msra.mxu0 0
        %2531 = vmatprep.subr.bf16.mxu0 0
        %2532 = vmatpush2.bf16.msra.mxu0 0
        %2533 = vmatprep.subr.bf16.mxu0 0
        %2534 = vmatpush2.bf16.msra.mxu0 0
        %2535 = vmatprep.subr.bf16.mxu0 0
        %2536 = vmatpush2.bf16.msra.mxu0 0
        %2537 = vmatprep.subr.bf16.mxu0 0
        %2538 = vmatpush2.bf16.msra.mxu0 0
        %2539 = vmatprep.subr.bf16.mxu0 0
        %2540 = vmatpush2.bf16.msra.mxu0 0
        %2541 = vmatprep.subr.bf16.mxu0 0
        %2542 = vmatpush2.bf16.msra.mxu0 0
        %2543 = vmatprep.subr.bf16.mxu0 0
        %2544 = vmatpush2.bf16.msra.mxu0 0
        %2545 = vmatprep.mubr.bf16.mxu0 0
        %2546 = vmatmul.mubr.bf16.gmra.mxu0 %v2511
        %v2547 = vpop.f32.mrf.mxu0
        %v2548 = vadd.f32 %v2093, %v2547
        %v2549 = vpop.f32.mrf.mxu0
        %v2550 = vpop.f32.mrf.mxu0
        %v2551 = vpop.f32.mrf.mxu0
        %2552 = vdwg.mxu0
        %v2553 = vadd.f32 %v2363, %v2548
        %v2554 = vmul.f32 %v2553, 0.70710677
        %v2555 = vadd.f32 %v2554, %v2153
        %v2556 = vmul.f32 %v2555, 0.70710677
        %v2557 = vpack.c.bf16 %v2556, %v2556
        %v2558 = vld [vmem:[%s20] sm:$0xf]
        %v2559 = vld [vmem:[%s20 + $0x4] sm:$0xf]
        %v2560 = vld [vmem:[%s20 + $0x8] sm:$0xf]
        %v2561 = vld [vmem:[%s20 + $0xc] sm:$0xf]
        %v2562 = vld [vmem:[%s21] sm:$0x1]
        %v2564 = vlaneseq
        %v2565 = vshrl.u32 %v2564, 7
        %v2566 = vsub.s32 0, %v2565
        %v2567 = vrot.slane %v2562, %v2566
        %v2573 = vunpack.c.l.b16 %v2558
        %v2574 = vunpack.c.l.b16 %v2559
        %v2575 = vunpack.c.l.b16 %v2560
        %v2576 = vunpack.c.l.b16 %v2561
        %v2577 = vpack.c.b16 %v2574, %v2573
        %v2578 = vpack.c.b16 %v2576, %v2575
        %v2582 = vsel %vm921, %v2557, 0
        %2584 = vmatprep.subr.bf16.mxu0 0
        %2585 = vmatpush1.bf16.msra.mxu0 0
        %2586 = vmatprep.subr.bf16.mxu0 0
        %2587 = vmatpush1.bf16.msra.mxu0 0
        %2588 = vmatprep.subr.bf16.mxu0 0
        %2589 = vmatpush1.bf16.msra.mxu0 0
        %2590 = vmatprep.subr.bf16.mxu0 0
        %2591 = vmatpush1.bf16.msra.mxu0 0
        %2592 = vmatprep.subr.bf16.mxu0 0
        %2593 = vmatpush1.bf16.msra.mxu0 0
        %2594 = vmatprep.subr.bf16.mxu0 0
        %2595 = vmatpush1.bf16.msra.mxu0 0
        %2596 = vmatprep.subr.bf16.mxu0 0
        %2597 = vmatpush1.bf16.msra.mxu0 %v2578
        %2598 = vmatprep.subr.bf16.mxu0 0
        %2599 = vmatpush1.bf16.msra.mxu0 %v2577
        %2600 = vmatprep.subr.bf16.mxu0 0
        %2601 = vmatpush2.bf16.msra.mxu0 0
        %2602 = vmatprep.subr.bf16.mxu0 0
        %2603 = vmatpush2.bf16.msra.mxu0 0
        %2604 = vmatprep.subr.bf16.mxu0 0
        %2605 = vmatpush2.bf16.msra.mxu0 0
        %2606 = vmatprep.subr.bf16.mxu0 0
        %2607 = vmatpush2.bf16.msra.mxu0 0
        %2608 = vmatprep.subr.bf16.mxu0 0
        %2609 = vmatpush2.bf16.msra.mxu0 0
        %2610 = vmatprep.subr.bf16.mxu0 0
        %2611 = vmatpush2.bf16.msra.mxu0 0
        %2612 = vmatprep.subr.bf16.mxu0 0
        %2613 = vmatpush2.bf16.msra.mxu0 0
        %2614 = vmatprep.subr.bf16.mxu0 0
        %2615 = vmatpush2.bf16.msra.mxu0 0
        %2616 = vmatprep.mubr.bf16.mxu0 0
        %2617 = vmatmul.mubr.bf16.gmra.mxu0 %v2582
        %v2618 = vpop.f32.mrf.mxu0
        %v2619 = vadd.f32 %v2567, %v2618
        %v2620 = vpop.f32.mrf.mxu0
        %v2621 = vpop.f32.mrf.mxu0
        %v2622 = vpop.f32.mrf.mxu0
        %2623 = vdwg.mxu0
        %v2624 = vpack.c.bf16 %v2619, %v2619
        %v2625 = vld [vmem:[%s22] sm:$0xf]
        %v2626 = vld [vmem:[%s22 + $0x4] sm:$0xf]
        %v2627 = vld [vmem:[%s22 + $0x8] sm:$0xf]
        %v2628 = vld [vmem:[%s22 + $0xc] sm:$0xf]
        %v2629 = vld [vmem:[%s23] sm:$0x1]
        %v2631 = vlaneseq
        %v2632 = vshrl.u32 %v2631, 7
        %v2633 = vsub.s32 0, %v2632
        %v2634 = vrot.slane %v2629, %v2633
        %v2640 = vunpack.c.l.b16 %v2625
        %v2641 = vunpack.c.l.b16 %v2626
        %v2642 = vunpack.c.l.b16 %v2627
        %v2643 = vunpack.c.l.b16 %v2628
        %v2644 = vpack.c.b16 %v2641, %v2640
        %v2645 = vpack.c.b16 %v2643, %v2642
        %v2649 = vsel %vm921, %v2624, 0
        %2651 = vmatprep.subr.bf16.mxu0 0
        %2652 = vmatpush1.bf16.msra.mxu0 0
        %2653 = vmatprep.subr.bf16.mxu0 0
        %2654 = vmatpush1.bf16.msra.mxu0 0
        %2655 = vmatprep.subr.bf16.mxu0 0
        %2656 = vmatpush1.bf16.msra.mxu0 0
        %2657 = vmatprep.subr.bf16.mxu0 0
        %2658 = vmatpush1.bf16.msra.mxu0 0
        %2659 = vmatprep.subr.bf16.mxu0 0
        %2660 = vmatpush1.bf16.msra.mxu0 0
        %2661 = vmatprep.subr.bf16.mxu0 0
        %2662 = vmatpush1.bf16.msra.mxu0 0
        %2663 = vmatprep.subr.bf16.mxu0 0
        %2664 = vmatpush1.bf16.msra.mxu0 %v2645
        %2665 = vmatprep.subr.bf16.mxu0 0
        %2666 = vmatpush1.bf16.msra.mxu0 %v2644
        %2667 = vmatprep.subr.bf16.mxu0 0
        %2668 = vmatpush2.bf16.msra.mxu0 0
        %2669 = vmatprep.subr.bf16.mxu0 0
        %2670 = vmatpush2.bf16.msra.mxu0 0
        %2671 = vmatprep.subr.bf16.mxu0 0
        %2672 = vmatpush2.bf16.msra.mxu0 0
        %2673 = vmatprep.subr.bf16.mxu0 0
        %2674 = vmatpush2.bf16.msra.mxu0 0
        %2675 = vmatprep.subr.bf16.mxu0 0
        %2676 = vmatpush2.bf16.msra.mxu0 0
        %2677 = vmatprep.subr.bf16.mxu0 0
        %2678 = vmatpush2.bf16.msra.mxu0 0
        %2679 = vmatprep.subr.bf16.mxu0 0
        %2680 = vmatpush2.bf16.msra.mxu0 0
        %2681 = vmatprep.subr.bf16.mxu0 0
        %2682 = vmatpush2.bf16.msra.mxu0 0
        %2683 = vmatprep.mubr.bf16.mxu0 0
        %2684 = vmatmul.mubr.bf16.gmra.mxu0 %v2649
        %v2685 = vpop.f32.mrf.mxu0
        %v2686 = vadd.f32 %v2634, %v2685
        %v2687 = vpop.f32.mrf.mxu0
        %v2688 = vpop.f32.mrf.mxu0
        %v2689 = vpop.f32.mrf.mxu0
        %2690 = vdwg.mxu0
        %2691 = vst.msk [vmem:[%s774] sm:$0xff] %vm815, %v2686
        %2692 = vst.msk [vmem:[%s781] sm:$0xff] %vm2032, %v2464
        %s2693 = sand.u32 %s565, 1
        %s2694 = scalar_lea.sflag [#allocation3], %s2693
        %s2695 = sand.u32 %s565, 1
        %s2696 = smul.addr %s2695, 8
        %s2697 = scalar_lea.vmem [#allocation2], %s2696
        %s2698 = sand.u32 %s591, 1
        %s2699 = scalar_lea.sflag [#allocation5], %s2698
        %s2700 = sand.u32 %s591, 1
        %s2701 = smul.addr %s2700, 8
        %s2702 = scalar_lea.vmem [#allocation4], %s2701
        // Predicated region
        $region117: #{g2pcnn_forward.1} parent=115 // pred_check
          %p2703 = pneg %p575
        $region118: #{g2pcnn_forward.1} parent=115 // pred_check_branch
          %2705 = sbr.rel (%p2703) target = $region120
        $region119: #{g2pcnn_forward.1} parent=115 // pred_region
          %s2707 = ssub.s32 128, 128
          %2708 = vsyncadd %s2694, %s2707
          %s2709 = smul.addr %s43, 128
          %s2710 = scalar_lea.hbm %s24, %s2709
          %s2712 = sshll.u32 %s2697, 4
          %s2713 = int_to_ptr.vmem [resolvable:$true] %s2712
          %2715 = dma.vmem_to_hbm [thread:$0]  %s2713, 128, %s2710, %s2694
        $region120: #{g2pcnn_forward.1} parent=115 // pred_fallthru
          _
        // Predicated region
        $region121: #{g2pcnn_forward.1} parent=115 // pred_check
          %p2716 = pneg %p601
        $region122: #{g2pcnn_forward.1} parent=115 // pred_check_branch
          %2718 = sbr.rel (%p2716) target = $region124
        $region123: #{g2pcnn_forward.1} parent=115 // pred_region
          %s2720 = ssub.s32 128, 128
          %2721 = vsyncadd %s2699, %s2720
          %s2722 = smul.addr %s43, 128
          %s2723 = scalar_lea.hbm %s25, %s2722
          %s2725 = sshll.u32 %s2702, 4
          %s2726 = int_to_ptr.vmem [resolvable:$true] %s2725
          %2728 = dma.vmem_to_hbm [thread:$0]  %s2726, 128, %s2723, %s2699
        $region124: #{g2pcnn_forward.1} parent=115 // pred_fallthru
          _
      $region116: #{g2pcnn_forward.1} parent=5 // pred_fallthru
        _
      %p2729 = scmp.le.s32.totalorder 2, %s38
      // Predicated region
      $region125: #{g2pcnn_forward.1} parent=5 // pred_check
        %p2730 = pneg %p2729
      $region126: #{g2pcnn_forward.1} parent=5 // pred_check_branch
        %2732 = sbr.rel (%p2730) target = $region128
      $region127: #{g2pcnn_forward.1} parent=5 // pred_region
        %s2733 = ssub.s32 %s38, 2
        // Predicated region
        $region129: #{g2pcnn_forward.1} parent=127 // pred_check
          %p2734 = pneg %p581
        $region130: #{g2pcnn_forward.1} parent=127 // pred_check_branch
          %2736 = sbr.rel (%p2734) target = $region132
        $region131: #{g2pcnn_forward.1} parent=127 // pred_region
          %s2737 = sand.u32 %s566, 1
          %s2738 = scalar_lea.sflag [#allocation3], %s2737
          %s2739 = sand.u32 %s566, 1
          %s2740 = smul.addr %s2739, 8
          %s2741 = scalar_lea.vmem [#allocation2], %s2740
          %2742 = dma.done %s2738, 128
        $region132: #{g2pcnn_forward.1} parent=127 // pred_fallthru
          _
        // Predicated region
        $region133: #{g2pcnn_forward.1} parent=127 // pred_check
          %p2743 = pneg %p607
        $region134: #{g2pcnn_forward.1} parent=127 // pred_check_branch
          %2745 = sbr.rel (%p2743) target = $region136
        $region135: #{g2pcnn_forward.1} parent=127 // pred_region
          %s2746 = sand.u32 %s592, 1
          %s2747 = scalar_lea.sflag [#allocation5], %s2746
          %s2748 = sand.u32 %s592, 1
          %s2749 = smul.addr %s2748, 8
          %s2750 = scalar_lea.vmem [#allocation4], %s2749
          %2751 = dma.done %s2747, 128
        $region136: #{g2pcnn_forward.1} parent=127 // pred_fallthru
          _
      $region128: #{g2pcnn_forward.1} parent=5 // pred_fallthru
        _
    $region6: #{g2pcnn_forward.1} parent=1 // loop_footer
      %s42 = sadd.s32 1, %s38
    $region7: #{g2pcnn_forward.1} parent=1 // loop_footer_branch
      %37 = sbr.rel target = $region3
    $region8: #{g2pcnn_forward.1} parent=1 // loop_exit
      _
    %2752 = vsyncpa [#allocation3], 1
    %s2753 = scalar_lea.sflag [#allocation3], 1
    %2754 = vsyncpa %s2753, 1
    %2755 = vsyncpa [#allocation5], 1
    %s2756 = scalar_lea.sflag [#allocation5], 1
    %2757 = vsyncpa %s2756, 1

</llo_original>
